<compile_context>
chip_gen: v6e
topology: v6e:2x2x1
jax: 0.10.0
libtpu: 0.0.40
codegen_flags: <defaults>
</compile_context>

<pallas_src>
import math

import jax
import jax.numpy as jnp
from jax.experimental import pallas as pl
from jax.experimental.pallas import tpu as pltpu

GAIN = math.sqrt(2.0)            # nn.init.calculate_gain('relu')
COMPUTE_DTYPE = jnp.bfloat16     # matmul operand / activation dtype (f32 accumulation)


# --------------------------------- kernel ---------------------------------- #
def _mm_bias_relu_kernel(a_ref, b_ref, bias_ref, o_ref):
    """o = relu(a @ b + bias), f32 MXU accumulation, cast to o.dtype.

    Used for both the conv layers (a = weights (Cout, 9Cin), b = im2col cols,
    bias (Cout, 1)) and the FC layer (a = activations (B, 1152), b = weights
    (1152, 512), bias (1, 512)).
    """
    acc = jnp.dot(a_ref[...], b_ref[...], preferred_element_type=jnp.float32)
    o_ref[...] = jnp.maximum(acc + bias_ref[...], 0.0).astype(o_ref.dtype)


# -------------------------------- wrappers --------------------------------- #
def _pick_cols_block(nc, k_dim, vmem_budget=8 << 20):
    """Largest multiple-of-128 column block that divides `nc`, fits a per-step
    VMEM budget (double-buffered bf16 in+out), and leaves >=2 grid steps when
    possible (keeps both v7x TensorCores busy)."""
    if nc % 128 != 0:
        return nc                                    # single full-width block
    cap = max(128, vmem_budget // ((k_dim + 32) * 2 * 2))
    units = nc // 128
    divs = [m for m in range(1, units + 1) if units % m == 0 and m * 128 <= cap]
    multi = [m for m in divs if units // m >= 2]
    return 128 * (max(multi) if multi else max(divs))


def conv3x3_s2_relu(x, w2, b):
    """3x3 / stride-2 / pad-1 conv + ReLU on channel-major activations.

    x : (Cin, B, H, W)  activations (compute dtype)
    w2: (Cout, 9*Cin)   weights, K ordered (kh, kw, ci)
    b : (Cout, 1)       f32 bias
    returns (Cout, B, H//2, W//2)
    """
    Cin, B, H, W = x.shape
    Ho, Wo = H // 2, W // 2
    nout = Ho * Wo
    Cout, K = w2.shape

    # wrapper-side im2col: pad once, take the 9 stride-2 tap slices, stack on K.
    xp = jnp.pad(x, ((0, 0), (0, 0), (1, 1), (1, 1)))
    cols = jnp.concatenate(
        [xp[:, :, kh:kh + 2 * Ho:2, kw:kw + 2 * Wo:2]
         for kh in range(3) for kw in range(3)], axis=0)
    cols = cols.reshape(K, B * nout).astype(w2.dtype)      # lane axis = B*Ho*Wo

    nc = B * nout
    bn = _pick_cols_block(nc, K)
    out = pl.pallas_call(
        _mm_bias_relu_kernel,
        out_shape=jax.ShapeDtypeStruct((Cout, nc), w2.dtype),
        grid=(nc // bn,),
        in_specs=[
            pl.BlockSpec((Cout, K), lambda g: (0, 0)),     # weights, DMA'd once
            pl.BlockSpec((K, bn), lambda g: (0, g)),       # im2col column block
            pl.BlockSpec((Cout, 1), lambda g: (0, 0)),     # bias
        ],
        out_specs=pl.BlockSpec((Cout, bn), lambda g: (0, g)),
        compiler_params=pltpu.CompilerParams(
            dimension_semantics=("parallel",)),
    )(w2, cols, b)
    # (Cout, B*Ho*Wo) -> (Cout, B, Ho, Wo): free reshape, already the next
    # layer's channel-major input layout (no transpose, no garbage columns).
    return out.reshape(Cout, B, Ho, Wo)


def linear_relu(x, w, b):
    """Fused relu(x @ w + b).  x: (B, K), w: (K, N), b: (1, N) -> (B, N) f32.

    Single step with the full (K, N) weight; grid over batch rows only for
    very large batches.
    """
    B, K = x.shape
    N = w.shape[1]
    bm = B if B <= 256 else (256 if B % 256 == 0 else (128 if B % 128 == 0 else B))
    return pl.pallas_call(
        _mm_bias_relu_kernel,
        out_shape=jax.ShapeDtypeStruct((B, N), jnp.float32),
        grid=(B // bm,),
        in_specs=[
            pl.BlockSpec((bm, K), lambda g: (g, 0)),
            pl.BlockSpec((K, N), lambda g: (0, 0)),
            pl.BlockSpec((1, N), lambda g: (0, 0)),
        ],
        out_specs=pl.BlockSpec((bm, N), lambda g: (g, 0)),
        compiler_params=pltpu.CompilerParams(
            dimension_semantics=("parallel",)),
    )(x.astype(w.dtype), w, b)


# ----------------------------- parameter init ------------------------------ #
def _orthogonal(key, rows, cols, gain):
    """PyTorch-style orthogonal init on the 2-D (rows, cols) flattened shape."""
    n, m = max(rows, cols), min(rows, cols)
    a = jax.random.normal(key, (n, m), jnp.float32)
    q, r = jnp.linalg.qr(a)
    q = q * jnp.sign(jnp.diag(r))
    if rows < cols:
        q = q.T
    return gain * q


def init_encoder_params(key, compute_dtype=COMPUTE_DTYPE):
    keys = jax.random.split(key, 5)
    params = {}
    conv_shapes = [(32, 4), (32, 32), (32, 32), (32, 32)]
    for i, (co, ci) in enumerate(conv_shapes):
        w2d = _orthogonal(keys[i], co, ci * 9, GAIN)       # PyTorch (ci,kh,kw) flat
        w4d = w2d.reshape(co, ci, 3, 3)                    # (Cout, Cin, 3, 3)
        # repack to kernel K order (kh, kw, ci) matching the im2col stacking
        wk = jnp.transpose(w4d, (0, 2, 3, 1)).reshape(co, 9 * ci)
        params[f"conv{i}_w"] = wk.astype(compute_dtype)
        params[f"conv{i}_b"] = jnp.zeros((co, 1), jnp.float32)
    fc_w = _orthogonal(keys[4], 512, 32 * 6 * 6, GAIN)     # (512, 1152)
    params["fc_w"] = fc_w.T.astype(compute_dtype)          # stored (1152, 512)
    params["fc_b"] = jnp.zeros((1, 512), jnp.float32)
    return params


# ------------------------------- forward pass ------------------------------ #
def encoder_forward(params, obs_nchw):
    # obs_nchw: (B, 4, 96, 96) float32, PyTorch NCHW convention.
    # TODO(synk): `cnn_forward` assumed to be "conv stack then flatten" (no
    # observation normalisation), consistent with Linear(32*6*6, 512).
    B = obs_nchw.shape[0]
    x = jnp.transpose(obs_nchw, (1, 0, 2, 3)).astype(COMPUTE_DTYPE)  # (C, B, H, W)
    for i in range(4):
        x = conv3x3_s2_relu(x, params[f"conv{i}_w"], params[f"conv{i}_b"])
    # x: (32, B, 6, 6) -> PyTorch (C, H, W) flatten order per sample
    feat = jnp.transpose(x, (1, 0, 2, 3)).reshape(B, 32 * 6 * 6)
    out = linear_relu(feat, params["fc_w"], params["fc_b"])
    # TODO(synk): optional LayerNorm(512) (layer_norm=True) not implemented;
    # the module's default is layer_norm=False.
    return out  # (B, 512) float32


if __name__ == "__main__":
    key = jax.random.PRNGKey(0)
    pkey, xkey = jax.random.split(key)
    params = init_encoder_params(pkey)
    # smallest input consistent with Linear(32*6*6, 512): 96x96 spatial
    obs = jax.random.normal(xkey, (2, 4, 96, 96), dtype=jnp.float32)
    fwd = jax.jit(encoder_forward)
    out = jax.block_until_ready(fwd(params, obs))
    assert out.shape == (2, 512), out.shape
    assert bool(jnp.all(jnp.isfinite(out)))
    print("KERNEL_OK")
</pallas_src>

<mosaic_0001>
module attributes {stable_mosaic.version = 11 : i64} {
  func.func @_mm_bias_relu_kernel(%arg0: i32, %arg1: memref<32x36xbf16, #tpu.memory_space<vmem>>, %arg2: memref<36x2304xbf16, #tpu.memory_space<vmem>>, %arg3: memref<32x1xf32, #tpu.memory_space<vmem>>, %arg4: memref<32x2304xbf16, #tpu.memory_space<vmem>>) attributes {dimension_semantics = [#tpu.dimension_semantics<parallel>], iteration_bounds = array<i64: 2>, scalar_prefetch = 0 : i64, scratch_operands = 0 : i64, tpu.core_type = #tpu.core_type<tc>, window_params = [{pipeline_mode = #tpu.pipeline_mode<synchronous>, transform_indices = @transform_0, window_bounds = array<i64: 32, 36>}, {transform_indices = @transform_1, window_bounds = array<i64: 36, 2304>}, {pipeline_mode = #tpu.pipeline_mode<synchronous>, transform_indices = @transform_2, window_bounds = array<i64: 32, 1>}, {transform_indices = @transform_3, window_bounds = array<i64: 32, 2304>}]} {
    %c0 = arith.constant 0 : index
    %c0_0 = arith.constant 0 : index
    %0 = vector.load %arg1[%c0, %c0_0] : memref<32x36xbf16, #tpu.memory_space<vmem>>, vector<32x36xbf16>
    %c0_1 = arith.constant 0 : index
    %c0_2 = arith.constant 0 : index
    %1 = vector.load %arg2[%c0_1, %c0_2] : memref<36x2304xbf16, #tpu.memory_space<vmem>>, vector<36x2304xbf16>
    %cst = arith.constant dense<0.000000e+00> : vector<32x2304xf32>
    %2 = tpu.matmul %0, %1, %cst {dimension_numbers = #tpu.dot_dimension_numbers<[1], [0], [0], [1], [0, 0, 1, 1], [], []>} : vector<32x36xbf16>, vector<36x2304xbf16>, vector<32x2304xf32> -> vector<32x2304xf32>
    %c0_3 = arith.constant 0 : index
    %c0_4 = arith.constant 0 : index
    %3 = vector.load %arg3[%c0_3, %c0_4] : memref<32x1xf32, #tpu.memory_space<vmem>>, vector<32x1xf32>
    %4 = vector.broadcast %3 : vector<32x1xf32> to vector<32x2304xf32>
    %5 = arith.addf %2, %4 : vector<32x2304xf32>
    %cst_5 = arith.constant 0.000000e+00 : f32
    %6 = vector.broadcast %cst_5 : f32 to vector<32x2304xf32>
    %7 = arith.maximumf %5, %6 : vector<32x2304xf32>
    %8 = arith.truncf %7 : vector<32x2304xf32> to vector<32x2304xbf16>
    %c0_6 = arith.constant 0 : index
    %c0_7 = arith.constant 0 : index
    %9 = vector.load %arg4[%c0_6, %c0_7] : memref<32x2304xbf16, #tpu.memory_space<vmem>>, vector<32x2304xbf16>
    tpu.vector_store %arg4[%c0_6, %c0_7], %8 {strides = array<i32>} : memref<32x2304xbf16, #tpu.memory_space<vmem>>, vector<32x2304xbf16>,
    return
  }
  func.func @transform_0(%arg0: i32) -> (i32, i32) {
    %c0_i32 = arith.constant 0 : i32
    %c0_i32_0 = arith.constant 0 : i32
    %c0_i32_1 = arith.constant 0 : i32
    return %c0_i32, %c0_i32_0 : i32, i32
  }
  func.func @transform_1(%arg0: i32) -> (i32, i32) {
    %c0_i32 = arith.constant 0 : i32
    %c0_i32_0 = arith.constant 0 : i32
    return %c0_i32, %arg0 : i32, i32
  }
  func.func @transform_2(%arg0: i32) -> (i32, i32) {
    %c0_i32 = arith.constant 0 : i32
    %c0_i32_0 = arith.constant 0 : i32
    %c0_i32_1 = arith.constant 0 : i32
    return %c0_i32, %c0_i32_0 : i32, i32
  }
  func.func @transform_3(%arg0: i32) -> (i32, i32) {
    %c0_i32 = arith.constant 0 : i32
    %c0_i32_0 = arith.constant 0 : i32
    return %c0_i32, %arg0 : i32, i32
  }
}

module attributes {stable_mosaic.version = 11 : i64} {
  func.func @_mm_bias_relu_kernel(%arg0: i32, %arg1: memref<32x288xbf16, #tpu.memory_space<vmem>>, %arg2: memref<288x384xbf16, #tpu.memory_space<vmem>>, %arg3: memref<32x1xf32, #tpu.memory_space<vmem>>, %arg4: memref<32x384xbf16, #tpu.memory_space<vmem>>) attributes {dimension_semantics = [#tpu.dimension_semantics<parallel>], iteration_bounds = array<i64: 3>, scalar_prefetch = 0 : i64, scratch_operands = 0 : i64, tpu.core_type = #tpu.core_type<tc>, window_params = [{pipeline_mode = #tpu.pipeline_mode<synchronous>, transform_indices = @transform_0, window_bounds = array<i64: 32, 288>}, {transform_indices = @transform_1, window_bounds = array<i64: 288, 384>}, {pipeline_mode = #tpu.pipeline_mode<synchronous>, transform_indices = @transform_2, window_bounds = array<i64: 32, 1>}, {transform_indices = @transform_3, window_bounds = array<i64: 32, 384>}]} {
    %c0 = arith.constant 0 : index
    %c0_0 = arith.constant 0 : index
    %0 = vector.load %arg1[%c0, %c0_0] : memref<32x288xbf16, #tpu.memory_space<vmem>>, vector<32x288xbf16>
    %c0_1 = arith.constant 0 : index
    %c0_2 = arith.constant 0 : index
    %1 = vector.load %arg2[%c0_1, %c0_2] : memref<288x384xbf16, #tpu.memory_space<vmem>>, vector<288x384xbf16>
    %cst = arith.constant dense<0.000000e+00> : vector<32x384xf32>
    %2 = tpu.matmul %0, %1, %cst {dimension_numbers = #tpu.dot_dimension_numbers<[1], [0], [0], [1], [0, 0, 1, 1], [], []>} : vector<32x288xbf16>, vector<288x384xbf16>, vector<32x384xf32> -> vector<32x384xf32>
    %c0_3 = arith.constant 0 : index
    %c0_4 = arith.constant 0 : index
    %3 = vector.load %arg3[%c0_3, %c0_4] : memref<32x1xf32, #tpu.memory_space<vmem>>, vector<32x1xf32>
    %4 = vector.broadcast %3 : vector<32x1xf32> to vector<32x384xf32>
    %5 = arith.addf %2, %4 : vector<32x384xf32>
    %cst_5 = arith.constant 0.000000e+00 : f32
    %6 = vector.broadcast %cst_5 : f32 to vector<32x384xf32>
    %7 = arith.maximumf %5, %6 : vector<32x384xf32>
    %8 = arith.truncf %7 : vector<32x384xf32> to vector<32x384xbf16>
    %c0_6 = arith.constant 0 : index
    %c0_7 = arith.constant 0 : index
    %9 = vector.load %arg4[%c0_6, %c0_7] : memref<32x384xbf16, #tpu.memory_space<vmem>>, vector<32x384xbf16>
    tpu.vector_store %arg4[%c0_6, %c0_7], %8 {strides = array<i32>} : memref<32x384xbf16, #tpu.memory_space<vmem>>, vector<32x384xbf16>,
    return
  }
  func.func @transform_0(%arg0: i32) -> (i32, i32) {
    %c0_i32 = arith.constant 0 : i32
    %c0_i32_0 = arith.constant 0 : i32
    %c0_i32_1 = arith.constant 0 : i32
    return %c0_i32, %c0_i32_0 : i32, i32
  }
  func.func @transform_1(%arg0: i32) -> (i32, i32) {
    %c0_i32 = arith.constant 0 : i32
    %c0_i32_0 = arith.constant 0 : i32
    return %c0_i32, %arg0 : i32, i32
  }
  func.func @transform_2(%arg0: i32) -> (i32, i32) {
    %c0_i32 = arith.constant 0 : i32
    %c0_i32_0 = arith.constant 0 : i32
    %c0_i32_1 = arith.constant 0 : i32
    return %c0_i32, %c0_i32_0 : i32, i32
  }
  func.func @transform_3(%arg0: i32) -> (i32, i32) {
    %c0_i32 = arith.constant 0 : i32
    %c0_i32_0 = arith.constant 0 : i32
    return %c0_i32, %arg0 : i32, i32
  }
}

module attributes {stable_mosaic.version = 11 : i64} {
  func.func @_mm_bias_relu_kernel(%arg0: i32, %arg1: memref<32x288xbf16, #tpu.memory_space<vmem>>, %arg2: memref<288x288xbf16, #tpu.memory_space<vmem>>, %arg3: memref<32x1xf32, #tpu.memory_space<vmem>>, %arg4: memref<32x288xbf16, #tpu.memory_space<vmem>>) attributes {dimension_semantics = [#tpu.dimension_semantics<parallel>], iteration_bounds = array<i64: 1>, scalar_prefetch = 0 : i64, scratch_operands = 0 : i64, tpu.core_type = #tpu.core_type<tc>, window_params = [{pipeline_mode = #tpu.pipeline_mode<synchronous>, transform_indices = @transform_0, window_bounds = array<i64: 32, 288>}, {transform_indices = @transform_1, window_bounds = array<i64: 288, 288>}, {pipeline_mode = #tpu.pipeline_mode<synchronous>, transform_indices = @transform_2, window_bounds = array<i64: 32, 1>}, {transform_indices = @transform_3, window_bounds = array<i64: 32, 288>}]} {
    %c0 = arith.constant 0 : index
    %c0_0 = arith.constant 0 : index
    %0 = vector.load %arg1[%c0, %c0_0] : memref<32x288xbf16, #tpu.memory_space<vmem>>, vector<32x288xbf16>
    %c0_1 = arith.constant 0 : index
    %c0_2 = arith.constant 0 : index
    %1 = vector.load %arg2[%c0_1, %c0_2] : memref<288x288xbf16, #tpu.memory_space<vmem>>, vector<288x288xbf16>
    %cst = arith.constant dense<0.000000e+00> : vector<32x288xf32>
    %2 = tpu.matmul %0, %1, %cst {dimension_numbers = #tpu.dot_dimension_numbers<[1], [0], [0], [1], [0, 0, 1, 1], [], []>} : vector<32x288xbf16>, vector<288x288xbf16>, vector<32x288xf32> -> vector<32x288xf32>
    %c0_3 = arith.constant 0 : index
    %c0_4 = arith.constant 0 : index
    %3 = vector.load %arg3[%c0_3, %c0_4] : memref<32x1xf32, #tpu.memory_space<vmem>>, vector<32x1xf32>
    %4 = vector.broadcast %3 : vector<32x1xf32> to vector<32x288xf32>
    %5 = arith.addf %2, %4 : vector<32x288xf32>
    %cst_5 = arith.constant 0.000000e+00 : f32
    %6 = vector.broadcast %cst_5 : f32 to vector<32x288xf32>
    %7 = arith.maximumf %5, %6 : vector<32x288xf32>
    %8 = arith.truncf %7 : vector<32x288xf32> to vector<32x288xbf16>
    %c0_6 = arith.constant 0 : index
    %c0_7 = arith.constant 0 : index
    %9 = vector.load %arg4[%c0_6, %c0_7] : memref<32x288xbf16, #tpu.memory_space<vmem>>, vector<32x288xbf16>
    tpu.vector_store %arg4[%c0_6, %c0_7], %8 {strides = array<i32>} : memref<32x288xbf16, #tpu.memory_space<vmem>>, vector<32x288xbf16>,
    return
  }
  func.func @transform_0(%arg0: i32) -> (i32, i32) {
    %c0_i32 = arith.constant 0 : i32
    %c0_i32_0 = arith.constant 0 : i32
    %c0_i32_1 = arith.constant 0 : i32
    return %c0_i32, %c0_i32_0 : i32, i32
  }
  func.func @transform_1(%arg0: i32) -> (i32, i32) {
    %c0_i32 = arith.constant 0 : i32
    %c0_i32_0 = arith.constant 0 : i32
    return %c0_i32, %arg0 : i32, i32
  }
  func.func @transform_2(%arg0: i32) -> (i32, i32) {
    %c0_i32 = arith.constant 0 : i32
    %c0_i32_0 = arith.constant 0 : i32
    %c0_i32_1 = arith.constant 0 : i32
    return %c0_i32, %c0_i32_0 : i32, i32
  }
  func.func @transform_3(%arg0: i32) -> (i32, i32) {
    %c0_i32 = arith.constant 0 : i32
    %c0_i32_0 = arith.constant 0 : i32
    return %c0_i32, %arg0 : i32, i32
  }
}

module attributes {stable_mosaic.version = 11 : i64} {
  func.func @_mm_bias_relu_kernel(%arg0: i32, %arg1: memref<32x288xbf16, #tpu.memory_space<vmem>>, %arg2: memref<288x72xbf16, #tpu.memory_space<vmem>>, %arg3: memref<32x1xf32, #tpu.memory_space<vmem>>, %arg4: memref<32x72xbf16, #tpu.memory_space<vmem>>) attributes {dimension_semantics = [#tpu.dimension_semantics<parallel>], iteration_bounds = array<i64: 1>, scalar_prefetch = 0 : i64, scratch_operands = 0 : i64, tpu.core_type = #tpu.core_type<tc>, window_params = [{pipeline_mode = #tpu.pipeline_mode<synchronous>, transform_indices = @transform_0, window_bounds = array<i64: 32, 288>}, {transform_indices = @transform_1, window_bounds = array<i64: 288, 72>}, {pipeline_mode = #tpu.pipeline_mode<synchronous>, transform_indices = @transform_2, window_bounds = array<i64: 32, 1>}, {transform_indices = @transform_3, window_bounds = array<i64: 32, 72>}]} {
    %c0 = arith.constant 0 : index
    %c0_0 = arith.constant 0 : index
    %0 = vector.load %arg1[%c0, %c0_0] : memref<32x288xbf16, #tpu.memory_space<vmem>>, vector<32x288xbf16>
    %c0_1 = arith.constant 0 : index
    %c0_2 = arith.constant 0 : index
    %1 = vector.load %arg2[%c0_1, %c0_2] : memref<288x72xbf16, #tpu.memory_space<vmem>>, vector<288x72xbf16>
    %cst = arith.constant dense<0.000000e+00> : vector<32x72xf32>
    %2 = tpu.matmul %0, %1, %cst {dimension_numbers = #tpu.dot_dimension_numbers<[1], [0], [0], [1], [0, 0, 1, 1], [], []>} : vector<32x288xbf16>, vector<288x72xbf16>, vector<32x72xf32> -> vector<32x72xf32>
    %c0_3 = arith.constant 0 : index
    %c0_4 = arith.constant 0 : index
    %3 = vector.load %arg3[%c0_3, %c0_4] : memref<32x1xf32, #tpu.memory_space<vmem>>, vector<32x1xf32>
    %4 = vector.broadcast %3 : vector<32x1xf32> to vector<32x72xf32>
    %5 = arith.addf %2, %4 : vector<32x72xf32>
    %cst_5 = arith.constant 0.000000e+00 : f32
    %6 = vector.broadcast %cst_5 : f32 to vector<32x72xf32>
    %7 = arith.maximumf %5, %6 : vector<32x72xf32>
    %8 = arith.truncf %7 : vector<32x72xf32> to vector<32x72xbf16>
    %c0_6 = arith.constant 0 : index
    %c0_7 = arith.constant 0 : index
    %9 = vector.load %arg4[%c0_6, %c0_7] : memref<32x72xbf16, #tpu.memory_space<vmem>>, vector<32x72xbf16>
    tpu.vector_store %arg4[%c0_6, %c0_7], %8 {strides = array<i32>} : memref<32x72xbf16, #tpu.memory_space<vmem>>, vector<32x72xbf16>,
    return
  }
  func.func @transform_0(%arg0: i32) -> (i32, i32) {
    %c0_i32 = arith.constant 0 : i32
    %c0_i32_0 = arith.constant 0 : i32
    %c0_i32_1 = arith.constant 0 : i32
    return %c0_i32, %c0_i32_0 : i32, i32
  }
  func.func @transform_1(%arg0: i32) -> (i32, i32) {
    %c0_i32 = arith.constant 0 : i32
    %c0_i32_0 = arith.constant 0 : i32
    return %c0_i32, %arg0 : i32, i32
  }
  func.func @transform_2(%arg0: i32) -> (i32, i32) {
    %c0_i32 = arith.constant 0 : i32
    %c0_i32_0 = arith.constant 0 : i32
    %c0_i32_1 = arith.constant 0 : i32
    return %c0_i32, %c0_i32_0 : i32, i32
  }
  func.func @transform_3(%arg0: i32) -> (i32, i32) {
    %c0_i32 = arith.constant 0 : i32
    %c0_i32_0 = arith.constant 0 : i32
    return %c0_i32, %arg0 : i32, i32
  }
}

module attributes {stable_mosaic.version = 11 : i64} {
  func.func @_mm_bias_relu_kernel(%arg0: i32, %arg1: memref<2x1152xbf16, #tpu.memory_space<vmem>>, %arg2: memref<1152x512xbf16, #tpu.memory_space<vmem>>, %arg3: memref<1x512xf32, #tpu.memory_space<vmem>>, %arg4: memref<2x512xf32, #tpu.memory_space<vmem>>) attributes {dimension_semantics = [#tpu.dimension_semantics<parallel>], iteration_bounds = array<i64: 1>, scalar_prefetch = 0 : i64, scratch_operands = 0 : i64, tpu.core_type = #tpu.core_type<tc>, window_params = [{transform_indices = @transform_0, window_bounds = array<i64: 2, 1152>}, {pipeline_mode = #tpu.pipeline_mode<synchronous>, transform_indices = @transform_1, window_bounds = array<i64: 1152, 512>}, {pipeline_mode = #tpu.pipeline_mode<synchronous>, transform_indices = @transform_2, window_bounds = array<i64: 1, 512>}, {transform_indices = @transform_3, window_bounds = array<i64: 2, 512>}]} {
    %c0 = arith.constant 0 : index
    %c0_0 = arith.constant 0 : index
    %0 = vector.load %arg1[%c0, %c0_0] : memref<2x1152xbf16, #tpu.memory_space<vmem>>, vector<2x1152xbf16>
    %c0_1 = arith.constant 0 : index
    %c0_2 = arith.constant 0 : index
    %1 = vector.load %arg2[%c0_1, %c0_2] : memref<1152x512xbf16, #tpu.memory_space<vmem>>, vector<1152x512xbf16>
    %cst = arith.constant dense<0.000000e+00> : vector<2x512xf32>
    %2 = tpu.matmul %0, %1, %cst {dimension_numbers = #tpu.dot_dimension_numbers<[1], [0], [0], [1], [0, 0, 1, 1], [], []>} : vector<2x1152xbf16>, vector<1152x512xbf16>, vector<2x512xf32> -> vector<2x512xf32>
    %c0_3 = arith.constant 0 : index
    %c0_4 = arith.constant 0 : index
    %3 = vector.load %arg3[%c0_3, %c0_4] : memref<1x512xf32, #tpu.memory_space<vmem>>, vector<1x512xf32>
    %4 = vector.broadcast %3 : vector<1x512xf32> to vector<2x512xf32>
    %5 = arith.addf %2, %4 : vector<2x512xf32>
    %cst_5 = arith.constant 0.000000e+00 : f32
    %6 = vector.broadcast %cst_5 : f32 to vector<2x512xf32>
    %7 = arith.maximumf %5, %6 : vector<2x512xf32>
    %c0_6 = arith.constant 0 : index
    %c0_7 = arith.constant 0 : index
    %8 = vector.load %arg4[%c0_6, %c0_7] : memref<2x512xf32, #tpu.memory_space<vmem>>, vector<2x512xf32>
    tpu.vector_store %arg4[%c0_6, %c0_7], %7 {strides = array<i32>} : memref<2x512xf32, #tpu.memory_space<vmem>>, vector<2x512xf32>,
    return
  }
  func.func @transform_0(%arg0: i32) -> (i32, i32) {
    %c0_i32 = arith.constant 0 : i32
    %c0_i32_0 = arith.constant 0 : i32
    return %arg0, %c0_i32 : i32, i32
  }
  func.func @transform_1(%arg0: i32) -> (i32, i32) {
    %c0_i32 = arith.constant 0 : i32
    %c0_i32_0 = arith.constant 0 : i32
    %c0_i32_1 = arith.constant 0 : i32
    return %c0_i32, %c0_i32_0 : i32, i32
  }
  func.func @transform_2(%arg0: i32) -> (i32, i32) {
    %c0_i32 = arith.constant 0 : i32
    %c0_i32_0 = arith.constant 0 : i32
    %c0_i32_1 = arith.constant 0 : i32
    return %c0_i32, %c0_i32_0 : i32, i32
  }
  func.func @transform_3(%arg0: i32) -> (i32, i32) {
    %c0_i32 = arith.constant 0 : i32
    %c0_i32_0 = arith.constant 0 : i32
    return %arg0, %c0_i32 : i32, i32
  }
}

</mosaic_0001>

<llo_original>
// kernel: encoder_forward.5
$region0: #{encoder_forward.5}
  #allocation0 [shape = 'u32[]', space=smem, size = 0x4, offset = 0x4, fixed_abs, tag = 'smem constant byte address 0x4 - core index']
  #allocation1 [shape = 'u32[144,128]{1,0:T(1,128)}', space=vmem, size = 0x12000, scoped, tag = 'internal scratch']
  %s0 = inlined_call_operand.vmem [shape: bf16[32,36], index: 0, kind: input, shape index: {}]
  %s1 = inlined_call_operand.vmem [shape: bf16[36,4608], index: 1, kind: input, shape index: {}]
  %s2 = inlined_call_operand.vmem [shape: f32[32,1], index: 2, kind: input, shape index: {}]
  %s3 = inlined_call_operand.vmem [shape: bf16[32,4608], index: 3, kind: output, shape index: {}]
  %s4 = sld [smem:[#allocation0]]
  $region87: #{encoder_forward.5} parent=0
    _
  %s6 = ssub.s32 1, %s4
  %s7 = scalar_select 0, %s6, %s4
  $region1: #{encoder_forward.5} parent=0
    #allocation2 [shape = 'u8[368640]{0}', space=vmem, size = 0x5a000, scoped, tag = 'input window, operand 1']
    #allocation3 [shape = 'u8[294912]{0}', space=vmem, size = 0x48000, scoped, tag = 'output window, operand 0']
    loop: start=0, step=1, limit=4
    $region2: #{encoder_forward.5} parent=1 // loop_pre_header
      _
    $region3: #{encoder_forward.5} parent=1 // loop_header
      %s9 = sphi 0, %s13
      %p10 = scmp.ge.s32.totalorder %s9, 4
      %s17 = sphi 0, %s17
      %s19 = sphi 0, %s17
      %s20 = sphi 0, %s19
      %s34 = sphi 0, %s20
      %s40 = sphi 0, %s42
      %s43 = sphi 0, %s40
      %s44 = sphi 0, %s43
      %s60 = sphi 0, %s44
      %s64 = sphi 0, %s64
      %s66 = sphi 0, %s64
      %s67 = sphi 0, %s66
      %s81 = sphi 0, %s67
      %s87 = sphi 0, %s89
      %s90 = sphi 0, %s87
      %s91 = sphi 0, %s90
      %s107 = sphi 0, %s91
    $region4: #{encoder_forward.5} parent=1 // loop_header_branch
      %12 = sbr.rel (%p10) target = $region8
    $region5: #{encoder_forward.5} parent=1 // loop_body
      %s14 = ssub.s32 %s9, 1
      %s15 = ssub.s32 %s9, 2
      %s16 = sadd.s32 %s9, 1
      %s18 = sadd.s32 %s17, 1
      %p21 = scmp.eq.s32.totalorder %s9, 1
      %p22 = scmp.ne.s32.totalorder %s17, %s19
      %p23 = scmp.eq.s32.totalorder %s9, 0
      %p24 = por %p22, %p23
      %p25 = scmp.ne.s32.totalorder %s17, %s19
      %p26 = scmp.eq.s32.totalorder %s14, 1
      %p27 = por %p25, %p26
      %p28 = scmp.ne.s32.totalorder %s19, %s20
      %p29 = scmp.eq.s32.totalorder %s14, 0
      %p30 = por %p28, %p29
      %p31 = scmp.ne.s32.totalorder %s19, %s20
      %p32 = scmp.eq.s32.totalorder %s15, 1
      %p33 = por %p31, %p32
      %p35 = scmp.ne.s32.totalorder %s20, %s34
      %p36 = scmp.eq.s32.totalorder %s15, 0
      %p37 = por %p35, %p36
      %s38 = ssub.s32 %s9, %s16
      %p39 = scmp.eq.s32.totalorder %s38, 0
      %s41 = sadd.s32 %s40, 1
      %s42 = scalar_select %p39, %s40, %s41
      %p45 = pneg %p39
      %p46 = scmp.eq.s32.totalorder %s9, 1
      %p47 = por %p45, %p46
      %p48 = scmp.ne.s32.totalorder %s40, %s43
      %p49 = scmp.eq.s32.totalorder %s9, 0
      %p50 = por %p48, %p49
      %p51 = scmp.ne.s32.totalorder %s40, %s43
      %p52 = scmp.eq.s32.totalorder %s14, 1
      %p53 = por %p51, %p52
      %p54 = scmp.ne.s32.totalorder %s43, %s44
      %p55 = scmp.eq.s32.totalorder %s14, 0
      %p56 = por %p54, %p55
      %p57 = scmp.ne.s32.totalorder %s43, %s44
      %p58 = scmp.eq.s32.totalorder %s15, 1
      %p59 = por %p57, %p58
      %p61 = scmp.ne.s32.totalorder %s44, %s60
      %p62 = scmp.eq.s32.totalorder %s15, 0
      %p63 = por %p61, %p62
      %s65 = sadd.s32 %s64, 1
      %p68 = scmp.eq.s32.totalorder %s9, 1
      %p69 = scmp.ne.s32.totalorder %s64, %s66
      %p70 = scmp.eq.s32.totalorder %s9, 0
      %p71 = por %p69, %p70
      %p72 = scmp.ne.s32.totalorder %s64, %s66
      %p73 = scmp.eq.s32.totalorder %s14, 1
      %p74 = por %p72, %p73
      %p75 = scmp.ne.s32.totalorder %s66, %s67
      %p76 = scmp.eq.s32.totalorder %s14, 0
      %p77 = por %p75, %p76
      %p78 = scmp.ne.s32.totalorder %s66, %s67
      %p79 = scmp.eq.s32.totalorder %s15, 1
      %p80 = por %p78, %p79
      %p82 = scmp.ne.s32.totalorder %s67, %s81
      %p83 = scmp.eq.s32.totalorder %s15, 0
      %p84 = por %p82, %p83
      %s85 = ssub.s32 %s9, %s16
      %p86 = scmp.eq.s32.totalorder %s85, 0
      %s88 = sadd.s32 %s87, 1
      %s89 = scalar_select %p86, %s87, %s88
      %p92 = pneg %p86
      %p93 = scmp.eq.s32.totalorder %s9, 1
      %p94 = por %p92, %p93
      %p95 = scmp.ne.s32.totalorder %s87, %s90
      %p96 = scmp.eq.s32.totalorder %s9, 0
      %p97 = por %p95, %p96
      %p98 = scmp.ne.s32.totalorder %s87, %s90
      %p99 = scmp.eq.s32.totalorder %s14, 1
      %p100 = por %p98, %p99
      %p101 = scmp.ne.s32.totalorder %s90, %s91
      %p102 = scmp.eq.s32.totalorder %s14, 0
      %p103 = por %p101, %p102
      %p104 = scmp.ne.s32.totalorder %s90, %s91
      %p105 = scmp.eq.s32.totalorder %s15, 1
      %p106 = por %p104, %p105
      %p108 = scmp.ne.s32.totalorder %s91, %s107
      %p109 = scmp.eq.s32.totalorder %s15, 0
      %p110 = por %p108, %p109
      %p111 = scmp.le.s32.totalorder 1, %s9
      %p112 = scmp.lt.s32.totalorder %s9, 3
      %p113 = pnand %p111, %p112
      %p114 = pneg %p113
      // Predicated region
      $region9: #{encoder_forward.5} parent=5 // pred_check
        _
      $region10: #{encoder_forward.5} parent=5 // pred_check_branch
        %116 = sbr.rel (%p113) target = $region12
      $region11: #{encoder_forward.5} parent=5 // pred_region
        %s117 = ssub.s32 %s9, 1
        // Predicated region
        $region13: #{encoder_forward.5} parent=11 // pred_check
          %p118 = pneg %p30
        $region14: #{encoder_forward.5} parent=11 // pred_check_branch
          %120 = sbr.rel (%p118) target = $region16
        $region15: #{encoder_forward.5} parent=11 // pred_region
          _
        $region16: #{encoder_forward.5} parent=11 // pred_fallthru
          _
        // Predicated region
        $region17: #{encoder_forward.5} parent=11 // pred_check
          %p121 = pneg %p77
        $region18: #{encoder_forward.5} parent=11 // pred_check_branch
          %123 = sbr.rel (%p121) target = $region20
        $region19: #{encoder_forward.5} parent=11 // pred_region
          _
        $region20: #{encoder_forward.5} parent=11 // pred_fallthru
          _
      $region12: #{encoder_forward.5} parent=5 // pred_fallthru
        _
      %p124 = scmp.lt.s32.totalorder %s9, 2
      // Predicated region
      $region21: #{encoder_forward.5} parent=5 // pred_check
        %p125 = pneg %p124
      $region22: #{encoder_forward.5} parent=5 // pred_check_branch
        %127 = sbr.rel (%p125) target = $region24
      $region23: #{encoder_forward.5} parent=5 // pred_region
        // Predicated region
        $region25: #{encoder_forward.5} parent=23 // pred_check
          %p128 = pneg %p50
        $region26: #{encoder_forward.5} parent=23 // pred_check_branch
          %130 = sbr.rel (%p128) target = $region28
        $region27: #{encoder_forward.5} parent=23 // pred_region
          %s131 = sand.u32 %s40, 1
          %s132 = sand.u32 %s40, 1
          %s133 = smul.addr %s132, 360
          %s134 = scalar_lea.vmem [#allocation2], %s133
          %s135 = smul.u32 18, %s9
          %s136 = smul.addr %s135, 4
          %s137 = scalar_lea.vmem %s1, %s136
          // Predicated region
          $region29: #{encoder_forward.5} parent=27 // pred_check
            _
          $region30: #{encoder_forward.5} parent=27 // pred_check_branch
            %139 = sbr.rel (0) target = $region32
          $region31: #{encoder_forward.5} parent=27 // pred_region
            // Predicated region
            $region33: #{encoder_forward.5} parent=31 // pred_check
              _
            $region34: #{encoder_forward.5} parent=31 // pred_check_branch
              %141 = sbr.rel (0) target = $region36
            $region35: #{encoder_forward.5} parent=31 // pred_region
              loop: start=0, step=1, limit=1
              $region37: #{encoder_forward.5} parent=35 // loop_pre_header
                _
              $region38: #{encoder_forward.5} parent=35 // loop_header
                %s143 = sphi 0, %s147
                %p144 = scmp.ge.s32.totalorder %s143, 1
                %s148 = sphi %s137, %s137
                %s149 = sphi %s134, %s134
              $region39: #{encoder_forward.5} parent=35 // loop_header_branch
                %146 = sbr.rel (%p144) target = $region43
              $region40: #{encoder_forward.5} parent=35 // loop_body
                %v150 = vld [vmem:[%s148] sm:$0xff]
                %151 = vst [vmem:[%s149] sm:$0xff] %v150
                %v152 = vld [vmem:[%s148 + $0x8] sm:$0xff]
                %153 = vst [vmem:[%s149 + $0x8] sm:$0xff] %v152
                %v154 = vld [vmem:[%s148 + $0x10] sm:$0xff]
                %155 = vst [vmem:[%s149 + $0x10] sm:$0xff] %v154
                %v156 = vld [vmem:[%s148 + $0x18] sm:$0xff]
                %157 = vst [vmem:[%s149 + $0x18] sm:$0xff] %v156
                %v158 = vld [vmem:[%s148 + $0x20] sm:$0xff]
                %159 = vst [vmem:[%s149 + $0x20] sm:$0xff] %v158
                %v160 = vld [vmem:[%s148 + $0x28] sm:$0xff]
                %161 = vst [vmem:[%s149 + $0x28] sm:$0xff] %v160
                %v162 = vld [vmem:[%s148 + $0x30] sm:$0xff]
                %163 = vst [vmem:[%s149 + $0x30] sm:$0xff] %v162
                %v164 = vld [vmem:[%s148 + $0x38] sm:$0xff]
                %165 = vst [vmem:[%s149 + $0x38] sm:$0xff] %v164
                %v166 = vld [vmem:[%s148 + $0x40] sm:$0xff]
                %167 = vst [vmem:[%s149 + $0x40] sm:$0xff] %v166
                %v168 = vld [vmem:[%s148 + $0x90] sm:$0xff]
                %169 = vst [vmem:[%s149 + $0x48] sm:$0xff] %v168
                %v170 = vld [vmem:[%s148 + $0x98] sm:$0xff]
                %171 = vst [vmem:[%s149 + $0x50] sm:$0xff] %v170
                %v172 = vld [vmem:[%s148 + $0xa0] sm:$0xff]
                %173 = vst [vmem:[%s149 + $0x58] sm:$0xff] %v172
                %v174 = vld [vmem:[%s148 + $0xa8] sm:$0xff]
                %175 = vst [vmem:[%s149 + $0x60] sm:$0xff] %v174
                %v176 = vld [vmem:[%s148 + $0xb0] sm:$0xff]
                %177 = vst [vmem:[%s149 + $0x68] sm:$0xff] %v176
                %v178 = vld [vmem:[%s148 + $0xb8] sm:$0xff]
                %179 = vst [vmem:[%s149 + $0x70] sm:$0xff] %v178
                %v180 = vld [vmem:[%s148 + $0xc0] sm:$0xff]
                %181 = vst [vmem:[%s149 + $0x78] sm:$0xff] %v180
                %v182 = vld [vmem:[%s148 + $0xc8] sm:$0xff]
                %183 = vst [vmem:[%s149 + $0x80] sm:$0xff] %v182
                %v184 = vld [vmem:[%s148 + $0xd0] sm:$0xff]
                %185 = vst [vmem:[%s149 + $0x88] sm:$0xff] %v184
                %v186 = vld [vmem:[%s148 + $0x120] sm:$0xff]
                %187 = vst [vmem:[%s149 + $0x90] sm:$0xff] %v186
                %v188 = vld [vmem:[%s148 + $0x128] sm:$0xff]
                %189 = vst [vmem:[%s149 + $0x98] sm:$0xff] %v188
                %v190 = vld [vmem:[%s148 + $0x130] sm:$0xff]
                %191 = vst [vmem:[%s149 + $0xa0] sm:$0xff] %v190
                %v192 = vld [vmem:[%s148 + $0x138] sm:$0xff]
                %193 = vst [vmem:[%s149 + $0xa8] sm:$0xff] %v192
                %v194 = vld [vmem:[%s148 + $0x140] sm:$0xff]
                %195 = vst [vmem:[%s149 + $0xb0] sm:$0xff] %v194
                %v196 = vld [vmem:[%s148 + $0x148] sm:$0xff]
                %197 = vst [vmem:[%s149 + $0xb8] sm:$0xff] %v196
                %v198 = vld [vmem:[%s148 + $0x150] sm:$0xff]
                %199 = vst [vmem:[%s149 + $0xc0] sm:$0xff] %v198
                %v200 = vld [vmem:[%s148 + $0x158] sm:$0xff]
                %201 = vst [vmem:[%s149 + $0xc8] sm:$0xff] %v200
                %v202 = vld [vmem:[%s148 + $0x160] sm:$0xff]
                %203 = vst [vmem:[%s149 + $0xd0] sm:$0xff] %v202
                %v204 = vld [vmem:[%s148 + $0x1b0] sm:$0xff]
                %205 = vst [vmem:[%s149 + $0xd8] sm:$0xff] %v204
                %v206 = vld [vmem:[%s148 + $0x1b8] sm:$0xff]
                %207 = vst [vmem:[%s149 + $0xe0] sm:$0xff] %v206
                %v208 = vld [vmem:[%s148 + $0x1c0] sm:$0xff]
                %209 = vst [vmem:[%s149 + $0xe8] sm:$0xff] %v208
                %v210 = vld [vmem:[%s148 + $0x1c8] sm:$0xff]
                %211 = vst [vmem:[%s149 + $0xf0] sm:$0xff] %v210
                %v212 = vld [vmem:[%s148 + $0x1d0] sm:$0xff]
                %213 = vst [vmem:[%s149 + $0xf8] sm:$0xff] %v212
                %v214 = vld [vmem:[%s148 + $0x1d8] sm:$0xff]
                %215 = vst [vmem:[%s149 + $0x100] sm:$0xff] %v214
                %v216 = vld [vmem:[%s148 + $0x1e0] sm:$0xff]
                %217 = vst [vmem:[%s149 + $0x108] sm:$0xff] %v216
                %v218 = vld [vmem:[%s148 + $0x1e8] sm:$0xff]
                %219 = vst [vmem:[%s149 + $0x110] sm:$0xff] %v218
                %v220 = vld [vmem:[%s148 + $0x1f0] sm:$0xff]
                %221 = vst [vmem:[%s149 + $0x118] sm:$0xff] %v220
                %v222 = vld [vmem:[%s148 + $0x240] sm:$0xff]
                %223 = vst [vmem:[%s149 + $0x120] sm:$0xff] %v222
                %v224 = vld [vmem:[%s148 + $0x248] sm:$0xff]
                %225 = vst [vmem:[%s149 + $0x128] sm:$0xff] %v224
                %v226 = vld [vmem:[%s148 + $0x250] sm:$0xff]
                %227 = vst [vmem:[%s149 + $0x130] sm:$0xff] %v226
                %v228 = vld [vmem:[%s148 + $0x258] sm:$0xff]
                %229 = vst [vmem:[%s149 + $0x138] sm:$0xff] %v228
                %v230 = vld [vmem:[%s148 + $0x260] sm:$0xff]
                %231 = vst [vmem:[%s149 + $0x140] sm:$0xff] %v230
                %v232 = vld [vmem:[%s148 + $0x268] sm:$0xff]
                %233 = vst [vmem:[%s149 + $0x148] sm:$0xff] %v232
                %v234 = vld [vmem:[%s148 + $0x270] sm:$0xff]
                %235 = vst [vmem:[%s149 + $0x150] sm:$0xff] %v234
                %v236 = vld [vmem:[%s148 + $0x278] sm:$0xff]
                %237 = vst [vmem:[%s149 + $0x158] sm:$0xff] %v236
                %v238 = vld [vmem:[%s148 + $0x280] sm:$0xff]
                %239 = vst [vmem:[%s149 + $0x160] sm:$0xff] %v238
              $region41: #{encoder_forward.5} parent=35 // loop_footer
                %s147 = sadd.s32 1, %s143
              $region42: #{encoder_forward.5} parent=35 // loop_footer_branch
                %142 = sbr.rel target = $region38
              $region43: #{encoder_forward.5} parent=35 // loop_exit
                _
            $region36: #{encoder_forward.5} parent=31 // pred_fallthru
              _
            // Predicated region
            $region44: #{encoder_forward.5} parent=31 // pred_check
              _
            $region45: #{encoder_forward.5} parent=31 // pred_check_branch
              %241 = sbr.rel target = $region47
            $region46: #{encoder_forward.5} parent=31 // pred_region
              _
            $region47: #{encoder_forward.5} parent=31 // pred_fallthru
              _
          $region32: #{encoder_forward.5} parent=27 // pred_fallthru
            _
          %242 = vnop
        $region28: #{encoder_forward.5} parent=23 // pred_fallthru
          _
      $region24: #{encoder_forward.5} parent=5 // pred_fallthru
        _
      %p243 = scmp.le.s32.totalorder 1, %s9
      %p244 = scmp.lt.s32.totalorder %s9, 3
      %p245 = pnand %p243, %p244
      %p246 = pneg %p245
      // Predicated region
      $region48: #{encoder_forward.5} parent=5 // pred_check
        _
      $region49: #{encoder_forward.5} parent=5 // pred_check_branch
        %248 = sbr.rel (%p245) target = $region51
      $region50: #{encoder_forward.5} parent=5 // pred_region
        %s249 = ssub.s32 %s9, 1
        %s250 = sand.u32 %s43, 1
        %s251 = sand.u32 %s43, 1
        %s252 = smul.addr %s251, 360
        %s253 = scalar_lea.vmem [#allocation2], %s252
        // Predicated region
        $region52: #{encoder_forward.5} parent=50 // pred_check
          %p254 = pneg %p56
        $region53: #{encoder_forward.5} parent=50 // pred_check_branch
          %256 = sbr.rel (%p254) target = $region55
        $region54: #{encoder_forward.5} parent=50 // pred_region
          _
        $region55: #{encoder_forward.5} parent=50 // pred_fallthru
          _
        %p257 = pneg %p30
        %p258 = pneg %p27
        %s259 = sand.u32 %s43, 1
        %s260 = sand.u32 %s43, 1
        %s261 = smul.addr %s260, 360
        %s262 = scalar_lea.vmem [#allocation2], %s261
        %p263 = pneg %p56
        %p264 = pneg %p53
        %p265 = pneg %p77
        %p266 = pneg %p74
        %p267 = pneg %p103
        %p268 = pneg %p100
        %s269 = sand.u32 %s90, 1
        %s270 = sand.u32 %s90, 1
        %s271 = smul.addr %s270, 288
        %s272 = scalar_lea.vmem [#allocation3], %s271
        %s273 = smul.u32 18, %s14
        %s274 = smul.u32 18, %s14
        %v276 = vld [vmem:[%s0] sm:$0xf]
        %v277 = vld [vmem:[%s0 + $0x4] sm:$0xf]
        %v278 = vld [vmem:[%s0 + $0x8] sm:$0xf]
        %v279 = vld [vmem:[%s0 + $0xc] sm:$0xf]
        %v280 = vld [vmem:[%s253] sm:$0xff]
        %v281 = vld [vmem:[%s253 + $0x8] sm:$0xff]
        %v282 = vld [vmem:[%s253 + $0x10] sm:$0xff]
        %v283 = vld [vmem:[%s253 + $0x18] sm:$0xff]
        %v284 = vld [vmem:[%s253 + $0x20] sm:$0xff]
        %v285 = vld [vmem:[%s253 + $0x28] sm:$0xff]
        %v286 = vld [vmem:[%s253 + $0x30] sm:$0xff]
        %v287 = vld [vmem:[%s253 + $0x38] sm:$0xff]
        %v288 = vld [vmem:[%s253 + $0x40] sm:$0xff]
        %v289 = vld [vmem:[%s253 + $0x48] sm:$0xff]
        %v290 = vld [vmem:[%s253 + $0x50] sm:$0xff]
        %v291 = vld [vmem:[%s253 + $0x58] sm:$0xff]
        %v292 = vld [vmem:[%s253 + $0x60] sm:$0xff]
        %v293 = vld [vmem:[%s253 + $0x68] sm:$0xff]
        %v294 = vld [vmem:[%s253 + $0x70] sm:$0xff]
        %v295 = vld [vmem:[%s253 + $0x78] sm:$0xff]
        %v296 = vld [vmem:[%s253 + $0x80] sm:$0xff]
        %v297 = vld [vmem:[%s253 + $0x88] sm:$0xff]
        %v298 = vld [vmem:[%s253 + $0x90] sm:$0xff]
        %v299 = vld [vmem:[%s253 + $0x98] sm:$0xff]
        %v300 = vld [vmem:[%s253 + $0xa0] sm:$0xff]
        %v301 = vld [vmem:[%s253 + $0xa8] sm:$0xff]
        %v302 = vld [vmem:[%s253 + $0xb0] sm:$0xff]
        %v303 = vld [vmem:[%s253 + $0xb8] sm:$0xff]
        %v304 = vld [vmem:[%s253 + $0xc0] sm:$0xff]
        %v305 = vld [vmem:[%s253 + $0xc8] sm:$0xff]
        %v306 = vld [vmem:[%s253 + $0xd0] sm:$0xff]
        %v307 = vld [vmem:[%s253 + $0xd8] sm:$0xff]
        %v308 = vld [vmem:[%s253 + $0xe0] sm:$0xff]
        %v309 = vld [vmem:[%s253 + $0xe8] sm:$0xff]
        %v310 = vld [vmem:[%s253 + $0xf0] sm:$0xff]
        %v311 = vld [vmem:[%s253 + $0xf8] sm:$0xff]
        %v312 = vld [vmem:[%s253 + $0x100] sm:$0xff]
        %v313 = vld [vmem:[%s253 + $0x108] sm:$0xff]
        %v314 = vld [vmem:[%s253 + $0x110] sm:$0xff]
        %v315 = vld [vmem:[%s253 + $0x118] sm:$0xff]
        %v316 = vld [vmem:[%s253 + $0x120] sm:$0x33]
        %v317 = vld [vmem:[%s253 + $0x128] sm:$0x33]
        %v318 = vld [vmem:[%s253 + $0x130] sm:$0x33]
        %v319 = vld [vmem:[%s253 + $0x138] sm:$0x33]
        %v320 = vld [vmem:[%s253 + $0x140] sm:$0x33]
        %v321 = vld [vmem:[%s253 + $0x148] sm:$0x33]
        %v322 = vld [vmem:[%s253 + $0x150] sm:$0x33]
        %v323 = vld [vmem:[%s253 + $0x158] sm:$0x33]
        %v324 = vld [vmem:[%s253 + $0x160] sm:$0x33]
        %v325 = vld [vmem:[%s2] sm:$0xff]
        %v326 = vld [vmem:[%s2 + $0x8] sm:$0xff]
        %v327 = vld [vmem:[%s2 + $0x10] sm:$0xff]
        %v328 = vld [vmem:[%s2 + $0x18] sm:$0xff]
        %330 = vset.pattern.permute.xlu0 0
        %331 = vperm.xlu0 %330, %v325
        %v332 = vpop.permute.xlu0 %331
        %335 = vset.pattern.permute.xlu0 0
        %336 = vperm.xlu0 %335, %v326
        %v337 = vpop.permute.xlu0 %336
        %340 = vset.pattern.permute.xlu0 0
        %341 = vperm.xlu0 %340, %v327
        %v342 = vpop.permute.xlu0 %341
        %345 = vset.pattern.permute.xlu0 0
        %346 = vperm.xlu0 %345, %v328
        %v347 = vpop.permute.xlu0 %346
        %v353 = vunpack.c.l.b16 %v276
        %v354 = vunpack.c.l.b16 %v277
        %v355 = vunpack.c.l.b16 %v278
        %v356 = vunpack.c.l.b16 %v279
        %v357 = vpack.c.b16 %v354, %v353
        %v358 = vpack.c.b16 %v356, %v355
        %v404 = vunpack.c.l.b16 %v280
        %v405 = vunpack.c.h.b16 %v280
        %v406 = vunpack.c.l.b16 %v281
        %v407 = vunpack.c.h.b16 %v281
        %v408 = vunpack.c.l.b16 %v282
        %v409 = vunpack.c.h.b16 %v282
        %v410 = vunpack.c.l.b16 %v283
        %v411 = vunpack.c.h.b16 %v283
        %v412 = vunpack.c.l.b16 %v284
        %v413 = vunpack.c.h.b16 %v284
        %v414 = vunpack.c.l.b16 %v285
        %v415 = vunpack.c.h.b16 %v285
        %v416 = vunpack.c.l.b16 %v286
        %v417 = vunpack.c.h.b16 %v286
        %v418 = vunpack.c.l.b16 %v287
        %v419 = vunpack.c.h.b16 %v287
        %v420 = vunpack.c.l.b16 %v288
        %v421 = vunpack.c.h.b16 %v288
        %v422 = vunpack.c.l.b16 %v289
        %v423 = vunpack.c.h.b16 %v289
        %v424 = vunpack.c.l.b16 %v290
        %v425 = vunpack.c.h.b16 %v290
        %v426 = vunpack.c.l.b16 %v291
        %v427 = vunpack.c.h.b16 %v291
        %v428 = vunpack.c.l.b16 %v292
        %v429 = vunpack.c.h.b16 %v292
        %v430 = vunpack.c.l.b16 %v293
        %v431 = vunpack.c.h.b16 %v293
        %v432 = vunpack.c.l.b16 %v294
        %v433 = vunpack.c.h.b16 %v294
        %v434 = vunpack.c.l.b16 %v295
        %v435 = vunpack.c.h.b16 %v295
        %v436 = vunpack.c.l.b16 %v296
        %v437 = vunpack.c.h.b16 %v296
        %v438 = vunpack.c.l.b16 %v297
        %v439 = vunpack.c.h.b16 %v297
        %v440 = vunpack.c.l.b16 %v298
        %v441 = vunpack.c.h.b16 %v298
        %v442 = vunpack.c.l.b16 %v299
        %v443 = vunpack.c.h.b16 %v299
        %v444 = vunpack.c.l.b16 %v300
        %v445 = vunpack.c.h.b16 %v300
        %v446 = vunpack.c.l.b16 %v301
        %v447 = vunpack.c.h.b16 %v301
        %v448 = vunpack.c.l.b16 %v302
        %v449 = vunpack.c.h.b16 %v302
        %v450 = vunpack.c.l.b16 %v303
        %v451 = vunpack.c.h.b16 %v303
        %v452 = vunpack.c.l.b16 %v304
        %v453 = vunpack.c.h.b16 %v304
        %v454 = vunpack.c.l.b16 %v305
        %v455 = vunpack.c.h.b16 %v305
        %v456 = vunpack.c.l.b16 %v306
        %v457 = vunpack.c.h.b16 %v306
        %v458 = vunpack.c.l.b16 %v307
        %v459 = vunpack.c.h.b16 %v307
        %v460 = vunpack.c.l.b16 %v308
        %v461 = vunpack.c.h.b16 %v308
        %v462 = vunpack.c.l.b16 %v309
        %v463 = vunpack.c.h.b16 %v309
        %v464 = vunpack.c.l.b16 %v310
        %v465 = vunpack.c.h.b16 %v310
        %v466 = vunpack.c.l.b16 %v311
        %v467 = vunpack.c.h.b16 %v311
        %v468 = vunpack.c.l.b16 %v312
        %v469 = vunpack.c.h.b16 %v312
        %v470 = vunpack.c.l.b16 %v313
        %v471 = vunpack.c.h.b16 %v313
        %v472 = vunpack.c.l.b16 %v314
        %v473 = vunpack.c.h.b16 %v314
        %v474 = vunpack.c.l.b16 %v315
        %v475 = vunpack.c.h.b16 %v315
        %v476 = vunpack.c.l.b16 %v316
        %v477 = vunpack.c.h.b16 %v316
        %v478 = vunpack.c.l.b16 %v317
        %v479 = vunpack.c.h.b16 %v317
        %v480 = vunpack.c.l.b16 %v318
        %v481 = vunpack.c.h.b16 %v318
        %v482 = vunpack.c.l.b16 %v319
        %v483 = vunpack.c.h.b16 %v319
        %v484 = vunpack.c.l.b16 %v320
        %v485 = vunpack.c.h.b16 %v320
        %v486 = vunpack.c.l.b16 %v321
        %v487 = vunpack.c.h.b16 %v321
        %v488 = vunpack.c.l.b16 %v322
        %v489 = vunpack.c.h.b16 %v322
        %v490 = vunpack.c.l.b16 %v323
        %v491 = vunpack.c.h.b16 %v323
        %v492 = vunpack.c.l.b16 %v324
        %v493 = vunpack.c.h.b16 %v324
        %v494 = vpack.c.b16 %v422, %v404
        %v495 = vpack.c.b16 %v423, %v405
        %v496 = vpack.c.b16 %v424, %v406
        %v497 = vpack.c.b16 %v425, %v407
        %v498 = vpack.c.b16 %v426, %v408
        %v499 = vpack.c.b16 %v427, %v409
        %v500 = vpack.c.b16 %v428, %v410
        %v501 = vpack.c.b16 %v429, %v411
        %v502 = vpack.c.b16 %v430, %v412
        %v503 = vpack.c.b16 %v431, %v413
        %v504 = vpack.c.b16 %v432, %v414
        %v505 = vpack.c.b16 %v433, %v415
        %v506 = vpack.c.b16 %v434, %v416
        %v507 = vpack.c.b16 %v435, %v417
        %v508 = vpack.c.b16 %v436, %v418
        %v509 = vpack.c.b16 %v437, %v419
        %v510 = vpack.c.b16 %v438, %v420
        %v511 = vpack.c.b16 %v439, %v421
        %v512 = vpack.c.b16 %v458, %v440
        %v513 = vpack.c.b16 %v459, %v441
        %v514 = vpack.c.b16 %v460, %v442
        %v515 = vpack.c.b16 %v461, %v443
        %v516 = vpack.c.b16 %v462, %v444
        %v517 = vpack.c.b16 %v463, %v445
        %v518 = vpack.c.b16 %v464, %v446
        %v519 = vpack.c.b16 %v465, %v447
        %v520 = vpack.c.b16 %v466, %v448
        %v521 = vpack.c.b16 %v467, %v449
        %v522 = vpack.c.b16 %v468, %v450
        %v523 = vpack.c.b16 %v469, %v451
        %v524 = vpack.c.b16 %v470, %v452
        %v525 = vpack.c.b16 %v471, %v453
        %v526 = vpack.c.b16 %v472, %v454
        %v527 = vpack.c.b16 %v473, %v455
        %v528 = vpack.c.b16 %v474, %v456
        %v529 = vpack.c.b16 %v475, %v457
        %v530 = vpack.c.b16 %v476, %v476
        %v531 = vpack.c.b16 %v477, %v477
        %v532 = vpack.c.b16 %v478, %v478
        %v533 = vpack.c.b16 %v479, %v479
        %v534 = vpack.c.b16 %v480, %v480
        %v535 = vpack.c.b16 %v481, %v481
        %v536 = vpack.c.b16 %v482, %v482
        %v537 = vpack.c.b16 %v483, %v483
        %v538 = vpack.c.b16 %v484, %v484
        %v539 = vpack.c.b16 %v485, %v485
        %v540 = vpack.c.b16 %v486, %v486
        %v541 = vpack.c.b16 %v487, %v487
        %v542 = vpack.c.b16 %v488, %v488
        %v543 = vpack.c.b16 %v489, %v489
        %v544 = vpack.c.b16 %v490, %v490
        %v545 = vpack.c.b16 %v491, %v491
        %v546 = vpack.c.b16 %v492, %v492
        %v547 = vpack.c.b16 %v493, %v493
        %vm584 = vcmask 293888
        %v586 = vsel %vm584, %v357, 0
        %v589 = vsel %vm584, %v358, 0
        %vm591 = vcmask 1041408
        %v593 = vsel %vm591, %v530, 0
        %v596 = vsel %vm591, %v531, 0
        %v599 = vsel %vm591, %v532, 0
        %v602 = vsel %vm591, %v533, 0
        %v605 = vsel %vm591, %v534, 0
        %v608 = vsel %vm591, %v535, 0
        %v611 = vsel %vm591, %v536, 0
        %v614 = vsel %vm591, %v537, 0
        %v617 = vsel %vm591, %v538, 0
        %v620 = vsel %vm591, %v539, 0
        %v623 = vsel %vm591, %v540, 0
        %v626 = vsel %vm591, %v541, 0
        %v629 = vsel %vm591, %v542, 0
        %v632 = vsel %vm591, %v543, 0
        %v635 = vsel %vm591, %v544, 0
        %v638 = vsel %vm591, %v545, 0
        %v641 = vsel %vm591, %v546, 0
        %v644 = vsel %vm591, %v547, 0
        %646 = vmatprep.subr.bf16.mxu0 0
        %647 = vmatpush1.bf16.msra.mxu0 0
        %648 = vmatprep.subr.bf16.mxu0 0
        %649 = vmatpush1.bf16.msra.mxu0 0
        %650 = vmatprep.subr.bf16.mxu0 0
        %651 = vmatpush1.bf16.msra.mxu0 0
        %652 = vmatprep.subr.bf16.mxu0 0
        %653 = vmatpush1.bf16.msra.mxu0 0
        %654 = vmatprep.subr.bf16.mxu0 0
        %655 = vmatpush1.bf16.msra.mxu0 0
        %656 = vmatprep.subr.bf16.mxu0 %v596
        %657 = vmatpush1.bf16.msra.mxu0 %v593
        %658 = vmatprep.subr.bf16.mxu0 %v513
        %659 = vmatpush1.bf16.msra.mxu0 %v512
        %660 = vmatprep.subr.bf16.mxu0 %v495
        %661 = vmatpush1.bf16.msra.mxu0 %v494
        %662 = vmatprep.subr.bf16.mxu0 0
        %663 = vmatpush2.bf16.msra.mxu0 0
        %664 = vmatprep.subr.bf16.mxu0 0
        %665 = vmatpush2.bf16.msra.mxu0 0
        %666 = vmatprep.subr.bf16.mxu0 0
        %667 = vmatpush2.bf16.msra.mxu0 0
        %668 = vmatprep.subr.bf16.mxu0 0
        %669 = vmatpush2.bf16.msra.mxu0 0
        %670 = vmatprep.subr.bf16.mxu0 0
        %671 = vmatpush2.bf16.msra.mxu0 0
        %672 = vmatprep.subr.bf16.mxu0 0
        %673 = vmatpush2.bf16.msra.mxu0 0
        %674 = vmatprep.subr.bf16.mxu0 0
        %675 = vmatpush2.bf16.msra.mxu0 0
        %676 = vmatprep.subr.bf16.mxu0 0
        %677 = vmatpush2.bf16.msra.mxu0 0
        %678 = vmatprep.mubr.bf16.mxu0 0
        %679 = vmatmul.mubr.bf16.gmra.mxu0 %v586
        %v680 = vpop.f32.mrf.mxu0
        %v681 = vadd.f32 %v332, %v680
        %v682 = vpop.f32.mrf.mxu0
        %v683 = vadd.f32 %v332, %v682
        %v684 = vpop.f32.mrf.mxu0
        %v685 = vadd.f32 %v337, %v684
        %v686 = vpop.f32.mrf.mxu0
        %v687 = vadd.f32 %v337, %v686
        %688 = vmatprep.mubr.bf16.mxu0 0
        %689 = vmatmul.mubr.bf16.gmra.mxu0 %v589
        %v690 = vpop.f32.mrf.mxu0
        %v691 = vadd.f32 %v342, %v690
        %v692 = vpop.f32.mrf.mxu0
        %v693 = vadd.f32 %v342, %v692
        %v694 = vpop.f32.mrf.mxu0
        %v695 = vadd.f32 %v347, %v694
        %v696 = vpop.f32.mrf.mxu0
        %v697 = vadd.f32 %v347, %v696
        %698 = vdwg.mxu0
        %699 = vmatprep.subr.bf16.mxu0 0
        %700 = vmatpush1.bf16.msra.mxu0 0
        %701 = vmatprep.subr.bf16.mxu0 0
        %702 = vmatpush1.bf16.msra.mxu0 0
        %703 = vmatprep.subr.bf16.mxu0 0
        %704 = vmatpush1.bf16.msra.mxu0 0
        %705 = vmatprep.subr.bf16.mxu0 0
        %706 = vmatpush1.bf16.msra.mxu0 0
        %707 = vmatprep.subr.bf16.mxu0 0
        %708 = vmatpush1.bf16.msra.mxu0 0
        %709 = vmatprep.subr.bf16.mxu0 %v602
        %710 = vmatpush1.bf16.msra.mxu0 %v599
        %711 = vmatprep.subr.bf16.mxu0 %v515
        %712 = vmatpush1.bf16.msra.mxu0 %v514
        %713 = vmatprep.subr.bf16.mxu0 %v497
        %714 = vmatpush1.bf16.msra.mxu0 %v496
        %715 = vmatprep.subr.bf16.mxu0 0
        %716 = vmatpush2.bf16.msra.mxu0 0
        %717 = vmatprep.subr.bf16.mxu0 0
        %718 = vmatpush2.bf16.msra.mxu0 0
        %719 = vmatprep.subr.bf16.mxu0 0
        %720 = vmatpush2.bf16.msra.mxu0 0
        %721 = vmatprep.subr.bf16.mxu0 0
        %722 = vmatpush2.bf16.msra.mxu0 0
        %723 = vmatprep.subr.bf16.mxu0 0
        %724 = vmatpush2.bf16.msra.mxu0 0
        %725 = vmatprep.subr.bf16.mxu0 0
        %726 = vmatpush2.bf16.msra.mxu0 0
        %727 = vmatprep.subr.bf16.mxu0 0
        %728 = vmatpush2.bf16.msra.mxu0 0
        %729 = vmatprep.subr.bf16.mxu0 0
        %730 = vmatpush2.bf16.msra.mxu0 0
        %731 = vmatprep.mubr.bf16.mxu0 0
        %732 = vmatmul.mubr.bf16.gmra.mxu0 %v586
        %v733 = vpop.f32.mrf.mxu0
        %v734 = vadd.f32 %v332, %v733
        %v735 = vpop.f32.mrf.mxu0
        %v736 = vadd.f32 %v332, %v735
        %v737 = vpop.f32.mrf.mxu0
        %v738 = vadd.f32 %v337, %v737
        %v739 = vpop.f32.mrf.mxu0
        %v740 = vadd.f32 %v337, %v739
        %741 = vmatprep.mubr.bf16.mxu0 0
        %742 = vmatmul.mubr.bf16.gmra.mxu0 %v589
        %v743 = vpop.f32.mrf.mxu0
        %v744 = vadd.f32 %v342, %v743
        %v745 = vpop.f32.mrf.mxu0
        %v746 = vadd.f32 %v342, %v745
        %v747 = vpop.f32.mrf.mxu0
        %v748 = vadd.f32 %v347, %v747
        %v749 = vpop.f32.mrf.mxu0
        %v750 = vadd.f32 %v347, %v749
        %751 = vdwg.mxu0
        %752 = vmatprep.subr.bf16.mxu0 0
        %753 = vmatpush1.bf16.msra.mxu0 0
        %754 = vmatprep.subr.bf16.mxu0 0
        %755 = vmatpush1.bf16.msra.mxu0 0
        %756 = vmatprep.subr.bf16.mxu0 0
        %757 = vmatpush1.bf16.msra.mxu0 0
        %758 = vmatprep.subr.bf16.mxu0 0
        %759 = vmatpush1.bf16.msra.mxu0 0
        %760 = vmatprep.subr.bf16.mxu0 0
        %761 = vmatpush1.bf16.msra.mxu0 0
        %762 = vmatprep.subr.bf16.mxu0 %v608
        %763 = vmatpush1.bf16.msra.mxu0 %v605
        %764 = vmatprep.subr.bf16.mxu0 %v517
        %765 = vmatpush1.bf16.msra.mxu0 %v516
        %766 = vmatprep.subr.bf16.mxu0 %v499
        %767 = vmatpush1.bf16.msra.mxu0 %v498
        %768 = vmatprep.subr.bf16.mxu0 0
        %769 = vmatpush2.bf16.msra.mxu0 0
        %770 = vmatprep.subr.bf16.mxu0 0
        %771 = vmatpush2.bf16.msra.mxu0 0
        %772 = vmatprep.subr.bf16.mxu0 0
        %773 = vmatpush2.bf16.msra.mxu0 0
        %774 = vmatprep.subr.bf16.mxu0 0
        %775 = vmatpush2.bf16.msra.mxu0 0
        %776 = vmatprep.subr.bf16.mxu0 0
        %777 = vmatpush2.bf16.msra.mxu0 0
        %778 = vmatprep.subr.bf16.mxu0 0
        %779 = vmatpush2.bf16.msra.mxu0 0
        %780 = vmatprep.subr.bf16.mxu0 0
        %781 = vmatpush2.bf16.msra.mxu0 0
        %782 = vmatprep.subr.bf16.mxu0 0
        %783 = vmatpush2.bf16.msra.mxu0 0
        %784 = vmatprep.mubr.bf16.mxu0 0
        %785 = vmatmul.mubr.bf16.gmra.mxu0 %v586
        %v786 = vpop.f32.mrf.mxu0
        %v787 = vadd.f32 %v332, %v786
        %v788 = vpop.f32.mrf.mxu0
        %v789 = vadd.f32 %v332, %v788
        %v790 = vpop.f32.mrf.mxu0
        %v791 = vadd.f32 %v337, %v790
        %v792 = vpop.f32.mrf.mxu0
        %v793 = vadd.f32 %v337, %v792
        %794 = vmatprep.mubr.bf16.mxu0 0
        %795 = vmatmul.mubr.bf16.gmra.mxu0 %v589
        %v796 = vpop.f32.mrf.mxu0
        %v797 = vadd.f32 %v342, %v796
        %v798 = vpop.f32.mrf.mxu0
        %v799 = vadd.f32 %v342, %v798
        %v800 = vpop.f32.mrf.mxu0
        %v801 = vadd.f32 %v347, %v800
        %v802 = vpop.f32.mrf.mxu0
        %v803 = vadd.f32 %v347, %v802
        %804 = vdwg.mxu0
        %805 = vmatprep.subr.bf16.mxu0 0
        %806 = vmatpush1.bf16.msra.mxu0 0
        %807 = vmatprep.subr.bf16.mxu0 0
        %808 = vmatpush1.bf16.msra.mxu0 0
        %809 = vmatprep.subr.bf16.mxu0 0
        %810 = vmatpush1.bf16.msra.mxu0 0
        %811 = vmatprep.subr.bf16.mxu0 0
        %812 = vmatpush1.bf16.msra.mxu0 0
        %813 = vmatprep.subr.bf16.mxu0 0
        %814 = vmatpush1.bf16.msra.mxu0 0
        %815 = vmatprep.subr.bf16.mxu0 %v614
        %816 = vmatpush1.bf16.msra.mxu0 %v611
        %817 = vmatprep.subr.bf16.mxu0 %v519
        %818 = vmatpush1.bf16.msra.mxu0 %v518
        %819 = vmatprep.subr.bf16.mxu0 %v501
        %820 = vmatpush1.bf16.msra.mxu0 %v500
        %821 = vmatprep.subr.bf16.mxu0 0
        %822 = vmatpush2.bf16.msra.mxu0 0
        %823 = vmatprep.subr.bf16.mxu0 0
        %824 = vmatpush2.bf16.msra.mxu0 0
        %825 = vmatprep.subr.bf16.mxu0 0
        %826 = vmatpush2.bf16.msra.mxu0 0
        %827 = vmatprep.subr.bf16.mxu0 0
        %828 = vmatpush2.bf16.msra.mxu0 0
        %829 = vmatprep.subr.bf16.mxu0 0
        %830 = vmatpush2.bf16.msra.mxu0 0
        %831 = vmatprep.subr.bf16.mxu0 0
        %832 = vmatpush2.bf16.msra.mxu0 0
        %833 = vmatprep.subr.bf16.mxu0 0
        %834 = vmatpush2.bf16.msra.mxu0 0
        %835 = vmatprep.subr.bf16.mxu0 0
        %836 = vmatpush2.bf16.msra.mxu0 0
        %837 = vmatprep.mubr.bf16.mxu0 0
        %838 = vmatmul.mubr.bf16.gmra.mxu0 %v586
        %v839 = vpop.f32.mrf.mxu0
        %v840 = vadd.f32 %v332, %v839
        %v841 = vpop.f32.mrf.mxu0
        %v842 = vadd.f32 %v332, %v841
        %v843 = vpop.f32.mrf.mxu0
        %v844 = vadd.f32 %v337, %v843
        %v845 = vpop.f32.mrf.mxu0
        %v846 = vadd.f32 %v337, %v845
        %847 = vmatprep.mubr.bf16.mxu0 0
        %848 = vmatmul.mubr.bf16.gmra.mxu0 %v589
        %v849 = vpop.f32.mrf.mxu0
        %v850 = vadd.f32 %v342, %v849
        %v851 = vpop.f32.mrf.mxu0
        %v852 = vadd.f32 %v342, %v851
        %v853 = vpop.f32.mrf.mxu0
        %v854 = vadd.f32 %v347, %v853
        %v855 = vpop.f32.mrf.mxu0
        %v856 = vadd.f32 %v347, %v855
        %857 = vdwg.mxu0
        %858 = vmatprep.subr.bf16.mxu0 0
        %859 = vmatpush1.bf16.msra.mxu0 0
        %860 = vmatprep.subr.bf16.mxu0 0
        %861 = vmatpush1.bf16.msra.mxu0 0
        %862 = vmatprep.subr.bf16.mxu0 0
        %863 = vmatpush1.bf16.msra.mxu0 0
        %864 = vmatprep.subr.bf16.mxu0 0
        %865 = vmatpush1.bf16.msra.mxu0 0
        %866 = vmatprep.subr.bf16.mxu0 0
        %867 = vmatpush1.bf16.msra.mxu0 0
        %868 = vmatprep.subr.bf16.mxu0 %v620
        %869 = vmatpush1.bf16.msra.mxu0 %v617
        %870 = vmatprep.subr.bf16.mxu0 %v521
        %871 = vmatpush1.bf16.msra.mxu0 %v520
        %872 = vmatprep.subr.bf16.mxu0 %v503
        %873 = vmatpush1.bf16.msra.mxu0 %v502
        %874 = vmatprep.subr.bf16.mxu0 0
        %875 = vmatpush2.bf16.msra.mxu0 0
        %876 = vmatprep.subr.bf16.mxu0 0
        %877 = vmatpush2.bf16.msra.mxu0 0
        %878 = vmatprep.subr.bf16.mxu0 0
        %879 = vmatpush2.bf16.msra.mxu0 0
        %880 = vmatprep.subr.bf16.mxu0 0
        %881 = vmatpush2.bf16.msra.mxu0 0
        %882 = vmatprep.subr.bf16.mxu0 0
        %883 = vmatpush2.bf16.msra.mxu0 0
        %884 = vmatprep.subr.bf16.mxu0 0
        %885 = vmatpush2.bf16.msra.mxu0 0
        %886 = vmatprep.subr.bf16.mxu0 0
        %887 = vmatpush2.bf16.msra.mxu0 0
        %888 = vmatprep.subr.bf16.mxu0 0
        %889 = vmatpush2.bf16.msra.mxu0 0
        %890 = vmatprep.mubr.bf16.mxu0 0
        %891 = vmatmul.mubr.bf16.gmra.mxu0 %v586
        %v892 = vpop.f32.mrf.mxu0
        %v893 = vadd.f32 %v332, %v892
        %v894 = vpop.f32.mrf.mxu0
        %v895 = vadd.f32 %v332, %v894
        %v896 = vpop.f32.mrf.mxu0
        %v897 = vadd.f32 %v337, %v896
        %v898 = vpop.f32.mrf.mxu0
        %v899 = vadd.f32 %v337, %v898
        %900 = vmatprep.mubr.bf16.mxu0 0
        %901 = vmatmul.mubr.bf16.gmra.mxu0 %v589
        %v902 = vpop.f32.mrf.mxu0
        %v903 = vadd.f32 %v342, %v902
        %v904 = vpop.f32.mrf.mxu0
        %v905 = vadd.f32 %v342, %v904
        %v906 = vpop.f32.mrf.mxu0
        %v907 = vadd.f32 %v347, %v906
        %v908 = vpop.f32.mrf.mxu0
        %v909 = vadd.f32 %v347, %v908
        %910 = vdwg.mxu0
        %911 = vmatprep.subr.bf16.mxu0 0
        %912 = vmatpush1.bf16.msra.mxu0 0
        %913 = vmatprep.subr.bf16.mxu0 0
        %914 = vmatpush1.bf16.msra.mxu0 0
        %915 = vmatprep.subr.bf16.mxu0 0
        %916 = vmatpush1.bf16.msra.mxu0 0
        %917 = vmatprep.subr.bf16.mxu0 0
        %918 = vmatpush1.bf16.msra.mxu0 0
        %919 = vmatprep.subr.bf16.mxu0 0
        %920 = vmatpush1.bf16.msra.mxu0 0
        %921 = vmatprep.subr.bf16.mxu0 %v626
        %922 = vmatpush1.bf16.msra.mxu0 %v623
        %923 = vmatprep.subr.bf16.mxu0 %v523
        %924 = vmatpush1.bf16.msra.mxu0 %v522
        %925 = vmatprep.subr.bf16.mxu0 %v505
        %926 = vmatpush1.bf16.msra.mxu0 %v504
        %927 = vmatprep.subr.bf16.mxu0 0
        %928 = vmatpush2.bf16.msra.mxu0 0
        %929 = vmatprep.subr.bf16.mxu0 0
        %930 = vmatpush2.bf16.msra.mxu0 0
        %931 = vmatprep.subr.bf16.mxu0 0
        %932 = vmatpush2.bf16.msra.mxu0 0
        %933 = vmatprep.subr.bf16.mxu0 0
        %934 = vmatpush2.bf16.msra.mxu0 0
        %935 = vmatprep.subr.bf16.mxu0 0
        %936 = vmatpush2.bf16.msra.mxu0 0
        %937 = vmatprep.subr.bf16.mxu0 0
        %938 = vmatpush2.bf16.msra.mxu0 0
        %939 = vmatprep.subr.bf16.mxu0 0
        %940 = vmatpush2.bf16.msra.mxu0 0
        %941 = vmatprep.subr.bf16.mxu0 0
        %942 = vmatpush2.bf16.msra.mxu0 0
        %943 = vmatprep.mubr.bf16.mxu0 0
        %944 = vmatmul.mubr.bf16.gmra.mxu0 %v586
        %v945 = vpop.f32.mrf.mxu0
        %v946 = vadd.f32 %v332, %v945
        %v947 = vpop.f32.mrf.mxu0
        %v948 = vadd.f32 %v332, %v947
        %v949 = vpop.f32.mrf.mxu0
        %v950 = vadd.f32 %v337, %v949
        %v951 = vpop.f32.mrf.mxu0
        %v952 = vadd.f32 %v337, %v951
        %953 = vmatprep.mubr.bf16.mxu0 0
        %954 = vmatmul.mubr.bf16.gmra.mxu0 %v589
        %v955 = vpop.f32.mrf.mxu0
        %v956 = vadd.f32 %v342, %v955
        %v957 = vpop.f32.mrf.mxu0
        %v958 = vadd.f32 %v342, %v957
        %v959 = vpop.f32.mrf.mxu0
        %v960 = vadd.f32 %v347, %v959
        %v961 = vpop.f32.mrf.mxu0
        %v962 = vadd.f32 %v347, %v961
        %963 = vdwg.mxu0
        %964 = vmatprep.subr.bf16.mxu0 0
        %965 = vmatpush1.bf16.msra.mxu0 0
        %966 = vmatprep.subr.bf16.mxu0 0
        %967 = vmatpush1.bf16.msra.mxu0 0
        %968 = vmatprep.subr.bf16.mxu0 0
        %969 = vmatpush1.bf16.msra.mxu0 0
        %970 = vmatprep.subr.bf16.mxu0 0
        %971 = vmatpush1.bf16.msra.mxu0 0
        %972 = vmatprep.subr.bf16.mxu0 0
        %973 = vmatpush1.bf16.msra.mxu0 0
        %974 = vmatprep.subr.bf16.mxu0 %v632
        %975 = vmatpush1.bf16.msra.mxu0 %v629
        %976 = vmatprep.subr.bf16.mxu0 %v525
        %977 = vmatpush1.bf16.msra.mxu0 %v524
        %978 = vmatprep.subr.bf16.mxu0 %v507
        %979 = vmatpush1.bf16.msra.mxu0 %v506
        %980 = vmatprep.subr.bf16.mxu0 0
        %981 = vmatpush2.bf16.msra.mxu0 0
        %982 = vmatprep.subr.bf16.mxu0 0
        %983 = vmatpush2.bf16.msra.mxu0 0
        %984 = vmatprep.subr.bf16.mxu0 0
        %985 = vmatpush2.bf16.msra.mxu0 0
        %986 = vmatprep.subr.bf16.mxu0 0
        %987 = vmatpush2.bf16.msra.mxu0 0
        %988 = vmatprep.subr.bf16.mxu0 0
        %989 = vmatpush2.bf16.msra.mxu0 0
        %990 = vmatprep.subr.bf16.mxu0 0
        %991 = vmatpush2.bf16.msra.mxu0 0
        %992 = vmatprep.subr.bf16.mxu0 0
        %993 = vmatpush2.bf16.msra.mxu0 0
        %994 = vmatprep.subr.bf16.mxu0 0
        %995 = vmatpush2.bf16.msra.mxu0 0
        %996 = vmatprep.mubr.bf16.mxu0 0
        %997 = vmatmul.mubr.bf16.gmra.mxu0 %v586
        %v998 = vpop.f32.mrf.mxu0
        %v999 = vadd.f32 %v332, %v998
        %v1000 = vpop.f32.mrf.mxu0
        %v1001 = vadd.f32 %v332, %v1000
        %v1002 = vpop.f32.mrf.mxu0
        %v1003 = vadd.f32 %v337, %v1002
        %v1004 = vpop.f32.mrf.mxu0
        %v1005 = vadd.f32 %v337, %v1004
        %1006 = vmatprep.mubr.bf16.mxu0 0
        %1007 = vmatmul.mubr.bf16.gmra.mxu0 %v589
        %v1008 = vpop.f32.mrf.mxu0
        %v1009 = vadd.f32 %v342, %v1008
        %v1010 = vpop.f32.mrf.mxu0
        %v1011 = vadd.f32 %v342, %v1010
        %v1012 = vpop.f32.mrf.mxu0
        %v1013 = vadd.f32 %v347, %v1012
        %v1014 = vpop.f32.mrf.mxu0
        %v1015 = vadd.f32 %v347, %v1014
        %1016 = vdwg.mxu0
        %1017 = vmatprep.subr.bf16.mxu0 0
        %1018 = vmatpush1.bf16.msra.mxu0 0
        %1019 = vmatprep.subr.bf16.mxu0 0
        %1020 = vmatpush1.bf16.msra.mxu0 0
        %1021 = vmatprep.subr.bf16.mxu0 0
        %1022 = vmatpush1.bf16.msra.mxu0 0
        %1023 = vmatprep.subr.bf16.mxu0 0
        %1024 = vmatpush1.bf16.msra.mxu0 0
        %1025 = vmatprep.subr.bf16.mxu0 0
        %1026 = vmatpush1.bf16.msra.mxu0 0
        %1027 = vmatprep.subr.bf16.mxu0 %v638
        %1028 = vmatpush1.bf16.msra.mxu0 %v635
        %1029 = vmatprep.subr.bf16.mxu0 %v527
        %1030 = vmatpush1.bf16.msra.mxu0 %v526
        %1031 = vmatprep.subr.bf16.mxu0 %v509
        %1032 = vmatpush1.bf16.msra.mxu0 %v508
        %1033 = vmatprep.subr.bf16.mxu0 0
        %1034 = vmatpush2.bf16.msra.mxu0 0
        %1035 = vmatprep.subr.bf16.mxu0 0
        %1036 = vmatpush2.bf16.msra.mxu0 0
        %1037 = vmatprep.subr.bf16.mxu0 0
        %1038 = vmatpush2.bf16.msra.mxu0 0
        %1039 = vmatprep.subr.bf16.mxu0 0
        %1040 = vmatpush2.bf16.msra.mxu0 0
        %1041 = vmatprep.subr.bf16.mxu0 0
        %1042 = vmatpush2.bf16.msra.mxu0 0
        %1043 = vmatprep.subr.bf16.mxu0 0
        %1044 = vmatpush2.bf16.msra.mxu0 0
        %1045 = vmatprep.subr.bf16.mxu0 0
        %1046 = vmatpush2.bf16.msra.mxu0 0
        %1047 = vmatprep.subr.bf16.mxu0 0
        %1048 = vmatpush2.bf16.msra.mxu0 0
        %1049 = vmatprep.mubr.bf16.mxu0 0
        %1050 = vmatmul.mubr.bf16.gmra.mxu0 %v586
        %v1051 = vpop.f32.mrf.mxu0
        %v1052 = vadd.f32 %v332, %v1051
        %v1053 = vpop.f32.mrf.mxu0
        %v1054 = vadd.f32 %v332, %v1053
        %v1055 = vpop.f32.mrf.mxu0
        %v1056 = vadd.f32 %v337, %v1055
        %v1057 = vpop.f32.mrf.mxu0
        %v1058 = vadd.f32 %v337, %v1057
        %1059 = vmatprep.mubr.bf16.mxu0 0
        %1060 = vmatmul.mubr.bf16.gmra.mxu0 %v589
        %v1061 = vpop.f32.mrf.mxu0
        %v1062 = vadd.f32 %v342, %v1061
        %v1063 = vpop.f32.mrf.mxu0
        %v1064 = vadd.f32 %v342, %v1063
        %v1065 = vpop.f32.mrf.mxu0
        %v1066 = vadd.f32 %v347, %v1065
        %v1067 = vpop.f32.mrf.mxu0
        %v1068 = vadd.f32 %v347, %v1067
        %1069 = vdwg.mxu0
        %1070 = vmatprep.subr.bf16.mxu0 0
        %1071 = vmatpush1.bf16.msra.mxu0 0
        %1072 = vmatprep.subr.bf16.mxu0 0
        %1073 = vmatpush1.bf16.msra.mxu0 0
        %1074 = vmatprep.subr.bf16.mxu0 0
        %1075 = vmatpush1.bf16.msra.mxu0 0
        %1076 = vmatprep.subr.bf16.mxu0 0
        %1077 = vmatpush1.bf16.msra.mxu0 0
        %1078 = vmatprep.subr.bf16.mxu0 0
        %1079 = vmatpush1.bf16.msra.mxu0 0
        %1080 = vmatprep.subr.bf16.mxu0 %v644
        %1081 = vmatpush1.bf16.msra.mxu0 %v641
        %1082 = vmatprep.subr.bf16.mxu0 %v529
        %1083 = vmatpush1.bf16.msra.mxu0 %v528
        %1084 = vmatprep.subr.bf16.mxu0 %v511
        %1085 = vmatpush1.bf16.msra.mxu0 %v510
        %1086 = vmatprep.subr.bf16.mxu0 0
        %1087 = vmatpush2.bf16.msra.mxu0 0
        %1088 = vmatprep.subr.bf16.mxu0 0
        %1089 = vmatpush2.bf16.msra.mxu0 0
        %1090 = vmatprep.subr.bf16.mxu0 0
        %1091 = vmatpush2.bf16.msra.mxu0 0
        %1092 = vmatprep.subr.bf16.mxu0 0
        %1093 = vmatpush2.bf16.msra.mxu0 0
        %1094 = vmatprep.subr.bf16.mxu0 0
        %1095 = vmatpush2.bf16.msra.mxu0 0
        %1096 = vmatprep.subr.bf16.mxu0 0
        %1097 = vmatpush2.bf16.msra.mxu0 0
        %1098 = vmatprep.subr.bf16.mxu0 0
        %1099 = vmatpush2.bf16.msra.mxu0 0
        %1100 = vmatprep.subr.bf16.mxu0 0
        %1101 = vmatpush2.bf16.msra.mxu0 0
        %1102 = vmatprep.mubr.bf16.mxu0 0
        %1103 = vmatmul.mubr.bf16.gmra.mxu0 %v586
        %v1104 = vpop.f32.mrf.mxu0
        %v1105 = vadd.f32 %v332, %v1104
        %v1106 = vpop.f32.mrf.mxu0
        %v1107 = vadd.f32 %v332, %v1106
        %v1108 = vpop.f32.mrf.mxu0
        %v1109 = vadd.f32 %v337, %v1108
        %v1110 = vpop.f32.mrf.mxu0
        %v1111 = vadd.f32 %v337, %v1110
        %1112 = vmatprep.mubr.bf16.mxu0 0
        %1113 = vmatmul.mubr.bf16.gmra.mxu0 %v589
        %v1114 = vpop.f32.mrf.mxu0
        %v1115 = vadd.f32 %v342, %v1114
        %v1116 = vpop.f32.mrf.mxu0
        %v1117 = vadd.f32 %v342, %v1116
        %v1118 = vpop.f32.mrf.mxu0
        %v1119 = vadd.f32 %v347, %v1118
        %v1120 = vpop.f32.mrf.mxu0
        %v1121 = vadd.f32 %v347, %v1120
        %1122 = vdwg.mxu0
        %v1123 = vmax.f32 %v681, 0.0
        %v1124 = vmax.f32 %v683, 0.0
        %v1125 = vmax.f32 %v734, 0.0
        %v1126 = vmax.f32 %v736, 0.0
        %v1127 = vmax.f32 %v787, 0.0
        %v1128 = vmax.f32 %v789, 0.0
        %v1129 = vmax.f32 %v840, 0.0
        %v1130 = vmax.f32 %v842, 0.0
        %v1131 = vmax.f32 %v893, 0.0
        %v1132 = vmax.f32 %v895, 0.0
        %v1133 = vmax.f32 %v946, 0.0
        %v1134 = vmax.f32 %v948, 0.0
        %v1135 = vmax.f32 %v999, 0.0
        %v1136 = vmax.f32 %v1001, 0.0
        %v1137 = vmax.f32 %v1052, 0.0
        %v1138 = vmax.f32 %v1054, 0.0
        %v1139 = vmax.f32 %v1105, 0.0
        %v1140 = vmax.f32 %v1107, 0.0
        %v1141 = vmax.f32 %v685, 0.0
        %v1142 = vmax.f32 %v687, 0.0
        %v1143 = vmax.f32 %v738, 0.0
        %v1144 = vmax.f32 %v740, 0.0
        %v1145 = vmax.f32 %v791, 0.0
        %v1146 = vmax.f32 %v793, 0.0
        %v1147 = vmax.f32 %v844, 0.0
        %v1148 = vmax.f32 %v846, 0.0
        %v1149 = vmax.f32 %v897, 0.0
        %v1150 = vmax.f32 %v899, 0.0
        %v1151 = vmax.f32 %v950, 0.0
        %v1152 = vmax.f32 %v952, 0.0
        %v1153 = vmax.f32 %v1003, 0.0
        %v1154 = vmax.f32 %v1005, 0.0
        %v1155 = vmax.f32 %v1056, 0.0
        %v1156 = vmax.f32 %v1058, 0.0
        %v1157 = vmax.f32 %v1109, 0.0
        %v1158 = vmax.f32 %v1111, 0.0
        %v1159 = vmax.f32 %v691, 0.0
        %v1160 = vmax.f32 %v693, 0.0
        %v1161 = vmax.f32 %v744, 0.0
        %v1162 = vmax.f32 %v746, 0.0
        %v1163 = vmax.f32 %v797, 0.0
        %v1164 = vmax.f32 %v799, 0.0
        %v1165 = vmax.f32 %v850, 0.0
        %v1166 = vmax.f32 %v852, 0.0
        %v1167 = vmax.f32 %v903, 0.0
        %v1168 = vmax.f32 %v905, 0.0
        %v1169 = vmax.f32 %v956, 0.0
        %v1170 = vmax.f32 %v958, 0.0
        %v1171 = vmax.f32 %v1009, 0.0
        %v1172 = vmax.f32 %v1011, 0.0
        %v1173 = vmax.f32 %v1062, 0.0
        %v1174 = vmax.f32 %v1064, 0.0
        %v1175 = vmax.f32 %v1115, 0.0
        %v1176 = vmax.f32 %v1117, 0.0
        %v1177 = vmax.f32 %v695, 0.0
        %v1178 = vmax.f32 %v697, 0.0
        %v1179 = vmax.f32 %v748, 0.0
        %v1180 = vmax.f32 %v750, 0.0
        %v1181 = vmax.f32 %v801, 0.0
        %v1182 = vmax.f32 %v803, 0.0
        %v1183 = vmax.f32 %v854, 0.0
        %v1184 = vmax.f32 %v856, 0.0
        %v1185 = vmax.f32 %v907, 0.0
        %v1186 = vmax.f32 %v909, 0.0
        %v1187 = vmax.f32 %v960, 0.0
        %v1188 = vmax.f32 %v962, 0.0
        %v1189 = vmax.f32 %v1013, 0.0
        %v1190 = vmax.f32 %v1015, 0.0
        %v1191 = vmax.f32 %v1066, 0.0
        %v1192 = vmax.f32 %v1068, 0.0
        %v1193 = vmax.f32 %v1119, 0.0
        %v1194 = vmax.f32 %v1121, 0.0
        %v1195 = vpack.c.bf16 %v1141, %v1123
        %v1196 = vpack.c.bf16 %v1142, %v1124
        %v1197 = vpack.c.bf16 %v1143, %v1125
        %v1198 = vpack.c.bf16 %v1144, %v1126
        %v1199 = vpack.c.bf16 %v1145, %v1127
        %v1200 = vpack.c.bf16 %v1146, %v1128
        %v1201 = vpack.c.bf16 %v1147, %v1129
        %v1202 = vpack.c.bf16 %v1148, %v1130
        %v1203 = vpack.c.bf16 %v1149, %v1131
        %v1204 = vpack.c.bf16 %v1150, %v1132
        %v1205 = vpack.c.bf16 %v1151, %v1133
        %v1206 = vpack.c.bf16 %v1152, %v1134
        %v1207 = vpack.c.bf16 %v1153, %v1135
        %v1208 = vpack.c.bf16 %v1154, %v1136
        %v1209 = vpack.c.bf16 %v1155, %v1137
        %v1210 = vpack.c.bf16 %v1156, %v1138
        %v1211 = vpack.c.bf16 %v1157, %v1139
        %v1212 = vpack.c.bf16 %v1158, %v1140
        %v1213 = vpack.c.bf16 %v1177, %v1159
        %v1214 = vpack.c.bf16 %v1178, %v1160
        %v1215 = vpack.c.bf16 %v1179, %v1161
        %v1216 = vpack.c.bf16 %v1180, %v1162
        %v1217 = vpack.c.bf16 %v1181, %v1163
        %v1218 = vpack.c.bf16 %v1182, %v1164
        %v1219 = vpack.c.bf16 %v1183, %v1165
        %v1220 = vpack.c.bf16 %v1184, %v1166
        %v1221 = vpack.c.bf16 %v1185, %v1167
        %v1222 = vpack.c.bf16 %v1186, %v1168
        %v1223 = vpack.c.bf16 %v1187, %v1169
        %v1224 = vpack.c.bf16 %v1188, %v1170
        %v1225 = vpack.c.bf16 %v1189, %v1171
        %v1226 = vpack.c.bf16 %v1190, %v1172
        %v1227 = vpack.c.bf16 %v1191, %v1173
        %v1228 = vpack.c.bf16 %v1192, %v1174
        %v1229 = vpack.c.bf16 %v1193, %v1175
        %v1230 = vpack.c.bf16 %v1194, %v1176
        %v1267 = vunpack.c.l.b16 %v1195
        %v1268 = vunpack.c.l.b16 %v1196
        %v1269 = vunpack.c.l.b16 %v1197
        %v1270 = vunpack.c.l.b16 %v1198
        %v1271 = vunpack.c.l.b16 %v1199
        %v1272 = vunpack.c.l.b16 %v1200
        %v1273 = vunpack.c.l.b16 %v1201
        %v1274 = vunpack.c.l.b16 %v1202
        %v1275 = vunpack.c.l.b16 %v1203
        %v1276 = vunpack.c.l.b16 %v1204
        %v1277 = vunpack.c.l.b16 %v1205
        %v1278 = vunpack.c.l.b16 %v1206
        %v1279 = vunpack.c.l.b16 %v1207
        %v1280 = vunpack.c.l.b16 %v1208
        %v1281 = vunpack.c.l.b16 %v1209
        %v1282 = vunpack.c.l.b16 %v1210
        %v1283 = vunpack.c.l.b16 %v1211
        %v1284 = vunpack.c.l.b16 %v1212
        %v1285 = vunpack.c.h.b16 %v1195
        %v1286 = vunpack.c.h.b16 %v1196
        %v1287 = vunpack.c.h.b16 %v1197
        %v1288 = vunpack.c.h.b16 %v1198
        %v1289 = vunpack.c.h.b16 %v1199
        %v1290 = vunpack.c.h.b16 %v1200
        %v1291 = vunpack.c.h.b16 %v1201
        %v1292 = vunpack.c.h.b16 %v1202
        %v1293 = vunpack.c.h.b16 %v1203
        %v1294 = vunpack.c.h.b16 %v1204
        %v1295 = vunpack.c.h.b16 %v1205
        %v1296 = vunpack.c.h.b16 %v1206
        %v1297 = vunpack.c.h.b16 %v1207
        %v1298 = vunpack.c.h.b16 %v1208
        %v1299 = vunpack.c.h.b16 %v1209
        %v1300 = vunpack.c.h.b16 %v1210
        %v1301 = vunpack.c.h.b16 %v1211
        %v1302 = vunpack.c.h.b16 %v1212
        %v1303 = vunpack.c.l.b16 %v1213
        %v1304 = vunpack.c.l.b16 %v1214
        %v1305 = vunpack.c.l.b16 %v1215
        %v1306 = vunpack.c.l.b16 %v1216
        %v1307 = vunpack.c.l.b16 %v1217
        %v1308 = vunpack.c.l.b16 %v1218
        %v1309 = vunpack.c.l.b16 %v1219
        %v1310 = vunpack.c.l.b16 %v1220
        %v1311 = vunpack.c.l.b16 %v1221
        %v1312 = vunpack.c.l.b16 %v1222
        %v1313 = vunpack.c.l.b16 %v1223
        %v1314 = vunpack.c.l.b16 %v1224
        %v1315 = vunpack.c.l.b16 %v1225
        %v1316 = vunpack.c.l.b16 %v1226
        %v1317 = vunpack.c.l.b16 %v1227
        %v1318 = vunpack.c.l.b16 %v1228
        %v1319 = vunpack.c.l.b16 %v1229
        %v1320 = vunpack.c.l.b16 %v1230
        %v1321 = vunpack.c.h.b16 %v1213
        %v1322 = vunpack.c.h.b16 %v1214
        %v1323 = vunpack.c.h.b16 %v1215
        %v1324 = vunpack.c.h.b16 %v1216
        %v1325 = vunpack.c.h.b16 %v1217
        %v1326 = vunpack.c.h.b16 %v1218
        %v1327 = vunpack.c.h.b16 %v1219
        %v1328 = vunpack.c.h.b16 %v1220
        %v1329 = vunpack.c.h.b16 %v1221
        %v1330 = vunpack.c.h.b16 %v1222
        %v1331 = vunpack.c.h.b16 %v1223
        %v1332 = vunpack.c.h.b16 %v1224
        %v1333 = vunpack.c.h.b16 %v1225
        %v1334 = vunpack.c.h.b16 %v1226
        %v1335 = vunpack.c.h.b16 %v1227
        %v1336 = vunpack.c.h.b16 %v1228
        %v1337 = vunpack.c.h.b16 %v1229
        %v1338 = vunpack.c.h.b16 %v1230
        %v1339 = vpack.c.b16 %v1268, %v1267
        %v1340 = vpack.c.b16 %v1270, %v1269
        %v1341 = vpack.c.b16 %v1272, %v1271
        %v1342 = vpack.c.b16 %v1274, %v1273
        %v1343 = vpack.c.b16 %v1276, %v1275
        %v1344 = vpack.c.b16 %v1278, %v1277
        %v1345 = vpack.c.b16 %v1280, %v1279
        %v1346 = vpack.c.b16 %v1282, %v1281
        %v1347 = vpack.c.b16 %v1284, %v1283
        %v1348 = vpack.c.b16 %v1286, %v1285
        %v1349 = vpack.c.b16 %v1288, %v1287
        %v1350 = vpack.c.b16 %v1290, %v1289
        %v1351 = vpack.c.b16 %v1292, %v1291
        %v1352 = vpack.c.b16 %v1294, %v1293
        %v1353 = vpack.c.b16 %v1296, %v1295
        %v1354 = vpack.c.b16 %v1298, %v1297
        %v1355 = vpack.c.b16 %v1300, %v1299
        %v1356 = vpack.c.b16 %v1302, %v1301
        %v1357 = vpack.c.b16 %v1304, %v1303
        %v1358 = vpack.c.b16 %v1306, %v1305
        %v1359 = vpack.c.b16 %v1308, %v1307
        %v1360 = vpack.c.b16 %v1310, %v1309
        %v1361 = vpack.c.b16 %v1312, %v1311
        %v1362 = vpack.c.b16 %v1314, %v1313
        %v1363 = vpack.c.b16 %v1316, %v1315
        %v1364 = vpack.c.b16 %v1318, %v1317
        %v1365 = vpack.c.b16 %v1320, %v1319
        %v1366 = vpack.c.b16 %v1322, %v1321
        %v1367 = vpack.c.b16 %v1324, %v1323
        %v1368 = vpack.c.b16 %v1326, %v1325
        %v1369 = vpack.c.b16 %v1328, %v1327
        %v1370 = vpack.c.b16 %v1330, %v1329
        %v1371 = vpack.c.b16 %v1332, %v1331
        %v1372 = vpack.c.b16 %v1334, %v1333
        %v1373 = vpack.c.b16 %v1336, %v1335
        %v1374 = vpack.c.b16 %v1338, %v1337
        %1411 = vst [vmem:[%s272] sm:$0xff] %v1339
        %1412 = vst [vmem:[%s272 + $0x8] sm:$0xff] %v1340
        %1413 = vst [vmem:[%s272 + $0x10] sm:$0xff] %v1341
        %1414 = vst [vmem:[%s272 + $0x18] sm:$0xff] %v1342
        %1415 = vst [vmem:[%s272 + $0x20] sm:$0xff] %v1343
        %1416 = vst [vmem:[%s272 + $0x28] sm:$0xff] %v1344
        %1417 = vst [vmem:[%s272 + $0x30] sm:$0xff] %v1345
        %1418 = vst [vmem:[%s272 + $0x38] sm:$0xff] %v1346
        %1419 = vst [vmem:[%s272 + $0x40] sm:$0xff] %v1347
        %1420 = vst [vmem:[%s272 + $0x48] sm:$0xff] %v1348
        %1421 = vst [vmem:[%s272 + $0x50] sm:$0xff] %v1349
        %1422 = vst [vmem:[%s272 + $0x58] sm:$0xff] %v1350
        %1423 = vst [vmem:[%s272 + $0x60] sm:$0xff] %v1351
        %1424 = vst [vmem:[%s272 + $0x68] sm:$0xff] %v1352
        %1425 = vst [vmem:[%s272 + $0x70] sm:$0xff] %v1353
        %1426 = vst [vmem:[%s272 + $0x78] sm:$0xff] %v1354
        %1427 = vst [vmem:[%s272 + $0x80] sm:$0xff] %v1355
        %1428 = vst [vmem:[%s272 + $0x88] sm:$0xff] %v1356
        %1429 = vst [vmem:[%s272 + $0x90] sm:$0xff] %v1357
        %1430 = vst [vmem:[%s272 + $0x98] sm:$0xff] %v1358
        %1431 = vst [vmem:[%s272 + $0xa0] sm:$0xff] %v1359
        %1432 = vst [vmem:[%s272 + $0xa8] sm:$0xff] %v1360
        %1433 = vst [vmem:[%s272 + $0xb0] sm:$0xff] %v1361
        %1434 = vst [vmem:[%s272 + $0xb8] sm:$0xff] %v1362
        %1435 = vst [vmem:[%s272 + $0xc0] sm:$0xff] %v1363
        %1436 = vst [vmem:[%s272 + $0xc8] sm:$0xff] %v1364
        %1437 = vst [vmem:[%s272 + $0xd0] sm:$0xff] %v1365
        %1438 = vst [vmem:[%s272 + $0xd8] sm:$0xff] %v1366
        %1439 = vst [vmem:[%s272 + $0xe0] sm:$0xff] %v1367
        %1440 = vst [vmem:[%s272 + $0xe8] sm:$0xff] %v1368
        %1441 = vst [vmem:[%s272 + $0xf0] sm:$0xff] %v1369
        %1442 = vst [vmem:[%s272 + $0xf8] sm:$0xff] %v1370
        %1443 = vst [vmem:[%s272 + $0x100] sm:$0xff] %v1371
        %1444 = vst [vmem:[%s272 + $0x108] sm:$0xff] %v1372
        %1445 = vst [vmem:[%s272 + $0x110] sm:$0xff] %v1373
        %1446 = vst [vmem:[%s272 + $0x118] sm:$0xff] %v1374
        %s1447 = sand.u32 %s90, 1
        %s1448 = sand.u32 %s90, 1
        %s1449 = smul.addr %s1448, 288
        %s1450 = scalar_lea.vmem [#allocation3], %s1449
        // Predicated region
        $region56: #{encoder_forward.5} parent=50 // pred_check
          %p1451 = pneg %p100
        $region57: #{encoder_forward.5} parent=50 // pred_check_branch
          %1453 = sbr.rel (%p1451) target = $region59
        $region58: #{encoder_forward.5} parent=50 // pred_region
          %s1454 = smul.u32 18, %s14
          %s1455 = smul.addr %s1454, 4
          %s1456 = scalar_lea.vmem %s3, %s1455
          // Predicated region
          $region60: #{encoder_forward.5} parent=58 // pred_check
            _
          $region61: #{encoder_forward.5} parent=58 // pred_check_branch
            %1458 = sbr.rel (0) target = $region63
          $region62: #{encoder_forward.5} parent=58 // pred_region
            // Predicated region
            $region64: #{encoder_forward.5} parent=62 // pred_check
              _
            $region65: #{encoder_forward.5} parent=62 // pred_check_branch
              %1460 = sbr.rel (0) target = $region67
            $region66: #{encoder_forward.5} parent=62 // pred_region
              loop: start=0, step=1, limit=1
              $region68: #{encoder_forward.5} parent=66 // loop_pre_header
                _
              $region69: #{encoder_forward.5} parent=66 // loop_header
                %s1462 = sphi 0, %s1466
                %p1463 = scmp.ge.s32.totalorder %s1462, 1
                %s1467 = sphi %s1450, %s1450
                %s1468 = sphi %s1456, %s1456
              $region70: #{encoder_forward.5} parent=66 // loop_header_branch
                %1465 = sbr.rel (%p1463) target = $region74
              $region71: #{encoder_forward.5} parent=66 // loop_body
                %v1469 = vld [vmem:[%s1467] sm:$0xff]
                %1470 = vst [vmem:[%s1468] sm:$0xff] %v1469
                %v1471 = vld [vmem:[%s1467 + $0x8] sm:$0xff]
                %1472 = vst [vmem:[%s1468 + $0x8] sm:$0xff] %v1471
                %v1473 = vld [vmem:[%s1467 + $0x10] sm:$0xff]
                %1474 = vst [vmem:[%s1468 + $0x10] sm:$0xff] %v1473
                %v1475 = vld [vmem:[%s1467 + $0x18] sm:$0xff]
                %1476 = vst [vmem:[%s1468 + $0x18] sm:$0xff] %v1475
                %v1477 = vld [vmem:[%s1467 + $0x20] sm:$0xff]
                %1478 = vst [vmem:[%s1468 + $0x20] sm:$0xff] %v1477
                %v1479 = vld [vmem:[%s1467 + $0x28] sm:$0xff]
                %1480 = vst [vmem:[%s1468 + $0x28] sm:$0xff] %v1479
                %v1481 = vld [vmem:[%s1467 + $0x30] sm:$0xff]
                %1482 = vst [vmem:[%s1468 + $0x30] sm:$0xff] %v1481
                %v1483 = vld [vmem:[%s1467 + $0x38] sm:$0xff]
                %1484 = vst [vmem:[%s1468 + $0x38] sm:$0xff] %v1483
                %v1485 = vld [vmem:[%s1467 + $0x40] sm:$0xff]
                %1486 = vst [vmem:[%s1468 + $0x40] sm:$0xff] %v1485
                %v1487 = vld [vmem:[%s1467 + $0x48] sm:$0xff]
                %1488 = vst [vmem:[%s1468 + $0x90] sm:$0xff] %v1487
                %v1489 = vld [vmem:[%s1467 + $0x50] sm:$0xff]
                %1490 = vst [vmem:[%s1468 + $0x98] sm:$0xff] %v1489
                %v1491 = vld [vmem:[%s1467 + $0x58] sm:$0xff]
                %1492 = vst [vmem:[%s1468 + $0xa0] sm:$0xff] %v1491
                %v1493 = vld [vmem:[%s1467 + $0x60] sm:$0xff]
                %1494 = vst [vmem:[%s1468 + $0xa8] sm:$0xff] %v1493
                %v1495 = vld [vmem:[%s1467 + $0x68] sm:$0xff]
                %1496 = vst [vmem:[%s1468 + $0xb0] sm:$0xff] %v1495
                %v1497 = vld [vmem:[%s1467 + $0x70] sm:$0xff]
                %1498 = vst [vmem:[%s1468 + $0xb8] sm:$0xff] %v1497
                %v1499 = vld [vmem:[%s1467 + $0x78] sm:$0xff]
                %1500 = vst [vmem:[%s1468 + $0xc0] sm:$0xff] %v1499
                %v1501 = vld [vmem:[%s1467 + $0x80] sm:$0xff]
                %1502 = vst [vmem:[%s1468 + $0xc8] sm:$0xff] %v1501
                %v1503 = vld [vmem:[%s1467 + $0x88] sm:$0xff]
                %1504 = vst [vmem:[%s1468 + $0xd0] sm:$0xff] %v1503
                %v1505 = vld [vmem:[%s1467 + $0x90] sm:$0xff]
                %1506 = vst [vmem:[%s1468 + $0x120] sm:$0xff] %v1505
                %v1507 = vld [vmem:[%s1467 + $0x98] sm:$0xff]
                %1508 = vst [vmem:[%s1468 + $0x128] sm:$0xff] %v1507
                %v1509 = vld [vmem:[%s1467 + $0xa0] sm:$0xff]
                %1510 = vst [vmem:[%s1468 + $0x130] sm:$0xff] %v1509
                %v1511 = vld [vmem:[%s1467 + $0xa8] sm:$0xff]
                %1512 = vst [vmem:[%s1468 + $0x138] sm:$0xff] %v1511
                %v1513 = vld [vmem:[%s1467 + $0xb0] sm:$0xff]
                %1514 = vst [vmem:[%s1468 + $0x140] sm:$0xff] %v1513
                %v1515 = vld [vmem:[%s1467 + $0xb8] sm:$0xff]
                %1516 = vst [vmem:[%s1468 + $0x148] sm:$0xff] %v1515
                %v1517 = vld [vmem:[%s1467 + $0xc0] sm:$0xff]
                %1518 = vst [vmem:[%s1468 + $0x150] sm:$0xff] %v1517
                %v1519 = vld [vmem:[%s1467 + $0xc8] sm:$0xff]
                %1520 = vst [vmem:[%s1468 + $0x158] sm:$0xff] %v1519
                %v1521 = vld [vmem:[%s1467 + $0xd0] sm:$0xff]
                %1522 = vst [vmem:[%s1468 + $0x160] sm:$0xff] %v1521
                %v1523 = vld [vmem:[%s1467 + $0xd8] sm:$0xff]
                %1524 = vst [vmem:[%s1468 + $0x1b0] sm:$0xff] %v1523
                %v1525 = vld [vmem:[%s1467 + $0xe0] sm:$0xff]
                %1526 = vst [vmem:[%s1468 + $0x1b8] sm:$0xff] %v1525
                %v1527 = vld [vmem:[%s1467 + $0xe8] sm:$0xff]
                %1528 = vst [vmem:[%s1468 + $0x1c0] sm:$0xff] %v1527
                %v1529 = vld [vmem:[%s1467 + $0xf0] sm:$0xff]
                %1530 = vst [vmem:[%s1468 + $0x1c8] sm:$0xff] %v1529
                %v1531 = vld [vmem:[%s1467 + $0xf8] sm:$0xff]
                %1532 = vst [vmem:[%s1468 + $0x1d0] sm:$0xff] %v1531
                %v1533 = vld [vmem:[%s1467 + $0x100] sm:$0xff]
                %1534 = vst [vmem:[%s1468 + $0x1d8] sm:$0xff] %v1533
                %v1535 = vld [vmem:[%s1467 + $0x108] sm:$0xff]
                %1536 = vst [vmem:[%s1468 + $0x1e0] sm:$0xff] %v1535
                %v1537 = vld [vmem:[%s1467 + $0x110] sm:$0xff]
                %1538 = vst [vmem:[%s1468 + $0x1e8] sm:$0xff] %v1537
                %v1539 = vld [vmem:[%s1467 + $0x118] sm:$0xff]
                %1540 = vst [vmem:[%s1468 + $0x1f0] sm:$0xff] %v1539
              $region72: #{encoder_forward.5} parent=66 // loop_footer
                %s1466 = sadd.s32 1, %s1462
              $region73: #{encoder_forward.5} parent=66 // loop_footer_branch
                %1461 = sbr.rel target = $region69
              $region74: #{encoder_forward.5} parent=66 // loop_exit
                _
            $region67: #{encoder_forward.5} parent=62 // pred_fallthru
              _
            // Predicated region
            $region75: #{encoder_forward.5} parent=62 // pred_check
              _
            $region76: #{encoder_forward.5} parent=62 // pred_check_branch
              %1542 = sbr.rel target = $region78
            $region77: #{encoder_forward.5} parent=62 // pred_region
              _
            $region78: #{encoder_forward.5} parent=62 // pred_fallthru
              _
          $region63: #{encoder_forward.5} parent=58 // pred_fallthru
            _
          %1543 = vnop
        $region59: #{encoder_forward.5} parent=50 // pred_fallthru
          _
      $region51: #{encoder_forward.5} parent=5 // pred_fallthru
        _
      %p1544 = scmp.le.s32.totalorder 2, %s9
      // Predicated region
      $region79: #{encoder_forward.5} parent=5 // pred_check
        %p1545 = pneg %p1544
      $region80: #{encoder_forward.5} parent=5 // pred_check_branch
        %1547 = sbr.rel (%p1545) target = $region82
      $region81: #{encoder_forward.5} parent=5 // pred_region
        %s1548 = ssub.s32 %s9, 2
        // Predicated region
        $region83: #{encoder_forward.5} parent=81 // pred_check
          %p1549 = pneg %p106
        $region84: #{encoder_forward.5} parent=81 // pred_check_branch
          %1551 = sbr.rel (%p1549) target = $region86
        $region85: #{encoder_forward.5} parent=81 // pred_region
          %s1552 = sand.u32 %s91, 1
          %s1553 = sand.u32 %s91, 1
          %s1554 = smul.addr %s1553, 288
          %s1555 = scalar_lea.vmem [#allocation3], %s1554
        $region86: #{encoder_forward.5} parent=81 // pred_fallthru
          _
      $region82: #{encoder_forward.5} parent=5 // pred_fallthru
        _
    $region6: #{encoder_forward.5} parent=1 // loop_footer
      %s13 = sadd.s32 1, %s9
    $region7: #{encoder_forward.5} parent=1 // loop_footer_branch
      %8 = sbr.rel target = $region3
    $region8: #{encoder_forward.5} parent=1 // loop_exit
      _

// kernel: encoder_forward.6
$region0: #{encoder_forward.6}
  #allocation0 [shape = 'u32[]', space=smem, size = 0x4, offset = 0x4, fixed_abs, tag = 'smem constant byte address 0x4 - core index']
  #allocation1 [shape = 'u32[144,128]{1,0:T(1,128)}', space=vmem, size = 0x12000, scoped, tag = 'internal scratch']
  %s0 = inlined_call_operand.vmem [shape: bf16[32,288], index: 0, kind: input, shape index: {}]
  %s1 = inlined_call_operand.vmem [shape: bf16[288,1152], index: 1, kind: input, shape index: {}]
  %s2 = inlined_call_operand.vmem [shape: f32[32,1], index: 2, kind: input, shape index: {}]
  %s3 = inlined_call_operand.vmem [shape: bf16[32,1152], index: 3, kind: output, shape index: {}]
  %s4 = sld [smem:[#allocation0]]
  $region93: #{encoder_forward.6} parent=0
    _
  %s6 = ssub.s32 1, %s4
  %s7 = scalar_select 0, %s6, %s4
  $region1: #{encoder_forward.6} parent=0
    #allocation2 [shape = 'u8[442368]{0}', space=vmem, size = 0x6c000, scoped, tag = 'input window, operand 1']
    #allocation3 [shape = 'u8[49152]{0}', space=vmem, size = 0xc000, scoped, tag = 'output window, operand 0']
    loop: start=0, step=1, limit=5
    $region2: #{encoder_forward.6} parent=1 // loop_pre_header
      _
    $region3: #{encoder_forward.6} parent=1 // loop_header
      %s9 = sphi 0, %s13
      %p10 = scmp.ge.s32.totalorder %s9, 5
      %s17 = sphi 0, %s17
      %s19 = sphi 0, %s17
      %s20 = sphi 0, %s19
      %s34 = sphi 0, %s20
      %s40 = sphi 0, %s42
      %s43 = sphi 0, %s40
      %s44 = sphi 0, %s43
      %s60 = sphi 0, %s44
      %s64 = sphi 0, %s64
      %s66 = sphi 0, %s64
      %s67 = sphi 0, %s66
      %s81 = sphi 0, %s67
      %s87 = sphi 0, %s89
      %s90 = sphi 0, %s87
      %s91 = sphi 0, %s90
      %s107 = sphi 0, %s91
    $region4: #{encoder_forward.6} parent=1 // loop_header_branch
      %12 = sbr.rel (%p10) target = $region8
    $region5: #{encoder_forward.6} parent=1 // loop_body
      %s14 = ssub.s32 %s9, 1
      %s15 = ssub.s32 %s9, 2
      %s16 = sadd.s32 %s9, 1
      %s18 = sadd.s32 %s17, 1
      %p21 = scmp.eq.s32.totalorder %s9, 2
      %p22 = scmp.ne.s32.totalorder %s17, %s19
      %p23 = scmp.eq.s32.totalorder %s9, 0
      %p24 = por %p22, %p23
      %p25 = scmp.ne.s32.totalorder %s17, %s19
      %p26 = scmp.eq.s32.totalorder %s14, 2
      %p27 = por %p25, %p26
      %p28 = scmp.ne.s32.totalorder %s19, %s20
      %p29 = scmp.eq.s32.totalorder %s14, 0
      %p30 = por %p28, %p29
      %p31 = scmp.ne.s32.totalorder %s19, %s20
      %p32 = scmp.eq.s32.totalorder %s15, 2
      %p33 = por %p31, %p32
      %p35 = scmp.ne.s32.totalorder %s20, %s34
      %p36 = scmp.eq.s32.totalorder %s15, 0
      %p37 = por %p35, %p36
      %s38 = ssub.s32 %s9, %s16
      %p39 = scmp.eq.s32.totalorder %s38, 0
      %s41 = sadd.s32 %s40, 1
      %s42 = scalar_select %p39, %s40, %s41
      %p45 = pneg %p39
      %p46 = scmp.eq.s32.totalorder %s9, 2
      %p47 = por %p45, %p46
      %p48 = scmp.ne.s32.totalorder %s40, %s43
      %p49 = scmp.eq.s32.totalorder %s9, 0
      %p50 = por %p48, %p49
      %p51 = scmp.ne.s32.totalorder %s40, %s43
      %p52 = scmp.eq.s32.totalorder %s14, 2
      %p53 = por %p51, %p52
      %p54 = scmp.ne.s32.totalorder %s43, %s44
      %p55 = scmp.eq.s32.totalorder %s14, 0
      %p56 = por %p54, %p55
      %p57 = scmp.ne.s32.totalorder %s43, %s44
      %p58 = scmp.eq.s32.totalorder %s15, 2
      %p59 = por %p57, %p58
      %p61 = scmp.ne.s32.totalorder %s44, %s60
      %p62 = scmp.eq.s32.totalorder %s15, 0
      %p63 = por %p61, %p62
      %s65 = sadd.s32 %s64, 1
      %p68 = scmp.eq.s32.totalorder %s9, 2
      %p69 = scmp.ne.s32.totalorder %s64, %s66
      %p70 = scmp.eq.s32.totalorder %s9, 0
      %p71 = por %p69, %p70
      %p72 = scmp.ne.s32.totalorder %s64, %s66
      %p73 = scmp.eq.s32.totalorder %s14, 2
      %p74 = por %p72, %p73
      %p75 = scmp.ne.s32.totalorder %s66, %s67
      %p76 = scmp.eq.s32.totalorder %s14, 0
      %p77 = por %p75, %p76
      %p78 = scmp.ne.s32.totalorder %s66, %s67
      %p79 = scmp.eq.s32.totalorder %s15, 2
      %p80 = por %p78, %p79
      %p82 = scmp.ne.s32.totalorder %s67, %s81
      %p83 = scmp.eq.s32.totalorder %s15, 0
      %p84 = por %p82, %p83
      %s85 = ssub.s32 %s9, %s16
      %p86 = scmp.eq.s32.totalorder %s85, 0
      %s88 = sadd.s32 %s87, 1
      %s89 = scalar_select %p86, %s87, %s88
      %p92 = pneg %p86
      %p93 = scmp.eq.s32.totalorder %s9, 2
      %p94 = por %p92, %p93
      %p95 = scmp.ne.s32.totalorder %s87, %s90
      %p96 = scmp.eq.s32.totalorder %s9, 0
      %p97 = por %p95, %p96
      %p98 = scmp.ne.s32.totalorder %s87, %s90
      %p99 = scmp.eq.s32.totalorder %s14, 2
      %p100 = por %p98, %p99
      %p101 = scmp.ne.s32.totalorder %s90, %s91
      %p102 = scmp.eq.s32.totalorder %s14, 0
      %p103 = por %p101, %p102
      %p104 = scmp.ne.s32.totalorder %s90, %s91
      %p105 = scmp.eq.s32.totalorder %s15, 2
      %p106 = por %p104, %p105
      %p108 = scmp.ne.s32.totalorder %s91, %s107
      %p109 = scmp.eq.s32.totalorder %s15, 0
      %p110 = por %p108, %p109
      %p111 = scmp.le.s32.totalorder 1, %s9
      %p112 = scmp.lt.s32.totalorder %s9, 4
      %p113 = pnand %p111, %p112
      %p114 = pneg %p113
      // Predicated region
      $region9: #{encoder_forward.6} parent=5 // pred_check
        _
      $region10: #{encoder_forward.6} parent=5 // pred_check_branch
        %116 = sbr.rel (%p113) target = $region12
      $region11: #{encoder_forward.6} parent=5 // pred_region
        %s117 = ssub.s32 %s9, 1
        // Predicated region
        $region13: #{encoder_forward.6} parent=11 // pred_check
          %p118 = pneg %p30
        $region14: #{encoder_forward.6} parent=11 // pred_check_branch
          %120 = sbr.rel (%p118) target = $region16
        $region15: #{encoder_forward.6} parent=11 // pred_region
          _
        $region16: #{encoder_forward.6} parent=11 // pred_fallthru
          _
        // Predicated region
        $region17: #{encoder_forward.6} parent=11 // pred_check
          %p121 = pneg %p77
        $region18: #{encoder_forward.6} parent=11 // pred_check_branch
          %123 = sbr.rel (%p121) target = $region20
        $region19: #{encoder_forward.6} parent=11 // pred_region
          _
        $region20: #{encoder_forward.6} parent=11 // pred_fallthru
          _
      $region12: #{encoder_forward.6} parent=5 // pred_fallthru
        _
      %p124 = scmp.lt.s32.totalorder %s9, 3
      // Predicated region
      $region21: #{encoder_forward.6} parent=5 // pred_check
        %p125 = pneg %p124
      $region22: #{encoder_forward.6} parent=5 // pred_check_branch
        %127 = sbr.rel (%p125) target = $region24
      $region23: #{encoder_forward.6} parent=5 // pred_region
        // Predicated region
        $region25: #{encoder_forward.6} parent=23 // pred_check
          %p128 = pneg %p50
        $region26: #{encoder_forward.6} parent=23 // pred_check_branch
          %130 = sbr.rel (%p128) target = $region28
        $region27: #{encoder_forward.6} parent=23 // pred_region
          %s131 = sand.u32 %s40, 1
          %s132 = sand.u32 %s40, 1
          %s133 = smul.addr %s132, 432
          %s134 = scalar_lea.vmem [#allocation2], %s133
          %s135 = smul.u32 3, %s9
          %s136 = smul.addr %s135, 4
          %s137 = scalar_lea.vmem %s1, %s136
          // Predicated region
          $region29: #{encoder_forward.6} parent=27 // pred_check
            _
          $region30: #{encoder_forward.6} parent=27 // pred_check_branch
            %139 = sbr.rel (0) target = $region32
          $region31: #{encoder_forward.6} parent=27 // pred_region
            // Predicated region
            $region33: #{encoder_forward.6} parent=31 // pred_check
              _
            $region34: #{encoder_forward.6} parent=31 // pred_check_branch
              %141 = sbr.rel (0) target = $region36
            $region35: #{encoder_forward.6} parent=31 // pred_region
              %s142 = scalar_lea.vmem %s137, 8
              %s143 = scalar_lea.vmem %s134, 8 [#allocation2]
              loop: start=0, step=1, limit=1
              $region37: #{encoder_forward.6} parent=35 // loop_pre_header
                _
              $region38: #{encoder_forward.6} parent=35 // loop_header
                %s145 = sphi 0, %s149
                %p146 = scmp.ge.s32.totalorder %s145, 1
                %s150 = sphi %s137, %s137
                %s151 = sphi %s134, %s134
              $region39: #{encoder_forward.6} parent=35 // loop_header_branch
                %148 = sbr.rel (%p146) target = $region43
              $region40: #{encoder_forward.6} parent=35 // loop_body
                %v152 = vld [vmem:[%s150] sm:$0xff]
                %153 = vst [vmem:[%s151] sm:$0xff] %v152
                %v154 = vld [vmem:[%s150 + $0x24] sm:$0xff]
                %155 = vst [vmem:[%s151 + $0xc] sm:$0xff] %v154
                %v156 = vld [vmem:[%s150 + $0x48] sm:$0xff]
                %157 = vst [vmem:[%s151 + $0x18] sm:$0xff] %v156
                %v158 = vld [vmem:[%s150 + $0x6c] sm:$0xff]
                %159 = vst [vmem:[%s151 + $0x24] sm:$0xff] %v158
                %v160 = vld [vmem:[%s150 + $0x90] sm:$0xff]
                %161 = vst [vmem:[%s151 + $0x30] sm:$0xff] %v160
                %v162 = vld [vmem:[%s150 + $0xb4] sm:$0xff]
                %163 = vst [vmem:[%s151 + $0x3c] sm:$0xff] %v162
                %v164 = vld [vmem:[%s150 + $0xd8] sm:$0xff]
                %165 = vst [vmem:[%s151 + $0x48] sm:$0xff] %v164
                %v166 = vld [vmem:[%s150 + $0xfc] sm:$0xff]
                %167 = vst [vmem:[%s151 + $0x54] sm:$0xff] %v166
                %v168 = vld [vmem:[%s150 + $0x120] sm:$0xff]
                %169 = vst [vmem:[%s151 + $0x60] sm:$0xff] %v168
                %v170 = vld [vmem:[%s150 + $0x144] sm:$0xff]
                %171 = vst [vmem:[%s151 + $0x6c] sm:$0xff] %v170
                %v172 = vld [vmem:[%s150 + $0x168] sm:$0xff]
                %173 = vst [vmem:[%s151 + $0x78] sm:$0xff] %v172
                %v174 = vld [vmem:[%s150 + $0x18c] sm:$0xff]
                %175 = vst [vmem:[%s151 + $0x84] sm:$0xff] %v174
                %v176 = vld [vmem:[%s150 + $0x1b0] sm:$0xff]
                %177 = vst [vmem:[%s151 + $0x90] sm:$0xff] %v176
                %v178 = vld [vmem:[%s150 + $0x1d4] sm:$0xff]
                %179 = vst [vmem:[%s151 + $0x9c] sm:$0xff] %v178
                %v180 = vld [vmem:[%s150 + $0x1f8] sm:$0xff]
                %181 = vst [vmem:[%s151 + $0xa8] sm:$0xff] %v180
                %v182 = vld [vmem:[%s150 + $0x21c] sm:$0xff]
                %183 = vst [vmem:[%s151 + $0xb4] sm:$0xff] %v182
                %v184 = vld [vmem:[%s150 + $0x240] sm:$0xff]
                %185 = vst [vmem:[%s151 + $0xc0] sm:$0xff] %v184
                %v186 = vld [vmem:[%s150 + $0x264] sm:$0xff]
                %187 = vst [vmem:[%s151 + $0xcc] sm:$0xff] %v186
                %v188 = vld [vmem:[%s150 + $0x288] sm:$0xff]
                %189 = vst [vmem:[%s151 + $0xd8] sm:$0xff] %v188
                %v190 = vld [vmem:[%s150 + $0x2ac] sm:$0xff]
                %191 = vst [vmem:[%s151 + $0xe4] sm:$0xff] %v190
                %v192 = vld [vmem:[%s150 + $0x2d0] sm:$0xff]
                %193 = vst [vmem:[%s151 + $0xf0] sm:$0xff] %v192
                %v194 = vld [vmem:[%s150 + $0x2f4] sm:$0xff]
                %195 = vst [vmem:[%s151 + $0xfc] sm:$0xff] %v194
                %v196 = vld [vmem:[%s150 + $0x318] sm:$0xff]
                %197 = vst [vmem:[%s151 + $0x108] sm:$0xff] %v196
                %v198 = vld [vmem:[%s150 + $0x33c] sm:$0xff]
                %199 = vst [vmem:[%s151 + $0x114] sm:$0xff] %v198
                %v200 = vld [vmem:[%s150 + $0x360] sm:$0xff]
                %201 = vst [vmem:[%s151 + $0x120] sm:$0xff] %v200
                %v202 = vld [vmem:[%s150 + $0x384] sm:$0xff]
                %203 = vst [vmem:[%s151 + $0x12c] sm:$0xff] %v202
                %v204 = vld [vmem:[%s150 + $0x3a8] sm:$0xff]
                %205 = vst [vmem:[%s151 + $0x138] sm:$0xff] %v204
                %v206 = vld [vmem:[%s150 + $0x3cc] sm:$0xff]
                %207 = vst [vmem:[%s151 + $0x144] sm:$0xff] %v206
                %v208 = vld [vmem:[%s150 + $0x3f0] sm:$0xff]
                %209 = vst [vmem:[%s151 + $0x150] sm:$0xff] %v208
                %v210 = vld [vmem:[%s150 + $0x414] sm:$0xff]
                %211 = vst [vmem:[%s151 + $0x15c] sm:$0xff] %v210
                %v212 = vld [vmem:[%s150 + $0x438] sm:$0xff]
                %213 = vst [vmem:[%s151 + $0x168] sm:$0xff] %v212
                %v214 = vld [vmem:[%s150 + $0x45c] sm:$0xff]
                %215 = vst [vmem:[%s151 + $0x174] sm:$0xff] %v214
                %v216 = vld [vmem:[%s150 + $0x480] sm:$0xff]
                %217 = vst [vmem:[%s151 + $0x180] sm:$0xff] %v216
                %v218 = vld [vmem:[%s150 + $0x4a4] sm:$0xff]
                %219 = vst [vmem:[%s151 + $0x18c] sm:$0xff] %v218
                %v220 = vld [vmem:[%s150 + $0x4c8] sm:$0xff]
                %221 = vst [vmem:[%s151 + $0x198] sm:$0xff] %v220
                %v222 = vld [vmem:[%s150 + $0x4ec] sm:$0xff]
                %223 = vst [vmem:[%s151 + $0x1a4] sm:$0xff] %v222
              $region41: #{encoder_forward.6} parent=35 // loop_footer
                %s149 = sadd.s32 1, %s145
              $region42: #{encoder_forward.6} parent=35 // loop_footer_branch
                %144 = sbr.rel target = $region38
              $region43: #{encoder_forward.6} parent=35 // loop_exit
                _
              %s225 = ssub.s32 16, 1
              loop: start=0, step=1, limit=1
              $region44: #{encoder_forward.6} parent=35 // loop_pre_header
                _
              $region45: #{encoder_forward.6} parent=35 // loop_header
                %s227 = sphi 0, %s231
                %p228 = scmp.ge.s32.totalorder %s227, 1
                %s232 = sphi %s142, %s142
                %s233 = sphi %s143, %s143
              $region46: #{encoder_forward.6} parent=35 // loop_header_branch
                %230 = sbr.rel (%p228) target = $region50
              $region47: #{encoder_forward.6} parent=35 // loop_body
                %v234 = vld [vmem:[%s232] sm:%s225]
                %235 = vst [vmem:[%s233] sm:%s225] %v234
                %v236 = vld [vmem:[%s232 + $0x24] sm:%s225]
                %237 = vst [vmem:[%s233 + $0xc] sm:%s225] %v236
                %v238 = vld [vmem:[%s232 + $0x48] sm:%s225]
                %239 = vst [vmem:[%s233 + $0x18] sm:%s225] %v238
                %v240 = vld [vmem:[%s232 + $0x6c] sm:%s225]
                %241 = vst [vmem:[%s233 + $0x24] sm:%s225] %v240
                %v242 = vld [vmem:[%s232 + $0x90] sm:%s225]
                %243 = vst [vmem:[%s233 + $0x30] sm:%s225] %v242
                %v244 = vld [vmem:[%s232 + $0xb4] sm:%s225]
                %245 = vst [vmem:[%s233 + $0x3c] sm:%s225] %v244
                %v246 = vld [vmem:[%s232 + $0xd8] sm:%s225]
                %247 = vst [vmem:[%s233 + $0x48] sm:%s225] %v246
                %v248 = vld [vmem:[%s232 + $0xfc] sm:%s225]
                %249 = vst [vmem:[%s233 + $0x54] sm:%s225] %v248
                %v250 = vld [vmem:[%s232 + $0x120] sm:%s225]
                %251 = vst [vmem:[%s233 + $0x60] sm:%s225] %v250
                %v252 = vld [vmem:[%s232 + $0x144] sm:%s225]
                %253 = vst [vmem:[%s233 + $0x6c] sm:%s225] %v252
                %v254 = vld [vmem:[%s232 + $0x168] sm:%s225]
                %255 = vst [vmem:[%s233 + $0x78] sm:%s225] %v254
                %v256 = vld [vmem:[%s232 + $0x18c] sm:%s225]
                %257 = vst [vmem:[%s233 + $0x84] sm:%s225] %v256
                %v258 = vld [vmem:[%s232 + $0x1b0] sm:%s225]
                %259 = vst [vmem:[%s233 + $0x90] sm:%s225] %v258
                %v260 = vld [vmem:[%s232 + $0x1d4] sm:%s225]
                %261 = vst [vmem:[%s233 + $0x9c] sm:%s225] %v260
                %v262 = vld [vmem:[%s232 + $0x1f8] sm:%s225]
                %263 = vst [vmem:[%s233 + $0xa8] sm:%s225] %v262
                %v264 = vld [vmem:[%s232 + $0x21c] sm:%s225]
                %265 = vst [vmem:[%s233 + $0xb4] sm:%s225] %v264
                %v266 = vld [vmem:[%s232 + $0x240] sm:%s225]
                %267 = vst [vmem:[%s233 + $0xc0] sm:%s225] %v266
                %v268 = vld [vmem:[%s232 + $0x264] sm:%s225]
                %269 = vst [vmem:[%s233 + $0xcc] sm:%s225] %v268
                %v270 = vld [vmem:[%s232 + $0x288] sm:%s225]
                %271 = vst [vmem:[%s233 + $0xd8] sm:%s225] %v270
                %v272 = vld [vmem:[%s232 + $0x2ac] sm:%s225]
                %273 = vst [vmem:[%s233 + $0xe4] sm:%s225] %v272
                %v274 = vld [vmem:[%s232 + $0x2d0] sm:%s225]
                %275 = vst [vmem:[%s233 + $0xf0] sm:%s225] %v274
                %v276 = vld [vmem:[%s232 + $0x2f4] sm:%s225]
                %277 = vst [vmem:[%s233 + $0xfc] sm:%s225] %v276
                %v278 = vld [vmem:[%s232 + $0x318] sm:%s225]
                %279 = vst [vmem:[%s233 + $0x108] sm:%s225] %v278
                %v280 = vld [vmem:[%s232 + $0x33c] sm:%s225]
                %281 = vst [vmem:[%s233 + $0x114] sm:%s225] %v280
                %v282 = vld [vmem:[%s232 + $0x360] sm:%s225]
                %283 = vst [vmem:[%s233 + $0x120] sm:%s225] %v282
                %v284 = vld [vmem:[%s232 + $0x384] sm:%s225]
                %285 = vst [vmem:[%s233 + $0x12c] sm:%s225] %v284
                %v286 = vld [vmem:[%s232 + $0x3a8] sm:%s225]
                %287 = vst [vmem:[%s233 + $0x138] sm:%s225] %v286
                %v288 = vld [vmem:[%s232 + $0x3cc] sm:%s225]
                %289 = vst [vmem:[%s233 + $0x144] sm:%s225] %v288
                %v290 = vld [vmem:[%s232 + $0x3f0] sm:%s225]
                %291 = vst [vmem:[%s233 + $0x150] sm:%s225] %v290
                %v292 = vld [vmem:[%s232 + $0x414] sm:%s225]
                %293 = vst [vmem:[%s233 + $0x15c] sm:%s225] %v292
                %v294 = vld [vmem:[%s232 + $0x438] sm:%s225]
                %295 = vst [vmem:[%s233 + $0x168] sm:%s225] %v294
                %v296 = vld [vmem:[%s232 + $0x45c] sm:%s225]
                %297 = vst [vmem:[%s233 + $0x174] sm:%s225] %v296
                %v298 = vld [vmem:[%s232 + $0x480] sm:%s225]
                %299 = vst [vmem:[%s233 + $0x180] sm:%s225] %v298
                %v300 = vld [vmem:[%s232 + $0x4a4] sm:%s225]
                %301 = vst [vmem:[%s233 + $0x18c] sm:%s225] %v300
                %v302 = vld [vmem:[%s232 + $0x4c8] sm:%s225]
                %303 = vst [vmem:[%s233 + $0x198] sm:%s225] %v302
                %v304 = vld [vmem:[%s232 + $0x4ec] sm:%s225]
                %305 = vst [vmem:[%s233 + $0x1a4] sm:%s225] %v304
              $region48: #{encoder_forward.6} parent=35 // loop_footer
                %s231 = sadd.s32 1, %s227
              $region49: #{encoder_forward.6} parent=35 // loop_footer_branch
                %226 = sbr.rel target = $region45
              $region50: #{encoder_forward.6} parent=35 // loop_exit
                _
            $region36: #{encoder_forward.6} parent=31 // pred_fallthru
              _
          $region32: #{encoder_forward.6} parent=27 // pred_fallthru
            _
          %306 = vnop
        $region28: #{encoder_forward.6} parent=23 // pred_fallthru
          _
      $region24: #{encoder_forward.6} parent=5 // pred_fallthru
        _
      %p307 = scmp.le.s32.totalorder 1, %s9
      %p308 = scmp.lt.s32.totalorder %s9, 4
      %p309 = pnand %p307, %p308
      %p310 = pneg %p309
      // Predicated region
      $region51: #{encoder_forward.6} parent=5 // pred_check
        _
      $region52: #{encoder_forward.6} parent=5 // pred_check_branch
        %312 = sbr.rel (%p309) target = $region54
      $region53: #{encoder_forward.6} parent=5 // pred_region
        %s313 = ssub.s32 %s9, 1
        %s314 = sand.u32 %s43, 1
        %s315 = sand.u32 %s43, 1
        %s316 = smul.addr %s315, 432
        %s317 = scalar_lea.vmem [#allocation2], %s316
        // Predicated region
        $region55: #{encoder_forward.6} parent=53 // pred_check
          %p318 = pneg %p56
        $region56: #{encoder_forward.6} parent=53 // pred_check_branch
          %320 = sbr.rel (%p318) target = $region58
        $region57: #{encoder_forward.6} parent=53 // pred_region
          _
        $region58: #{encoder_forward.6} parent=53 // pred_fallthru
          _
        %p321 = pneg %p30
        %p322 = pneg %p27
        %s323 = sand.u32 %s43, 1
        %s324 = sand.u32 %s43, 1
        %s325 = smul.addr %s324, 432
        %s326 = scalar_lea.vmem [#allocation2], %s325
        %p327 = pneg %p56
        %p328 = pneg %p53
        %p329 = pneg %p77
        %p330 = pneg %p74
        %p331 = pneg %p103
        %p332 = pneg %p100
        %s333 = sand.u32 %s90, 1
        %s334 = sand.u32 %s90, 1
        %s335 = smul.addr %s334, 48
        %s336 = scalar_lea.vmem [#allocation3], %s335
        %s337 = smul.u32 3, %s14
        %s338 = smul.u32 3, %s14
        %v340 = vld [vmem:[%s0] sm:$0xff]
        %v341 = vld [vmem:[%s0 + $0x8] sm:$0xf]
        %v342 = vld [vmem:[%s0 + $0xc] sm:$0xff]
        %v343 = vld [vmem:[%s0 + $0x14] sm:$0xf]
        %v344 = vld [vmem:[%s0 + $0x18] sm:$0xff]
        %v345 = vld [vmem:[%s0 + $0x20] sm:$0xf]
        %v346 = vld [vmem:[%s0 + $0x24] sm:$0xff]
        %v347 = vld [vmem:[%s0 + $0x2c] sm:$0xf]
        %v348 = vld [vmem:[%s317] sm:$0xff]
        %v349 = vld [vmem:[%s317 + $0x8] sm:$0xf]
        %v350 = vld [vmem:[%s317 + $0xc] sm:$0xff]
        %v351 = vld [vmem:[%s317 + $0x14] sm:$0xf]
        %v352 = vld [vmem:[%s317 + $0x18] sm:$0xff]
        %v353 = vld [vmem:[%s317 + $0x20] sm:$0xf]
        %v354 = vld [vmem:[%s317 + $0x24] sm:$0xff]
        %v355 = vld [vmem:[%s317 + $0x2c] sm:$0xf]
        %v356 = vld [vmem:[%s317 + $0x30] sm:$0xff]
        %v357 = vld [vmem:[%s317 + $0x38] sm:$0xf]
        %v358 = vld [vmem:[%s317 + $0x3c] sm:$0xff]
        %v359 = vld [vmem:[%s317 + $0x44] sm:$0xf]
        %v360 = vld [vmem:[%s317 + $0x48] sm:$0xff]
        %v361 = vld [vmem:[%s317 + $0x50] sm:$0xf]
        %v362 = vld [vmem:[%s317 + $0x54] sm:$0xff]
        %v363 = vld [vmem:[%s317 + $0x5c] sm:$0xf]
        %v364 = vld [vmem:[%s317 + $0x60] sm:$0xff]
        %v365 = vld [vmem:[%s317 + $0x68] sm:$0xf]
        %v366 = vld [vmem:[%s317 + $0x6c] sm:$0xff]
        %v367 = vld [vmem:[%s317 + $0x74] sm:$0xf]
        %v368 = vld [vmem:[%s317 + $0x78] sm:$0xff]
        %v369 = vld [vmem:[%s317 + $0x80] sm:$0xf]
        %v370 = vld [vmem:[%s317 + $0x84] sm:$0xff]
        %v371 = vld [vmem:[%s317 + $0x8c] sm:$0xf]
        %v372 = vld [vmem:[%s317 + $0x90] sm:$0xff]
        %v373 = vld [vmem:[%s317 + $0x98] sm:$0xf]
        %v374 = vld [vmem:[%s317 + $0x9c] sm:$0xff]
        %v375 = vld [vmem:[%s317 + $0xa4] sm:$0xf]
        %v376 = vld [vmem:[%s317 + $0xa8] sm:$0xff]
        %v377 = vld [vmem:[%s317 + $0xb0] sm:$0xf]
        %v378 = vld [vmem:[%s317 + $0xb4] sm:$0xff]
        %v379 = vld [vmem:[%s317 + $0xbc] sm:$0xf]
        %v380 = vld [vmem:[%s317 + $0xc0] sm:$0xff]
        %v381 = vld [vmem:[%s317 + $0xc8] sm:$0xf]
        %v382 = vld [vmem:[%s317 + $0xcc] sm:$0xff]
        %v383 = vld [vmem:[%s317 + $0xd4] sm:$0xf]
        %v384 = vld [vmem:[%s317 + $0xd8] sm:$0xff]
        %v385 = vld [vmem:[%s317 + $0xe0] sm:$0xf]
        %v386 = vld [vmem:[%s317 + $0xe4] sm:$0xff]
        %v387 = vld [vmem:[%s317 + $0xec] sm:$0xf]
        %v388 = vld [vmem:[%s317 + $0xf0] sm:$0xff]
        %v389 = vld [vmem:[%s317 + $0xf8] sm:$0xf]
        %v390 = vld [vmem:[%s317 + $0xfc] sm:$0xff]
        %v391 = vld [vmem:[%s317 + $0x104] sm:$0xf]
        %v392 = vld [vmem:[%s317 + $0x108] sm:$0xff]
        %v393 = vld [vmem:[%s317 + $0x110] sm:$0xf]
        %v394 = vld [vmem:[%s317 + $0x114] sm:$0xff]
        %v395 = vld [vmem:[%s317 + $0x11c] sm:$0xf]
        %v396 = vld [vmem:[%s317 + $0x120] sm:$0xff]
        %v397 = vld [vmem:[%s317 + $0x128] sm:$0xf]
        %v398 = vld [vmem:[%s317 + $0x12c] sm:$0xff]
        %v399 = vld [vmem:[%s317 + $0x134] sm:$0xf]
        %v400 = vld [vmem:[%s317 + $0x138] sm:$0xff]
        %v401 = vld [vmem:[%s317 + $0x140] sm:$0xf]
        %v402 = vld [vmem:[%s317 + $0x144] sm:$0xff]
        %v403 = vld [vmem:[%s317 + $0x14c] sm:$0xf]
        %v404 = vld [vmem:[%s317 + $0x150] sm:$0xff]
        %v405 = vld [vmem:[%s317 + $0x158] sm:$0xf]
        %v406 = vld [vmem:[%s317 + $0x15c] sm:$0xff]
        %v407 = vld [vmem:[%s317 + $0x164] sm:$0xf]
        %v408 = vld [vmem:[%s317 + $0x168] sm:$0xff]
        %v409 = vld [vmem:[%s317 + $0x170] sm:$0xf]
        %v410 = vld [vmem:[%s317 + $0x174] sm:$0xff]
        %v411 = vld [vmem:[%s317 + $0x17c] sm:$0xf]
        %v412 = vld [vmem:[%s317 + $0x180] sm:$0xff]
        %v413 = vld [vmem:[%s317 + $0x188] sm:$0xf]
        %v414 = vld [vmem:[%s317 + $0x18c] sm:$0xff]
        %v415 = vld [vmem:[%s317 + $0x194] sm:$0xf]
        %v416 = vld [vmem:[%s317 + $0x198] sm:$0xff]
        %v417 = vld [vmem:[%s317 + $0x1a0] sm:$0xf]
        %v418 = vld [vmem:[%s317 + $0x1a4] sm:$0xff]
        %v419 = vld [vmem:[%s317 + $0x1ac] sm:$0xf]
        %v420 = vld [vmem:[%s2] sm:$0xff]
        %v421 = vld [vmem:[%s2 + $0x8] sm:$0xff]
        %v422 = vld [vmem:[%s2 + $0x10] sm:$0xff]
        %v423 = vld [vmem:[%s2 + $0x18] sm:$0xff]
        %425 = vset.pattern.permute.xlu0 0
        %426 = vperm.xlu0 %425, %v420
        %v427 = vpop.permute.xlu0 %426
        %430 = vset.pattern.permute.xlu0 0
        %431 = vperm.xlu0 %430, %v421
        %v432 = vpop.permute.xlu0 %431
        %435 = vset.pattern.permute.xlu0 0
        %436 = vperm.xlu0 %435, %v422
        %v437 = vpop.permute.xlu0 %436
        %440 = vset.pattern.permute.xlu0 0
        %441 = vperm.xlu0 %440, %v423
        %v442 = vpop.permute.xlu0 %441
        %v452 = vunpack.c.l.b16 %v340
        %v453 = vunpack.c.h.b16 %v340
        %v454 = vunpack.c.l.b16 %v341
        %v455 = vunpack.c.l.b16 %v342
        %v456 = vunpack.c.h.b16 %v342
        %v457 = vunpack.c.l.b16 %v343
        %v458 = vunpack.c.l.b16 %v344
        %v459 = vunpack.c.h.b16 %v344
        %v460 = vunpack.c.l.b16 %v345
        %v461 = vunpack.c.l.b16 %v346
        %v462 = vunpack.c.h.b16 %v346
        %v463 = vunpack.c.l.b16 %v347
        %v464 = vpack.c.b16 %v455, %v452
        %v465 = vpack.c.b16 %v456, %v453
        %v466 = vpack.c.b16 %v457, %v454
        %v467 = vpack.c.b16 %v461, %v458
        %v468 = vpack.c.b16 %v462, %v459
        %v469 = vpack.c.b16 %v463, %v460
        %v546 = vunpack.c.l.b16 %v348
        %v547 = vunpack.c.h.b16 %v348
        %v548 = vunpack.c.l.b16 %v349
        %v549 = vunpack.c.l.b16 %v350
        %v550 = vunpack.c.h.b16 %v350
        %v551 = vunpack.c.l.b16 %v351
        %v552 = vunpack.c.l.b16 %v352
        %v553 = vunpack.c.h.b16 %v352
        %v554 = vunpack.c.l.b16 %v353
        %v555 = vunpack.c.l.b16 %v354
        %v556 = vunpack.c.h.b16 %v354
        %v557 = vunpack.c.l.b16 %v355
        %v558 = vunpack.c.l.b16 %v356
        %v559 = vunpack.c.h.b16 %v356
        %v560 = vunpack.c.l.b16 %v357
        %v561 = vunpack.c.l.b16 %v358
        %v562 = vunpack.c.h.b16 %v358
        %v563 = vunpack.c.l.b16 %v359
        %v564 = vunpack.c.l.b16 %v360
        %v565 = vunpack.c.h.b16 %v360
        %v566 = vunpack.c.l.b16 %v361
        %v567 = vunpack.c.l.b16 %v362
        %v568 = vunpack.c.h.b16 %v362
        %v569 = vunpack.c.l.b16 %v363
        %v570 = vunpack.c.l.b16 %v364
        %v571 = vunpack.c.h.b16 %v364
        %v572 = vunpack.c.l.b16 %v365
        %v573 = vunpack.c.l.b16 %v366
        %v574 = vunpack.c.h.b16 %v366
        %v575 = vunpack.c.l.b16 %v367
        %v576 = vunpack.c.l.b16 %v368
        %v577 = vunpack.c.h.b16 %v368
        %v578 = vunpack.c.l.b16 %v369
        %v579 = vunpack.c.l.b16 %v370
        %v580 = vunpack.c.h.b16 %v370
        %v581 = vunpack.c.l.b16 %v371
        %v582 = vunpack.c.l.b16 %v372
        %v583 = vunpack.c.h.b16 %v372
        %v584 = vunpack.c.l.b16 %v373
        %v585 = vunpack.c.l.b16 %v374
        %v586 = vunpack.c.h.b16 %v374
        %v587 = vunpack.c.l.b16 %v375
        %v588 = vunpack.c.l.b16 %v376
        %v589 = vunpack.c.h.b16 %v376
        %v590 = vunpack.c.l.b16 %v377
        %v591 = vunpack.c.l.b16 %v378
        %v592 = vunpack.c.h.b16 %v378
        %v593 = vunpack.c.l.b16 %v379
        %v594 = vunpack.c.l.b16 %v380
        %v595 = vunpack.c.h.b16 %v380
        %v596 = vunpack.c.l.b16 %v381
        %v597 = vunpack.c.l.b16 %v382
        %v598 = vunpack.c.h.b16 %v382
        %v599 = vunpack.c.l.b16 %v383
        %v600 = vunpack.c.l.b16 %v384
        %v601 = vunpack.c.h.b16 %v384
        %v602 = vunpack.c.l.b16 %v385
        %v603 = vunpack.c.l.b16 %v386
        %v604 = vunpack.c.h.b16 %v386
        %v605 = vunpack.c.l.b16 %v387
        %v606 = vunpack.c.l.b16 %v388
        %v607 = vunpack.c.h.b16 %v388
        %v608 = vunpack.c.l.b16 %v389
        %v609 = vunpack.c.l.b16 %v390
        %v610 = vunpack.c.h.b16 %v390
        %v611 = vunpack.c.l.b16 %v391
        %v612 = vunpack.c.l.b16 %v392
        %v613 = vunpack.c.h.b16 %v392
        %v614 = vunpack.c.l.b16 %v393
        %v615 = vunpack.c.l.b16 %v394
        %v616 = vunpack.c.h.b16 %v394
        %v617 = vunpack.c.l.b16 %v395
        %v618 = vunpack.c.l.b16 %v396
        %v619 = vunpack.c.h.b16 %v396
        %v620 = vunpack.c.l.b16 %v397
        %v621 = vunpack.c.l.b16 %v398
        %v622 = vunpack.c.h.b16 %v398
        %v623 = vunpack.c.l.b16 %v399
        %v624 = vunpack.c.l.b16 %v400
        %v625 = vunpack.c.h.b16 %v400
        %v626 = vunpack.c.l.b16 %v401
        %v627 = vunpack.c.l.b16 %v402
        %v628 = vunpack.c.h.b16 %v402
        %v629 = vunpack.c.l.b16 %v403
        %v630 = vunpack.c.l.b16 %v404
        %v631 = vunpack.c.h.b16 %v404
        %v632 = vunpack.c.l.b16 %v405
        %v633 = vunpack.c.l.b16 %v406
        %v634 = vunpack.c.h.b16 %v406
        %v635 = vunpack.c.l.b16 %v407
        %v636 = vunpack.c.l.b16 %v408
        %v637 = vunpack.c.h.b16 %v408
        %v638 = vunpack.c.l.b16 %v409
        %v639 = vunpack.c.l.b16 %v410
        %v640 = vunpack.c.h.b16 %v410
        %v641 = vunpack.c.l.b16 %v411
        %v642 = vunpack.c.l.b16 %v412
        %v643 = vunpack.c.h.b16 %v412
        %v644 = vunpack.c.l.b16 %v413
        %v645 = vunpack.c.l.b16 %v414
        %v646 = vunpack.c.h.b16 %v414
        %v647 = vunpack.c.l.b16 %v415
        %v648 = vunpack.c.l.b16 %v416
        %v649 = vunpack.c.h.b16 %v416
        %v650 = vunpack.c.l.b16 %v417
        %v651 = vunpack.c.l.b16 %v418
        %v652 = vunpack.c.h.b16 %v418
        %v653 = vunpack.c.l.b16 %v419
        %v654 = vpack.c.b16 %v549, %v546
        %v655 = vpack.c.b16 %v550, %v547
        %v656 = vpack.c.b16 %v551, %v548
        %v657 = vpack.c.b16 %v555, %v552
        %v658 = vpack.c.b16 %v556, %v553
        %v659 = vpack.c.b16 %v557, %v554
        %v660 = vpack.c.b16 %v561, %v558
        %v661 = vpack.c.b16 %v562, %v559
        %v662 = vpack.c.b16 %v563, %v560
        %v663 = vpack.c.b16 %v567, %v564
        %v664 = vpack.c.b16 %v568, %v565
        %v665 = vpack.c.b16 %v569, %v566
        %v666 = vpack.c.b16 %v573, %v570
        %v667 = vpack.c.b16 %v574, %v571
        %v668 = vpack.c.b16 %v575, %v572
        %v669 = vpack.c.b16 %v579, %v576
        %v670 = vpack.c.b16 %v580, %v577
        %v671 = vpack.c.b16 %v581, %v578
        %v672 = vpack.c.b16 %v585, %v582
        %v673 = vpack.c.b16 %v586, %v583
        %v674 = vpack.c.b16 %v587, %v584
        %v675 = vpack.c.b16 %v591, %v588
        %v676 = vpack.c.b16 %v592, %v589
        %v677 = vpack.c.b16 %v593, %v590
        %v678 = vpack.c.b16 %v597, %v594
        %v679 = vpack.c.b16 %v598, %v595
        %v680 = vpack.c.b16 %v599, %v596
        %v681 = vpack.c.b16 %v603, %v600
        %v682 = vpack.c.b16 %v604, %v601
        %v683 = vpack.c.b16 %v605, %v602
        %v684 = vpack.c.b16 %v609, %v606
        %v685 = vpack.c.b16 %v610, %v607
        %v686 = vpack.c.b16 %v611, %v608
        %v687 = vpack.c.b16 %v615, %v612
        %v688 = vpack.c.b16 %v616, %v613
        %v689 = vpack.c.b16 %v617, %v614
        %v690 = vpack.c.b16 %v621, %v618
        %v691 = vpack.c.b16 %v622, %v619
        %v692 = vpack.c.b16 %v623, %v620
        %v693 = vpack.c.b16 %v627, %v624
        %v694 = vpack.c.b16 %v628, %v625
        %v695 = vpack.c.b16 %v629, %v626
        %v696 = vpack.c.b16 %v633, %v630
        %v697 = vpack.c.b16 %v634, %v631
        %v698 = vpack.c.b16 %v635, %v632
        %v699 = vpack.c.b16 %v639, %v636
        %v700 = vpack.c.b16 %v640, %v637
        %v701 = vpack.c.b16 %v641, %v638
        %v702 = vpack.c.b16 %v645, %v642
        %v703 = vpack.c.b16 %v646, %v643
        %v704 = vpack.c.b16 %v647, %v644
        %v705 = vpack.c.b16 %v651, %v648
        %v706 = vpack.c.b16 %v652, %v649
        %v707 = vpack.c.b16 %v653, %v650
        %vm762 = vcmask 261120
        %v764 = vsel %vm762, %v466, 0
        %v767 = vsel %vm762, %v469, 0
        %769 = vmatprep.subr.bf16.mxu0 %v676
        %770 = vmatpush1.bf16.msra.mxu0 %v675
        %771 = vmatprep.subr.bf16.mxu0 %v673
        %772 = vmatpush1.bf16.msra.mxu0 %v672
        %773 = vmatprep.subr.bf16.mxu0 %v670
        %774 = vmatpush1.bf16.msra.mxu0 %v669
        %775 = vmatprep.subr.bf16.mxu0 %v667
        %776 = vmatpush1.bf16.msra.mxu0 %v666
        %777 = vmatprep.subr.bf16.mxu0 %v664
        %778 = vmatpush1.bf16.msra.mxu0 %v663
        %779 = vmatprep.subr.bf16.mxu0 %v661
        %780 = vmatpush1.bf16.msra.mxu0 %v660
        %781 = vmatprep.subr.bf16.mxu0 %v658
        %782 = vmatpush1.bf16.msra.mxu0 %v657
        %783 = vmatprep.subr.bf16.mxu0 %v655
        %784 = vmatpush1.bf16.msra.mxu0 %v654
        %785 = vmatprep.subr.bf16.mxu0 %v700
        %786 = vmatpush2.bf16.msra.mxu0 %v699
        %787 = vmatprep.subr.bf16.mxu0 %v697
        %788 = vmatpush2.bf16.msra.mxu0 %v696
        %789 = vmatprep.subr.bf16.mxu0 %v694
        %790 = vmatpush2.bf16.msra.mxu0 %v693
        %791 = vmatprep.subr.bf16.mxu0 %v691
        %792 = vmatpush2.bf16.msra.mxu0 %v690
        %793 = vmatprep.subr.bf16.mxu0 %v688
        %794 = vmatpush2.bf16.msra.mxu0 %v687
        %795 = vmatprep.subr.bf16.mxu0 %v685
        %796 = vmatpush2.bf16.msra.mxu0 %v684
        %797 = vmatprep.subr.bf16.mxu0 %v682
        %798 = vmatpush2.bf16.msra.mxu0 %v681
        %799 = vmatprep.subr.bf16.mxu0 %v679
        %800 = vmatpush2.bf16.msra.mxu0 %v678
        %801 = vmatprep.mubr.bf16.mxu0 %v465
        %802 = vmatmul.mubr.bf16.gmra.mxu0 %v464
        %v803 = vpop.f32.mrf.mxu0
        %v804 = vadd.f32 %v427, %v803
        %v805 = vpop.f32.mrf.mxu0
        %v806 = vadd.f32 %v427, %v805
        %v807 = vpop.f32.mrf.mxu0
        %v808 = vadd.f32 %v432, %v807
        %v809 = vpop.f32.mrf.mxu0
        %v810 = vadd.f32 %v432, %v809
        %811 = vmatprep.mubr.bf16.mxu0 %v468
        %812 = vmatmul.mubr.bf16.gmra.mxu0 %v467
        %v813 = vpop.f32.mrf.mxu0
        %v814 = vadd.f32 %v437, %v813
        %v815 = vpop.f32.mrf.mxu0
        %v816 = vadd.f32 %v437, %v815
        %v817 = vpop.f32.mrf.mxu0
        %v818 = vadd.f32 %v442, %v817
        %v819 = vpop.f32.mrf.mxu0
        %v820 = vadd.f32 %v442, %v819
        %821 = vdwg.mxu0
        %822 = vmatprep.subr.bf16.mxu0 0
        %823 = vmatpush1.bf16.msra.mxu0 0
        %824 = vmatprep.subr.bf16.mxu0 0
        %825 = vmatpush1.bf16.msra.mxu0 0
        %826 = vmatprep.subr.bf16.mxu0 0
        %827 = vmatpush1.bf16.msra.mxu0 0
        %828 = vmatprep.subr.bf16.mxu0 0
        %829 = vmatpush1.bf16.msra.mxu0 0
        %830 = vmatprep.subr.bf16.mxu0 0
        %831 = vmatpush1.bf16.msra.mxu0 0
        %832 = vmatprep.subr.bf16.mxu0 0
        %833 = vmatpush1.bf16.msra.mxu0 0
        %834 = vmatprep.subr.bf16.mxu0 %v706
        %835 = vmatpush1.bf16.msra.mxu0 %v705
        %836 = vmatprep.subr.bf16.mxu0 %v703
        %837 = vmatpush1.bf16.msra.mxu0 %v702
        %838 = vmatprep.subr.bf16.mxu0 0
        %839 = vmatpush2.bf16.msra.mxu0 0
        %840 = vmatprep.subr.bf16.mxu0 0
        %841 = vmatpush2.bf16.msra.mxu0 0
        %842 = vmatprep.subr.bf16.mxu0 0
        %843 = vmatpush2.bf16.msra.mxu0 0
        %844 = vmatprep.subr.bf16.mxu0 0
        %845 = vmatpush2.bf16.msra.mxu0 0
        %846 = vmatprep.subr.bf16.mxu0 0
        %847 = vmatpush2.bf16.msra.mxu0 0
        %848 = vmatprep.subr.bf16.mxu0 0
        %849 = vmatpush2.bf16.msra.mxu0 0
        %850 = vmatprep.subr.bf16.mxu0 0
        %851 = vmatpush2.bf16.msra.mxu0 0
        %852 = vmatprep.subr.bf16.mxu0 0
        %853 = vmatpush2.bf16.msra.mxu0 0
        %854 = vmatprep.mubr.bf16.mxu0 0
        %855 = vmatmul.mubr.bf16.gmra.mxu0 %v764
        %v856 = vpop.f32.mrf.mxu0
        %v857 = vadd.f32 %v804, %v856
        %v858 = vpop.f32.mrf.mxu0
        %v859 = vadd.f32 %v806, %v858
        %v860 = vpop.f32.mrf.mxu0
        %v861 = vadd.f32 %v808, %v860
        %v862 = vpop.f32.mrf.mxu0
        %v863 = vadd.f32 %v810, %v862
        %864 = vmatprep.mubr.bf16.mxu0 0
        %865 = vmatmul.mubr.bf16.gmra.mxu0 %v767
        %v866 = vpop.f32.mrf.mxu0
        %v867 = vadd.f32 %v814, %v866
        %v868 = vpop.f32.mrf.mxu0
        %v869 = vadd.f32 %v816, %v868
        %v870 = vpop.f32.mrf.mxu0
        %v871 = vadd.f32 %v818, %v870
        %v872 = vpop.f32.mrf.mxu0
        %v873 = vadd.f32 %v820, %v872
        %874 = vdwg.mxu0
        %875 = vmatprep.subr.bf16.mxu0 0
        %876 = vmatpush1.bf16.msra.mxu0 %v677
        %877 = vmatprep.subr.bf16.mxu0 0
        %878 = vmatpush1.bf16.msra.mxu0 %v674
        %879 = vmatprep.subr.bf16.mxu0 0
        %880 = vmatpush1.bf16.msra.mxu0 %v671
        %881 = vmatprep.subr.bf16.mxu0 0
        %882 = vmatpush1.bf16.msra.mxu0 %v668
        %883 = vmatprep.subr.bf16.mxu0 0
        %884 = vmatpush1.bf16.msra.mxu0 %v665
        %885 = vmatprep.subr.bf16.mxu0 0
        %886 = vmatpush1.bf16.msra.mxu0 %v662
        %887 = vmatprep.subr.bf16.mxu0 0
        %888 = vmatpush1.bf16.msra.mxu0 %v659
        %889 = vmatprep.subr.bf16.mxu0 0
        %890 = vmatpush1.bf16.msra.mxu0 %v656
        %891 = vmatprep.subr.bf16.mxu0 0
        %892 = vmatpush2.bf16.msra.mxu0 %v701
        %893 = vmatprep.subr.bf16.mxu0 0
        %894 = vmatpush2.bf16.msra.mxu0 %v698
        %895 = vmatprep.subr.bf16.mxu0 0
        %896 = vmatpush2.bf16.msra.mxu0 %v695
        %897 = vmatprep.subr.bf16.mxu0 0
        %898 = vmatpush2.bf16.msra.mxu0 %v692
        %899 = vmatprep.subr.bf16.mxu0 0
        %900 = vmatpush2.bf16.msra.mxu0 %v689
        %901 = vmatprep.subr.bf16.mxu0 0
        %902 = vmatpush2.bf16.msra.mxu0 %v686
        %903 = vmatprep.subr.bf16.mxu0 0
        %904 = vmatpush2.bf16.msra.mxu0 %v683
        %905 = vmatprep.subr.bf16.mxu0 0
        %906 = vmatpush2.bf16.msra.mxu0 %v680
        %907 = vmatprep.mubr.bf16.mxu0 %v465
        %908 = vmatmul.mubr.bf16.gmra.mxu0 %v464
        %v909 = vpop.f32.mrf.mxu0
        %v910 = vadd.f32 %v427, %v909
        %v911 = vpop.f32.mrf.mxu0
        %v912 = vpop.f32.mrf.mxu0
        %v913 = vadd.f32 %v432, %v912
        %v914 = vpop.f32.mrf.mxu0
        %915 = vmatprep.mubr.bf16.mxu0 %v468
        %916 = vmatmul.mubr.bf16.gmra.mxu0 %v467
        %v917 = vpop.f32.mrf.mxu0
        %v918 = vadd.f32 %v437, %v917
        %v919 = vpop.f32.mrf.mxu0
        %v920 = vpop.f32.mrf.mxu0
        %v921 = vadd.f32 %v442, %v920
        %v922 = vpop.f32.mrf.mxu0
        %923 = vdwg.mxu0
        %924 = vmatprep.subr.bf16.mxu0 0
        %925 = vmatpush1.bf16.msra.mxu0 0
        %926 = vmatprep.subr.bf16.mxu0 0
        %927 = vmatpush1.bf16.msra.mxu0 0
        %928 = vmatprep.subr.bf16.mxu0 0
        %929 = vmatpush1.bf16.msra.mxu0 0
        %930 = vmatprep.subr.bf16.mxu0 0
        %931 = vmatpush1.bf16.msra.mxu0 0
        %932 = vmatprep.subr.bf16.mxu0 0
        %933 = vmatpush1.bf16.msra.mxu0 0
        %934 = vmatprep.subr.bf16.mxu0 0
        %935 = vmatpush1.bf16.msra.mxu0 0
        %936 = vmatprep.subr.bf16.mxu0 0
        %937 = vmatpush1.bf16.msra.mxu0 %v707
        %938 = vmatprep.subr.bf16.mxu0 0
        %939 = vmatpush1.bf16.msra.mxu0 %v704
        %940 = vmatprep.subr.bf16.mxu0 0
        %941 = vmatpush2.bf16.msra.mxu0 0
        %942 = vmatprep.subr.bf16.mxu0 0
        %943 = vmatpush2.bf16.msra.mxu0 0
        %944 = vmatprep.subr.bf16.mxu0 0
        %945 = vmatpush2.bf16.msra.mxu0 0
        %946 = vmatprep.subr.bf16.mxu0 0
        %947 = vmatpush2.bf16.msra.mxu0 0
        %948 = vmatprep.subr.bf16.mxu0 0
        %949 = vmatpush2.bf16.msra.mxu0 0
        %950 = vmatprep.subr.bf16.mxu0 0
        %951 = vmatpush2.bf16.msra.mxu0 0
        %952 = vmatprep.subr.bf16.mxu0 0
        %953 = vmatpush2.bf16.msra.mxu0 0
        %954 = vmatprep.subr.bf16.mxu0 0
        %955 = vmatpush2.bf16.msra.mxu0 0
        %956 = vmatprep.mubr.bf16.mxu0 0
        %957 = vmatmul.mubr.bf16.gmra.mxu0 %v764
        %v958 = vpop.f32.mrf.mxu0
        %v959 = vadd.f32 %v910, %v958
        %v960 = vpop.f32.mrf.mxu0
        %v961 = vpop.f32.mrf.mxu0
        %v962 = vadd.f32 %v913, %v961
        %v963 = vpop.f32.mrf.mxu0
        %964 = vmatprep.mubr.bf16.mxu0 0
        %965 = vmatmul.mubr.bf16.gmra.mxu0 %v767
        %v966 = vpop.f32.mrf.mxu0
        %v967 = vadd.f32 %v918, %v966
        %v968 = vpop.f32.mrf.mxu0
        %v969 = vpop.f32.mrf.mxu0
        %v970 = vadd.f32 %v921, %v969
        %v971 = vpop.f32.mrf.mxu0
        %972 = vdwg.mxu0
        %v973 = vmax.f32 %v857, 0.0
        %v974 = vmax.f32 %v859, 0.0
        %v975 = vmax.f32 %v959, 0.0
        %v976 = vmax.f32 %v861, 0.0
        %v977 = vmax.f32 %v863, 0.0
        %v978 = vmax.f32 %v962, 0.0
        %v979 = vmax.f32 %v867, 0.0
        %v980 = vmax.f32 %v869, 0.0
        %v981 = vmax.f32 %v967, 0.0
        %v982 = vmax.f32 %v871, 0.0
        %v983 = vmax.f32 %v873, 0.0
        %v984 = vmax.f32 %v970, 0.0
        %v985 = vpack.c.bf16 %v976, %v973
        %v986 = vpack.c.bf16 %v977, %v974
        %v987 = vpack.c.bf16 %v978, %v975
        %v988 = vpack.c.bf16 %v982, %v979
        %v989 = vpack.c.bf16 %v983, %v980
        %v990 = vpack.c.bf16 %v984, %v981
        %v997 = vunpack.c.l.b16 %v985
        %v998 = vunpack.c.l.b16 %v986
        %v999 = vunpack.c.l.b16 %v987
        %v1000 = vunpack.c.h.b16 %v985
        %v1001 = vunpack.c.h.b16 %v986
        %v1002 = vunpack.c.h.b16 %v987
        %v1003 = vunpack.c.l.b16 %v988
        %v1004 = vunpack.c.l.b16 %v989
        %v1005 = vunpack.c.l.b16 %v990
        %v1006 = vunpack.c.h.b16 %v988
        %v1007 = vunpack.c.h.b16 %v989
        %v1008 = vunpack.c.h.b16 %v990
        %v1009 = vpack.c.b16 %v998, %v997
        %v1010 = vpack.c.b16 %v999, %v999
        %v1011 = vpack.c.b16 %v1001, %v1000
        %v1012 = vpack.c.b16 %v1002, %v1002
        %v1013 = vpack.c.b16 %v1004, %v1003
        %v1014 = vpack.c.b16 %v1005, %v1005
        %v1015 = vpack.c.b16 %v1007, %v1006
        %v1016 = vpack.c.b16 %v1008, %v1008
        %1025 = vst [vmem:[%s336] sm:$0xff] %v1009
        %1026 = vst [vmem:[%s336 + $0x8] sm:$0xf] %v1010
        %1027 = vst [vmem:[%s336 + $0xc] sm:$0xff] %v1011
        %1028 = vst [vmem:[%s336 + $0x14] sm:$0xf] %v1012
        %1029 = vst [vmem:[%s336 + $0x18] sm:$0xff] %v1013
        %1030 = vst [vmem:[%s336 + $0x20] sm:$0xf] %v1014
        %1031 = vst [vmem:[%s336 + $0x24] sm:$0xff] %v1015
        %1032 = vst [vmem:[%s336 + $0x2c] sm:$0xf] %v1016
        %s1033 = sand.u32 %s90, 1
        %s1034 = sand.u32 %s90, 1
        %s1035 = smul.addr %s1034, 48
        %s1036 = scalar_lea.vmem [#allocation3], %s1035
        // Predicated region
        $region59: #{encoder_forward.6} parent=53 // pred_check
          %p1037 = pneg %p100
        $region60: #{encoder_forward.6} parent=53 // pred_check_branch
          %1039 = sbr.rel (%p1037) target = $region62
        $region61: #{encoder_forward.6} parent=53 // pred_region
          %s1040 = smul.u32 3, %s14
          %s1041 = smul.addr %s1040, 4
          %s1042 = scalar_lea.vmem %s3, %s1041
          // Predicated region
          $region63: #{encoder_forward.6} parent=61 // pred_check
            _
          $region64: #{encoder_forward.6} parent=61 // pred_check_branch
            %1044 = sbr.rel (0) target = $region66
          $region65: #{encoder_forward.6} parent=61 // pred_region
            // Predicated region
            $region67: #{encoder_forward.6} parent=65 // pred_check
              _
            $region68: #{encoder_forward.6} parent=65 // pred_check_branch
              %1046 = sbr.rel (0) target = $region70
            $region69: #{encoder_forward.6} parent=65 // pred_region
              %s1047 = scalar_lea.vmem %s1036, 8 [#allocation3]
              %s1048 = scalar_lea.vmem %s1042, 8
              loop: start=0, step=1, limit=1
              $region71: #{encoder_forward.6} parent=69 // loop_pre_header
                _
              $region72: #{encoder_forward.6} parent=69 // loop_header
                %s1050 = sphi 0, %s1054
                %p1051 = scmp.ge.s32.totalorder %s1050, 1
                %s1055 = sphi %s1036, %s1036
                %s1056 = sphi %s1042, %s1042
              $region73: #{encoder_forward.6} parent=69 // loop_header_branch
                %1053 = sbr.rel (%p1051) target = $region77
              $region74: #{encoder_forward.6} parent=69 // loop_body
                %v1057 = vld [vmem:[%s1055] sm:$0xff]
                %1058 = vst [vmem:[%s1056] sm:$0xff] %v1057
                %v1059 = vld [vmem:[%s1055 + $0xc] sm:$0xff]
                %1060 = vst [vmem:[%s1056 + $0x24] sm:$0xff] %v1059
                %v1061 = vld [vmem:[%s1055 + $0x18] sm:$0xff]
                %1062 = vst [vmem:[%s1056 + $0x48] sm:$0xff] %v1061
                %v1063 = vld [vmem:[%s1055 + $0x24] sm:$0xff]
                %1064 = vst [vmem:[%s1056 + $0x6c] sm:$0xff] %v1063
              $region75: #{encoder_forward.6} parent=69 // loop_footer
                %s1054 = sadd.s32 1, %s1050
              $region76: #{encoder_forward.6} parent=69 // loop_footer_branch
                %1049 = sbr.rel target = $region72
              $region77: #{encoder_forward.6} parent=69 // loop_exit
                _
              %s1066 = ssub.s32 16, 1
              loop: start=0, step=1, limit=1
              $region78: #{encoder_forward.6} parent=69 // loop_pre_header
                _
              $region79: #{encoder_forward.6} parent=69 // loop_header
                %s1068 = sphi 0, %s1072
                %p1069 = scmp.ge.s32.totalorder %s1068, 1
                %s1073 = sphi %s1047, %s1047
                %s1074 = sphi %s1048, %s1048
              $region80: #{encoder_forward.6} parent=69 // loop_header_branch
                %1071 = sbr.rel (%p1069) target = $region84
              $region81: #{encoder_forward.6} parent=69 // loop_body
                %v1075 = vld [vmem:[%s1073] sm:%s1066]
                %1076 = vst [vmem:[%s1074] sm:%s1066] %v1075
                %v1077 = vld [vmem:[%s1073 + $0xc] sm:%s1066]
                %1078 = vst [vmem:[%s1074 + $0x24] sm:%s1066] %v1077
                %v1079 = vld [vmem:[%s1073 + $0x18] sm:%s1066]
                %1080 = vst [vmem:[%s1074 + $0x48] sm:%s1066] %v1079
                %v1081 = vld [vmem:[%s1073 + $0x24] sm:%s1066]
                %1082 = vst [vmem:[%s1074 + $0x6c] sm:%s1066] %v1081
              $region82: #{encoder_forward.6} parent=69 // loop_footer
                %s1072 = sadd.s32 1, %s1068
              $region83: #{encoder_forward.6} parent=69 // loop_footer_branch
                %1067 = sbr.rel target = $region79
              $region84: #{encoder_forward.6} parent=69 // loop_exit
                _
            $region70: #{encoder_forward.6} parent=65 // pred_fallthru
              _
          $region66: #{encoder_forward.6} parent=61 // pred_fallthru
            _
          %1083 = vnop
        $region62: #{encoder_forward.6} parent=53 // pred_fallthru
          _
      $region54: #{encoder_forward.6} parent=5 // pred_fallthru
        _
      %p1084 = scmp.le.s32.totalorder 2, %s9
      // Predicated region
      $region85: #{encoder_forward.6} parent=5 // pred_check
        %p1085 = pneg %p1084
      $region86: #{encoder_forward.6} parent=5 // pred_check_branch
        %1087 = sbr.rel (%p1085) target = $region88
      $region87: #{encoder_forward.6} parent=5 // pred_region
        %s1088 = ssub.s32 %s9, 2
        // Predicated region
        $region89: #{encoder_forward.6} parent=87 // pred_check
          %p1089 = pneg %p106
        $region90: #{encoder_forward.6} parent=87 // pred_check_branch
          %1091 = sbr.rel (%p1089) target = $region92
        $region91: #{encoder_forward.6} parent=87 // pred_region
          %s1092 = sand.u32 %s91, 1
          %s1093 = sand.u32 %s91, 1
          %s1094 = smul.addr %s1093, 48
          %s1095 = scalar_lea.vmem [#allocation3], %s1094
        $region92: #{encoder_forward.6} parent=87 // pred_fallthru
          _
      $region88: #{encoder_forward.6} parent=5 // pred_fallthru
        _
    $region6: #{encoder_forward.6} parent=1 // loop_footer
      %s13 = sadd.s32 1, %s9
    $region7: #{encoder_forward.6} parent=1 // loop_footer_branch
      %8 = sbr.rel target = $region3
    $region8: #{encoder_forward.6} parent=1 // loop_exit
      _

// kernel: encoder_forward.7
$region0: #{encoder_forward.7}
  #allocation0 [shape = 'u32[]', space=smem, size = 0x4, offset = 0x4, fixed_abs, tag = 'smem constant byte address 0x4 - core index']
  #allocation1 [shape = 'u32[144,128]{1,0:T(1,128)}', space=vmem, size = 0x12000, scoped, tag = 'internal scratch']
  %s0 = inlined_call_operand.vmem [shape: bf16[32,288], index: 0, kind: input, shape index: {}]
  %s1 = inlined_call_operand.vmem [shape: bf16[288,288], index: 1, kind: input, shape index: {}]
  %s2 = inlined_call_operand.vmem [shape: f32[32,1], index: 2, kind: input, shape index: {}]
  %s3 = inlined_call_operand.vmem [shape: bf16[32,288], index: 3, kind: output, shape index: {}]
  %s4 = sld [smem:[#allocation0]]
  $region22: #{encoder_forward.7} parent=0
    _
  %s6 = ssub.s32 1, %s4
  %s7 = scalar_select 0, %s6, %s4
  // Predicated region
  $region2: #{encoder_forward.7} parent=0 // pred_check
    _
  $region3: #{encoder_forward.7} parent=0 // pred_check_branch
    %9 = sbr.rel (0) target = $region5
  $region4: #{encoder_forward.7} parent=0 // pred_region
    _
  $region5: #{encoder_forward.7} parent=0 // pred_fallthru
    _
  // Predicated region
  $region6: #{encoder_forward.7} parent=0 // pred_check
    _
  $region7: #{encoder_forward.7} parent=0 // pred_check_branch
    %11 = sbr.rel (0) target = $region9
  $region8: #{encoder_forward.7} parent=0 // pred_region
    _
  $region9: #{encoder_forward.7} parent=0 // pred_fallthru
    _
  // Predicated region
  $region10: #{encoder_forward.7} parent=0 // pred_check
    _
  $region11: #{encoder_forward.7} parent=0 // pred_check_branch
    %13 = sbr.rel (0) target = $region13
  $region12: #{encoder_forward.7} parent=0 // pred_region
    _
  $region13: #{encoder_forward.7} parent=0 // pred_fallthru
    _
  %v15 = vld [vmem:[%s0] sm:$0xff]
  %v16 = vld [vmem:[%s0 + $0x8] sm:$0xf]
  %v17 = vld [vmem:[%s0 + $0xc] sm:$0xff]
  %v18 = vld [vmem:[%s0 + $0x14] sm:$0xf]
  %v19 = vld [vmem:[%s0 + $0x18] sm:$0xff]
  %v20 = vld [vmem:[%s0 + $0x20] sm:$0xf]
  %v21 = vld [vmem:[%s0 + $0x24] sm:$0xff]
  %v22 = vld [vmem:[%s0 + $0x2c] sm:$0xf]
  %v23 = vld [vmem:[%s1] sm:$0xff]
  %v24 = vld [vmem:[%s1 + $0x8] sm:$0xf]
  %v25 = vld [vmem:[%s1 + $0xc] sm:$0xff]
  %v26 = vld [vmem:[%s1 + $0x14] sm:$0xf]
  %v27 = vld [vmem:[%s1 + $0x18] sm:$0xff]
  %v28 = vld [vmem:[%s1 + $0x20] sm:$0xf]
  %v29 = vld [vmem:[%s1 + $0x24] sm:$0xff]
  %v30 = vld [vmem:[%s1 + $0x2c] sm:$0xf]
  %v31 = vld [vmem:[%s1 + $0x30] sm:$0xff]
  %v32 = vld [vmem:[%s1 + $0x38] sm:$0xf]
  %v33 = vld [vmem:[%s1 + $0x3c] sm:$0xff]
  %v34 = vld [vmem:[%s1 + $0x44] sm:$0xf]
  %v35 = vld [vmem:[%s1 + $0x48] sm:$0xff]
  %v36 = vld [vmem:[%s1 + $0x50] sm:$0xf]
  %v37 = vld [vmem:[%s1 + $0x54] sm:$0xff]
  %v38 = vld [vmem:[%s1 + $0x5c] sm:$0xf]
  %v39 = vld [vmem:[%s1 + $0x60] sm:$0xff]
  %v40 = vld [vmem:[%s1 + $0x68] sm:$0xf]
  %v41 = vld [vmem:[%s1 + $0x6c] sm:$0xff]
  %v42 = vld [vmem:[%s1 + $0x74] sm:$0xf]
  %v43 = vld [vmem:[%s1 + $0x78] sm:$0xff]
  %v44 = vld [vmem:[%s1 + $0x80] sm:$0xf]
  %v45 = vld [vmem:[%s1 + $0x84] sm:$0xff]
  %v46 = vld [vmem:[%s1 + $0x8c] sm:$0xf]
  %v47 = vld [vmem:[%s1 + $0x90] sm:$0xff]
  %v48 = vld [vmem:[%s1 + $0x98] sm:$0xf]
  %v49 = vld [vmem:[%s1 + $0x9c] sm:$0xff]
  %v50 = vld [vmem:[%s1 + $0xa4] sm:$0xf]
  %v51 = vld [vmem:[%s1 + $0xa8] sm:$0xff]
  %v52 = vld [vmem:[%s1 + $0xb0] sm:$0xf]
  %v53 = vld [vmem:[%s1 + $0xb4] sm:$0xff]
  %v54 = vld [vmem:[%s1 + $0xbc] sm:$0xf]
  %v55 = vld [vmem:[%s1 + $0xc0] sm:$0xff]
  %v56 = vld [vmem:[%s1 + $0xc8] sm:$0xf]
  %v57 = vld [vmem:[%s1 + $0xcc] sm:$0xff]
  %v58 = vld [vmem:[%s1 + $0xd4] sm:$0xf]
  %v59 = vld [vmem:[%s1 + $0xd8] sm:$0xff]
  %v60 = vld [vmem:[%s1 + $0xe0] sm:$0xf]
  %v61 = vld [vmem:[%s1 + $0xe4] sm:$0xff]
  %v62 = vld [vmem:[%s1 + $0xec] sm:$0xf]
  %v63 = vld [vmem:[%s1 + $0xf0] sm:$0xff]
  %v64 = vld [vmem:[%s1 + $0xf8] sm:$0xf]
  %v65 = vld [vmem:[%s1 + $0xfc] sm:$0xff]
  %v66 = vld [vmem:[%s1 + $0x104] sm:$0xf]
  %v67 = vld [vmem:[%s1 + $0x108] sm:$0xff]
  %v68 = vld [vmem:[%s1 + $0x110] sm:$0xf]
  %v69 = vld [vmem:[%s1 + $0x114] sm:$0xff]
  %v70 = vld [vmem:[%s1 + $0x11c] sm:$0xf]
  %v71 = vld [vmem:[%s1 + $0x120] sm:$0xff]
  %v72 = vld [vmem:[%s1 + $0x128] sm:$0xf]
  %v73 = vld [vmem:[%s1 + $0x12c] sm:$0xff]
  %v74 = vld [vmem:[%s1 + $0x134] sm:$0xf]
  %v75 = vld [vmem:[%s1 + $0x138] sm:$0xff]
  %v76 = vld [vmem:[%s1 + $0x140] sm:$0xf]
  %v77 = vld [vmem:[%s1 + $0x144] sm:$0xff]
  %v78 = vld [vmem:[%s1 + $0x14c] sm:$0xf]
  %v79 = vld [vmem:[%s1 + $0x150] sm:$0xff]
  %v80 = vld [vmem:[%s1 + $0x158] sm:$0xf]
  %v81 = vld [vmem:[%s1 + $0x15c] sm:$0xff]
  %v82 = vld [vmem:[%s1 + $0x164] sm:$0xf]
  %v83 = vld [vmem:[%s1 + $0x168] sm:$0xff]
  %v84 = vld [vmem:[%s1 + $0x170] sm:$0xf]
  %v85 = vld [vmem:[%s1 + $0x174] sm:$0xff]
  %v86 = vld [vmem:[%s1 + $0x17c] sm:$0xf]
  %v87 = vld [vmem:[%s1 + $0x180] sm:$0xff]
  %v88 = vld [vmem:[%s1 + $0x188] sm:$0xf]
  %v89 = vld [vmem:[%s1 + $0x18c] sm:$0xff]
  %v90 = vld [vmem:[%s1 + $0x194] sm:$0xf]
  %v91 = vld [vmem:[%s1 + $0x198] sm:$0xff]
  %v92 = vld [vmem:[%s1 + $0x1a0] sm:$0xf]
  %v93 = vld [vmem:[%s1 + $0x1a4] sm:$0xff]
  %v94 = vld [vmem:[%s1 + $0x1ac] sm:$0xf]
  %v95 = vld [vmem:[%s2] sm:$0xff]
  %v96 = vld [vmem:[%s2 + $0x8] sm:$0xff]
  %v97 = vld [vmem:[%s2 + $0x10] sm:$0xff]
  %v98 = vld [vmem:[%s2 + $0x18] sm:$0xff]
  %100 = vset.pattern.permute.xlu0 0
  %101 = vperm.xlu0 %100, %v95
  %v102 = vpop.permute.xlu0 %101
  %105 = vset.pattern.permute.xlu0 0
  %106 = vperm.xlu0 %105, %v96
  %v107 = vpop.permute.xlu0 %106
  %110 = vset.pattern.permute.xlu0 0
  %111 = vperm.xlu0 %110, %v97
  %v112 = vpop.permute.xlu0 %111
  %115 = vset.pattern.permute.xlu0 0
  %116 = vperm.xlu0 %115, %v98
  %v117 = vpop.permute.xlu0 %116
  %v127 = vunpack.c.l.b16 %v15
  %v128 = vunpack.c.h.b16 %v15
  %v129 = vunpack.c.l.b16 %v16
  %v130 = vunpack.c.l.b16 %v17
  %v131 = vunpack.c.h.b16 %v17
  %v132 = vunpack.c.l.b16 %v18
  %v133 = vunpack.c.l.b16 %v19
  %v134 = vunpack.c.h.b16 %v19
  %v135 = vunpack.c.l.b16 %v20
  %v136 = vunpack.c.l.b16 %v21
  %v137 = vunpack.c.h.b16 %v21
  %v138 = vunpack.c.l.b16 %v22
  %v139 = vpack.c.b16 %v130, %v127
  %v140 = vpack.c.b16 %v131, %v128
  %v141 = vpack.c.b16 %v132, %v129
  %v142 = vpack.c.b16 %v136, %v133
  %v143 = vpack.c.b16 %v137, %v134
  %v144 = vpack.c.b16 %v138, %v135
  %v221 = vunpack.c.l.b16 %v23
  %v222 = vunpack.c.h.b16 %v23
  %v223 = vunpack.c.l.b16 %v24
  %v224 = vunpack.c.l.b16 %v25
  %v225 = vunpack.c.h.b16 %v25
  %v226 = vunpack.c.l.b16 %v26
  %v227 = vunpack.c.l.b16 %v27
  %v228 = vunpack.c.h.b16 %v27
  %v229 = vunpack.c.l.b16 %v28
  %v230 = vunpack.c.l.b16 %v29
  %v231 = vunpack.c.h.b16 %v29
  %v232 = vunpack.c.l.b16 %v30
  %v233 = vunpack.c.l.b16 %v31
  %v234 = vunpack.c.h.b16 %v31
  %v235 = vunpack.c.l.b16 %v32
  %v236 = vunpack.c.l.b16 %v33
  %v237 = vunpack.c.h.b16 %v33
  %v238 = vunpack.c.l.b16 %v34
  %v239 = vunpack.c.l.b16 %v35
  %v240 = vunpack.c.h.b16 %v35
  %v241 = vunpack.c.l.b16 %v36
  %v242 = vunpack.c.l.b16 %v37
  %v243 = vunpack.c.h.b16 %v37
  %v244 = vunpack.c.l.b16 %v38
  %v245 = vunpack.c.l.b16 %v39
  %v246 = vunpack.c.h.b16 %v39
  %v247 = vunpack.c.l.b16 %v40
  %v248 = vunpack.c.l.b16 %v41
  %v249 = vunpack.c.h.b16 %v41
  %v250 = vunpack.c.l.b16 %v42
  %v251 = vunpack.c.l.b16 %v43
  %v252 = vunpack.c.h.b16 %v43
  %v253 = vunpack.c.l.b16 %v44
  %v254 = vunpack.c.l.b16 %v45
  %v255 = vunpack.c.h.b16 %v45
  %v256 = vunpack.c.l.b16 %v46
  %v257 = vunpack.c.l.b16 %v47
  %v258 = vunpack.c.h.b16 %v47
  %v259 = vunpack.c.l.b16 %v48
  %v260 = vunpack.c.l.b16 %v49
  %v261 = vunpack.c.h.b16 %v49
  %v262 = vunpack.c.l.b16 %v50
  %v263 = vunpack.c.l.b16 %v51
  %v264 = vunpack.c.h.b16 %v51
  %v265 = vunpack.c.l.b16 %v52
  %v266 = vunpack.c.l.b16 %v53
  %v267 = vunpack.c.h.b16 %v53
  %v268 = vunpack.c.l.b16 %v54
  %v269 = vunpack.c.l.b16 %v55
  %v270 = vunpack.c.h.b16 %v55
  %v271 = vunpack.c.l.b16 %v56
  %v272 = vunpack.c.l.b16 %v57
  %v273 = vunpack.c.h.b16 %v57
  %v274 = vunpack.c.l.b16 %v58
  %v275 = vunpack.c.l.b16 %v59
  %v276 = vunpack.c.h.b16 %v59
  %v277 = vunpack.c.l.b16 %v60
  %v278 = vunpack.c.l.b16 %v61
  %v279 = vunpack.c.h.b16 %v61
  %v280 = vunpack.c.l.b16 %v62
  %v281 = vunpack.c.l.b16 %v63
  %v282 = vunpack.c.h.b16 %v63
  %v283 = vunpack.c.l.b16 %v64
  %v284 = vunpack.c.l.b16 %v65
  %v285 = vunpack.c.h.b16 %v65
  %v286 = vunpack.c.l.b16 %v66
  %v287 = vunpack.c.l.b16 %v67
  %v288 = vunpack.c.h.b16 %v67
  %v289 = vunpack.c.l.b16 %v68
  %v290 = vunpack.c.l.b16 %v69
  %v291 = vunpack.c.h.b16 %v69
  %v292 = vunpack.c.l.b16 %v70
  %v293 = vunpack.c.l.b16 %v71
  %v294 = vunpack.c.h.b16 %v71
  %v295 = vunpack.c.l.b16 %v72
  %v296 = vunpack.c.l.b16 %v73
  %v297 = vunpack.c.h.b16 %v73
  %v298 = vunpack.c.l.b16 %v74
  %v299 = vunpack.c.l.b16 %v75
  %v300 = vunpack.c.h.b16 %v75
  %v301 = vunpack.c.l.b16 %v76
  %v302 = vunpack.c.l.b16 %v77
  %v303 = vunpack.c.h.b16 %v77
  %v304 = vunpack.c.l.b16 %v78
  %v305 = vunpack.c.l.b16 %v79
  %v306 = vunpack.c.h.b16 %v79
  %v307 = vunpack.c.l.b16 %v80
  %v308 = vunpack.c.l.b16 %v81
  %v309 = vunpack.c.h.b16 %v81
  %v310 = vunpack.c.l.b16 %v82
  %v311 = vunpack.c.l.b16 %v83
  %v312 = vunpack.c.h.b16 %v83
  %v313 = vunpack.c.l.b16 %v84
  %v314 = vunpack.c.l.b16 %v85
  %v315 = vunpack.c.h.b16 %v85
  %v316 = vunpack.c.l.b16 %v86
  %v317 = vunpack.c.l.b16 %v87
  %v318 = vunpack.c.h.b16 %v87
  %v319 = vunpack.c.l.b16 %v88
  %v320 = vunpack.c.l.b16 %v89
  %v321 = vunpack.c.h.b16 %v89
  %v322 = vunpack.c.l.b16 %v90
  %v323 = vunpack.c.l.b16 %v91
  %v324 = vunpack.c.h.b16 %v91
  %v325 = vunpack.c.l.b16 %v92
  %v326 = vunpack.c.l.b16 %v93
  %v327 = vunpack.c.h.b16 %v93
  %v328 = vunpack.c.l.b16 %v94
  %v329 = vpack.c.b16 %v224, %v221
  %v330 = vpack.c.b16 %v225, %v222
  %v331 = vpack.c.b16 %v226, %v223
  %v332 = vpack.c.b16 %v230, %v227
  %v333 = vpack.c.b16 %v231, %v228
  %v334 = vpack.c.b16 %v232, %v229
  %v335 = vpack.c.b16 %v236, %v233
  %v336 = vpack.c.b16 %v237, %v234
  %v337 = vpack.c.b16 %v238, %v235
  %v338 = vpack.c.b16 %v242, %v239
  %v339 = vpack.c.b16 %v243, %v240
  %v340 = vpack.c.b16 %v244, %v241
  %v341 = vpack.c.b16 %v248, %v245
  %v342 = vpack.c.b16 %v249, %v246
  %v343 = vpack.c.b16 %v250, %v247
  %v344 = vpack.c.b16 %v254, %v251
  %v345 = vpack.c.b16 %v255, %v252
  %v346 = vpack.c.b16 %v256, %v253
  %v347 = vpack.c.b16 %v260, %v257
  %v348 = vpack.c.b16 %v261, %v258
  %v349 = vpack.c.b16 %v262, %v259
  %v350 = vpack.c.b16 %v266, %v263
  %v351 = vpack.c.b16 %v267, %v264
  %v352 = vpack.c.b16 %v268, %v265
  %v353 = vpack.c.b16 %v272, %v269
  %v354 = vpack.c.b16 %v273, %v270
  %v355 = vpack.c.b16 %v274, %v271
  %v356 = vpack.c.b16 %v278, %v275
  %v357 = vpack.c.b16 %v279, %v276
  %v358 = vpack.c.b16 %v280, %v277
  %v359 = vpack.c.b16 %v284, %v281
  %v360 = vpack.c.b16 %v285, %v282
  %v361 = vpack.c.b16 %v286, %v283
  %v362 = vpack.c.b16 %v290, %v287
  %v363 = vpack.c.b16 %v291, %v288
  %v364 = vpack.c.b16 %v292, %v289
  %v365 = vpack.c.b16 %v296, %v293
  %v366 = vpack.c.b16 %v297, %v294
  %v367 = vpack.c.b16 %v298, %v295
  %v368 = vpack.c.b16 %v302, %v299
  %v369 = vpack.c.b16 %v303, %v300
  %v370 = vpack.c.b16 %v304, %v301
  %v371 = vpack.c.b16 %v308, %v305
  %v372 = vpack.c.b16 %v309, %v306
  %v373 = vpack.c.b16 %v310, %v307
  %v374 = vpack.c.b16 %v314, %v311
  %v375 = vpack.c.b16 %v315, %v312
  %v376 = vpack.c.b16 %v316, %v313
  %v377 = vpack.c.b16 %v320, %v317
  %v378 = vpack.c.b16 %v321, %v318
  %v379 = vpack.c.b16 %v322, %v319
  %v380 = vpack.c.b16 %v326, %v323
  %v381 = vpack.c.b16 %v327, %v324
  %v382 = vpack.c.b16 %v328, %v325
  %vm437 = vcmask 261120
  %v439 = vsel %vm437, %v141, 0
  %v442 = vsel %vm437, %v144, 0
  %444 = vmatprep.subr.bf16.mxu0 %v351
  %445 = vmatpush1.bf16.msra.mxu0 %v350
  %446 = vmatprep.subr.bf16.mxu0 %v348
  %447 = vmatpush1.bf16.msra.mxu0 %v347
  %448 = vmatprep.subr.bf16.mxu0 %v345
  %449 = vmatpush1.bf16.msra.mxu0 %v344
  %450 = vmatprep.subr.bf16.mxu0 %v342
  %451 = vmatpush1.bf16.msra.mxu0 %v341
  %452 = vmatprep.subr.bf16.mxu0 %v339
  %453 = vmatpush1.bf16.msra.mxu0 %v338
  %454 = vmatprep.subr.bf16.mxu0 %v336
  %455 = vmatpush1.bf16.msra.mxu0 %v335
  %456 = vmatprep.subr.bf16.mxu0 %v333
  %457 = vmatpush1.bf16.msra.mxu0 %v332
  %458 = vmatprep.subr.bf16.mxu0 %v330
  %459 = vmatpush1.bf16.msra.mxu0 %v329
  %460 = vmatprep.subr.bf16.mxu0 %v375
  %461 = vmatpush2.bf16.msra.mxu0 %v374
  %462 = vmatprep.subr.bf16.mxu0 %v372
  %463 = vmatpush2.bf16.msra.mxu0 %v371
  %464 = vmatprep.subr.bf16.mxu0 %v369
  %465 = vmatpush2.bf16.msra.mxu0 %v368
  %466 = vmatprep.subr.bf16.mxu0 %v366
  %467 = vmatpush2.bf16.msra.mxu0 %v365
  %468 = vmatprep.subr.bf16.mxu0 %v363
  %469 = vmatpush2.bf16.msra.mxu0 %v362
  %470 = vmatprep.subr.bf16.mxu0 %v360
  %471 = vmatpush2.bf16.msra.mxu0 %v359
  %472 = vmatprep.subr.bf16.mxu0 %v357
  %473 = vmatpush2.bf16.msra.mxu0 %v356
  %474 = vmatprep.subr.bf16.mxu0 %v354
  %475 = vmatpush2.bf16.msra.mxu0 %v353
  %476 = vmatprep.mubr.bf16.mxu0 %v140
  %477 = vmatmul.mubr.bf16.gmra.mxu0 %v139
  %v478 = vpop.f32.mrf.mxu0
  %v479 = vadd.f32 %v102, %v478
  %v480 = vpop.f32.mrf.mxu0
  %v481 = vadd.f32 %v102, %v480
  %v482 = vpop.f32.mrf.mxu0
  %v483 = vadd.f32 %v107, %v482
  %v484 = vpop.f32.mrf.mxu0
  %v485 = vadd.f32 %v107, %v484
  %486 = vmatprep.mubr.bf16.mxu0 %v143
  %487 = vmatmul.mubr.bf16.gmra.mxu0 %v142
  %v488 = vpop.f32.mrf.mxu0
  %v489 = vadd.f32 %v112, %v488
  %v490 = vpop.f32.mrf.mxu0
  %v491 = vadd.f32 %v112, %v490
  %v492 = vpop.f32.mrf.mxu0
  %v493 = vadd.f32 %v117, %v492
  %v494 = vpop.f32.mrf.mxu0
  %v495 = vadd.f32 %v117, %v494
  %496 = vdwg.mxu0
  %497 = vmatprep.subr.bf16.mxu0 0
  %498 = vmatpush1.bf16.msra.mxu0 0
  %499 = vmatprep.subr.bf16.mxu0 0
  %500 = vmatpush1.bf16.msra.mxu0 0
  %501 = vmatprep.subr.bf16.mxu0 0
  %502 = vmatpush1.bf16.msra.mxu0 0
  %503 = vmatprep.subr.bf16.mxu0 0
  %504 = vmatpush1.bf16.msra.mxu0 0
  %505 = vmatprep.subr.bf16.mxu0 0
  %506 = vmatpush1.bf16.msra.mxu0 0
  %507 = vmatprep.subr.bf16.mxu0 0
  %508 = vmatpush1.bf16.msra.mxu0 0
  %509 = vmatprep.subr.bf16.mxu0 %v381
  %510 = vmatpush1.bf16.msra.mxu0 %v380
  %511 = vmatprep.subr.bf16.mxu0 %v378
  %512 = vmatpush1.bf16.msra.mxu0 %v377
  %513 = vmatprep.subr.bf16.mxu0 0
  %514 = vmatpush2.bf16.msra.mxu0 0
  %515 = vmatprep.subr.bf16.mxu0 0
  %516 = vmatpush2.bf16.msra.mxu0 0
  %517 = vmatprep.subr.bf16.mxu0 0
  %518 = vmatpush2.bf16.msra.mxu0 0
  %519 = vmatprep.subr.bf16.mxu0 0
  %520 = vmatpush2.bf16.msra.mxu0 0
  %521 = vmatprep.subr.bf16.mxu0 0
  %522 = vmatpush2.bf16.msra.mxu0 0
  %523 = vmatprep.subr.bf16.mxu0 0
  %524 = vmatpush2.bf16.msra.mxu0 0
  %525 = vmatprep.subr.bf16.mxu0 0
  %526 = vmatpush2.bf16.msra.mxu0 0
  %527 = vmatprep.subr.bf16.mxu0 0
  %528 = vmatpush2.bf16.msra.mxu0 0
  %529 = vmatprep.mubr.bf16.mxu0 0
  %530 = vmatmul.mubr.bf16.gmra.mxu0 %v439
  %v531 = vpop.f32.mrf.mxu0
  %v532 = vadd.f32 %v479, %v531
  %v533 = vpop.f32.mrf.mxu0
  %v534 = vadd.f32 %v481, %v533
  %v535 = vpop.f32.mrf.mxu0
  %v536 = vadd.f32 %v483, %v535
  %v537 = vpop.f32.mrf.mxu0
  %v538 = vadd.f32 %v485, %v537
  %539 = vmatprep.mubr.bf16.mxu0 0
  %540 = vmatmul.mubr.bf16.gmra.mxu0 %v442
  %v541 = vpop.f32.mrf.mxu0
  %v542 = vadd.f32 %v489, %v541
  %v543 = vpop.f32.mrf.mxu0
  %v544 = vadd.f32 %v491, %v543
  %v545 = vpop.f32.mrf.mxu0
  %v546 = vadd.f32 %v493, %v545
  %v547 = vpop.f32.mrf.mxu0
  %v548 = vadd.f32 %v495, %v547
  %549 = vdwg.mxu0
  %550 = vmatprep.subr.bf16.mxu0 0
  %551 = vmatpush1.bf16.msra.mxu0 %v352
  %552 = vmatprep.subr.bf16.mxu0 0
  %553 = vmatpush1.bf16.msra.mxu0 %v349
  %554 = vmatprep.subr.bf16.mxu0 0
  %555 = vmatpush1.bf16.msra.mxu0 %v346
  %556 = vmatprep.subr.bf16.mxu0 0
  %557 = vmatpush1.bf16.msra.mxu0 %v343
  %558 = vmatprep.subr.bf16.mxu0 0
  %559 = vmatpush1.bf16.msra.mxu0 %v340
  %560 = vmatprep.subr.bf16.mxu0 0
  %561 = vmatpush1.bf16.msra.mxu0 %v337
  %562 = vmatprep.subr.bf16.mxu0 0
  %563 = vmatpush1.bf16.msra.mxu0 %v334
  %564 = vmatprep.subr.bf16.mxu0 0
  %565 = vmatpush1.bf16.msra.mxu0 %v331
  %566 = vmatprep.subr.bf16.mxu0 0
  %567 = vmatpush2.bf16.msra.mxu0 %v376
  %568 = vmatprep.subr.bf16.mxu0 0
  %569 = vmatpush2.bf16.msra.mxu0 %v373
  %570 = vmatprep.subr.bf16.mxu0 0
  %571 = vmatpush2.bf16.msra.mxu0 %v370
  %572 = vmatprep.subr.bf16.mxu0 0
  %573 = vmatpush2.bf16.msra.mxu0 %v367
  %574 = vmatprep.subr.bf16.mxu0 0
  %575 = vmatpush2.bf16.msra.mxu0 %v364
  %576 = vmatprep.subr.bf16.mxu0 0
  %577 = vmatpush2.bf16.msra.mxu0 %v361
  %578 = vmatprep.subr.bf16.mxu0 0
  %579 = vmatpush2.bf16.msra.mxu0 %v358
  %580 = vmatprep.subr.bf16.mxu0 0
  %581 = vmatpush2.bf16.msra.mxu0 %v355
  %582 = vmatprep.mubr.bf16.mxu0 %v140
  %583 = vmatmul.mubr.bf16.gmra.mxu0 %v139
  %v584 = vpop.f32.mrf.mxu0
  %v585 = vadd.f32 %v102, %v584
  %v586 = vpop.f32.mrf.mxu0
  %v587 = vpop.f32.mrf.mxu0
  %v588 = vadd.f32 %v107, %v587
  %v589 = vpop.f32.mrf.mxu0
  %590 = vmatprep.mubr.bf16.mxu0 %v143
  %591 = vmatmul.mubr.bf16.gmra.mxu0 %v142
  %v592 = vpop.f32.mrf.mxu0
  %v593 = vadd.f32 %v112, %v592
  %v594 = vpop.f32.mrf.mxu0
  %v595 = vpop.f32.mrf.mxu0
  %v596 = vadd.f32 %v117, %v595
  %v597 = vpop.f32.mrf.mxu0
  %598 = vdwg.mxu0
  %599 = vmatprep.subr.bf16.mxu0 0
  %600 = vmatpush1.bf16.msra.mxu0 0
  %601 = vmatprep.subr.bf16.mxu0 0
  %602 = vmatpush1.bf16.msra.mxu0 0
  %603 = vmatprep.subr.bf16.mxu0 0
  %604 = vmatpush1.bf16.msra.mxu0 0
  %605 = vmatprep.subr.bf16.mxu0 0
  %606 = vmatpush1.bf16.msra.mxu0 0
  %607 = vmatprep.subr.bf16.mxu0 0
  %608 = vmatpush1.bf16.msra.mxu0 0
  %609 = vmatprep.subr.bf16.mxu0 0
  %610 = vmatpush1.bf16.msra.mxu0 0
  %611 = vmatprep.subr.bf16.mxu0 0
  %612 = vmatpush1.bf16.msra.mxu0 %v382
  %613 = vmatprep.subr.bf16.mxu0 0
  %614 = vmatpush1.bf16.msra.mxu0 %v379
  %615 = vmatprep.subr.bf16.mxu0 0
  %616 = vmatpush2.bf16.msra.mxu0 0
  %617 = vmatprep.subr.bf16.mxu0 0
  %618 = vmatpush2.bf16.msra.mxu0 0
  %619 = vmatprep.subr.bf16.mxu0 0
  %620 = vmatpush2.bf16.msra.mxu0 0
  %621 = vmatprep.subr.bf16.mxu0 0
  %622 = vmatpush2.bf16.msra.mxu0 0
  %623 = vmatprep.subr.bf16.mxu0 0
  %624 = vmatpush2.bf16.msra.mxu0 0
  %625 = vmatprep.subr.bf16.mxu0 0
  %626 = vmatpush2.bf16.msra.mxu0 0
  %627 = vmatprep.subr.bf16.mxu0 0
  %628 = vmatpush2.bf16.msra.mxu0 0
  %629 = vmatprep.subr.bf16.mxu0 0
  %630 = vmatpush2.bf16.msra.mxu0 0
  %631 = vmatprep.mubr.bf16.mxu0 0
  %632 = vmatmul.mubr.bf16.gmra.mxu0 %v439
  %v633 = vpop.f32.mrf.mxu0
  %v634 = vadd.f32 %v585, %v633
  %v635 = vpop.f32.mrf.mxu0
  %v636 = vpop.f32.mrf.mxu0
  %v637 = vadd.f32 %v588, %v636
  %v638 = vpop.f32.mrf.mxu0
  %639 = vmatprep.mubr.bf16.mxu0 0
  %640 = vmatmul.mubr.bf16.gmra.mxu0 %v442
  %v641 = vpop.f32.mrf.mxu0
  %v642 = vadd.f32 %v593, %v641
  %v643 = vpop.f32.mrf.mxu0
  %v644 = vpop.f32.mrf.mxu0
  %v645 = vadd.f32 %v596, %v644
  %v646 = vpop.f32.mrf.mxu0
  %647 = vdwg.mxu0
  %v648 = vmax.f32 %v532, 0.0
  %v649 = vmax.f32 %v534, 0.0
  %v650 = vmax.f32 %v634, 0.0
  %v651 = vmax.f32 %v536, 0.0
  %v652 = vmax.f32 %v538, 0.0
  %v653 = vmax.f32 %v637, 0.0
  %v654 = vmax.f32 %v542, 0.0
  %v655 = vmax.f32 %v544, 0.0
  %v656 = vmax.f32 %v642, 0.0
  %v657 = vmax.f32 %v546, 0.0
  %v658 = vmax.f32 %v548, 0.0
  %v659 = vmax.f32 %v645, 0.0
  %v660 = vpack.c.bf16 %v651, %v648
  %v661 = vpack.c.bf16 %v652, %v649
  %v662 = vpack.c.bf16 %v653, %v650
  %v663 = vpack.c.bf16 %v657, %v654
  %v664 = vpack.c.bf16 %v658, %v655
  %v665 = vpack.c.bf16 %v659, %v656
  %v672 = vunpack.c.l.b16 %v660
  %v673 = vunpack.c.l.b16 %v661
  %v674 = vunpack.c.l.b16 %v662
  %v675 = vunpack.c.h.b16 %v660
  %v676 = vunpack.c.h.b16 %v661
  %v677 = vunpack.c.h.b16 %v662
  %v678 = vunpack.c.l.b16 %v663
  %v679 = vunpack.c.l.b16 %v664
  %v680 = vunpack.c.l.b16 %v665
  %v681 = vunpack.c.h.b16 %v663
  %v682 = vunpack.c.h.b16 %v664
  %v683 = vunpack.c.h.b16 %v665
  %v684 = vpack.c.b16 %v673, %v672
  %v685 = vpack.c.b16 %v674, %v674
  %v686 = vpack.c.b16 %v676, %v675
  %v687 = vpack.c.b16 %v677, %v677
  %v688 = vpack.c.b16 %v679, %v678
  %v689 = vpack.c.b16 %v680, %v680
  %v690 = vpack.c.b16 %v682, %v681
  %v691 = vpack.c.b16 %v683, %v683
  %700 = vst [vmem:[%s3] sm:$0xff] %v684
  %vm701 = vcmask 257024
  %702 = vst.msk [vmem:[%s3 + $0x8] sm:$0xf] %vm701, %v685
  %703 = vst [vmem:[%s3 + $0xc] sm:$0xff] %v686
  %704 = vst.msk [vmem:[%s3 + $0x14] sm:$0xf] %vm701, %v687
  %705 = vst [vmem:[%s3 + $0x18] sm:$0xff] %v688
  %706 = vst.msk [vmem:[%s3 + $0x20] sm:$0xf] %vm701, %v689
  %707 = vst [vmem:[%s3 + $0x24] sm:$0xff] %v690
  %708 = vst.msk [vmem:[%s3 + $0x2c] sm:$0xf] %vm701, %v691
  // Predicated region
  $region14: #{encoder_forward.7} parent=0 // pred_check
    _
  $region15: #{encoder_forward.7} parent=0 // pred_check_branch
    %710 = sbr.rel (0) target = $region17
  $region16: #{encoder_forward.7} parent=0 // pred_region
    _
  $region17: #{encoder_forward.7} parent=0 // pred_fallthru
    _
  // Predicated region
  $region18: #{encoder_forward.7} parent=0 // pred_check
    _
  $region19: #{encoder_forward.7} parent=0 // pred_check_branch
    %712 = sbr.rel (0) target = $region21
  $region20: #{encoder_forward.7} parent=0 // pred_region
    _
  $region21: #{encoder_forward.7} parent=0 // pred_fallthru
    _

// kernel: encoder_forward.8
$region0: #{encoder_forward.8}
  #allocation0 [shape = 'u32[]', space=smem, size = 0x4, offset = 0x4, fixed_abs, tag = 'smem constant byte address 0x4 - core index']
  #allocation1 [shape = 'u32[144,128]{1,0:T(1,128)}', space=vmem, size = 0x12000, scoped, tag = 'internal scratch']
  %s0 = inlined_call_operand.vmem [shape: bf16[32,288], index: 0, kind: input, shape index: {}]
  %s1 = inlined_call_operand.vmem [shape: bf16[288,72], index: 1, kind: input, shape index: {}]
  %s2 = inlined_call_operand.vmem [shape: f32[32,1], index: 2, kind: input, shape index: {}]
  %s3 = inlined_call_operand.vmem [shape: bf16[32,72], index: 3, kind: output, shape index: {}]
  %s4 = sld [smem:[#allocation0]]
  $region22: #{encoder_forward.8} parent=0
    _
  %s6 = ssub.s32 1, %s4
  %s7 = scalar_select 0, %s6, %s4
  // Predicated region
  $region2: #{encoder_forward.8} parent=0 // pred_check
    _
  $region3: #{encoder_forward.8} parent=0 // pred_check_branch
    %9 = sbr.rel (0) target = $region5
  $region4: #{encoder_forward.8} parent=0 // pred_region
    _
  $region5: #{encoder_forward.8} parent=0 // pred_fallthru
    _
  // Predicated region
  $region6: #{encoder_forward.8} parent=0 // pred_check
    _
  $region7: #{encoder_forward.8} parent=0 // pred_check_branch
    %11 = sbr.rel (0) target = $region9
  $region8: #{encoder_forward.8} parent=0 // pred_region
    _
  $region9: #{encoder_forward.8} parent=0 // pred_fallthru
    _
  // Predicated region
  $region10: #{encoder_forward.8} parent=0 // pred_check
    _
  $region11: #{encoder_forward.8} parent=0 // pred_check_branch
    %13 = sbr.rel (0) target = $region13
  $region12: #{encoder_forward.8} parent=0 // pred_region
    _
  $region13: #{encoder_forward.8} parent=0 // pred_fallthru
    _
  %v15 = vld [vmem:[%s0] sm:$0xff]
  %v16 = vld [vmem:[%s0 + $0x8] sm:$0xf]
  %v17 = vld [vmem:[%s0 + $0xc] sm:$0xff]
  %v18 = vld [vmem:[%s0 + $0x14] sm:$0xf]
  %v19 = vld [vmem:[%s0 + $0x18] sm:$0xff]
  %v20 = vld [vmem:[%s0 + $0x20] sm:$0xf]
  %v21 = vld [vmem:[%s0 + $0x24] sm:$0xff]
  %v22 = vld [vmem:[%s0 + $0x2c] sm:$0xf]
  %v23 = vld [vmem:[%s1] sm:$0xf]
  %v24 = vld [vmem:[%s1 + $0x4] sm:$0xf]
  %v25 = vld [vmem:[%s1 + $0x8] sm:$0xf]
  %v26 = vld [vmem:[%s1 + $0xc] sm:$0xf]
  %v27 = vld [vmem:[%s1 + $0x10] sm:$0xf]
  %v28 = vld [vmem:[%s1 + $0x14] sm:$0xf]
  %v29 = vld [vmem:[%s1 + $0x18] sm:$0xf]
  %v30 = vld [vmem:[%s1 + $0x1c] sm:$0xf]
  %v31 = vld [vmem:[%s1 + $0x20] sm:$0xf]
  %v32 = vld [vmem:[%s1 + $0x24] sm:$0xf]
  %v33 = vld [vmem:[%s1 + $0x28] sm:$0xf]
  %v34 = vld [vmem:[%s1 + $0x2c] sm:$0xf]
  %v35 = vld [vmem:[%s1 + $0x30] sm:$0xf]
  %v36 = vld [vmem:[%s1 + $0x34] sm:$0xf]
  %v37 = vld [vmem:[%s1 + $0x38] sm:$0xf]
  %v38 = vld [vmem:[%s1 + $0x3c] sm:$0xf]
  %v39 = vld [vmem:[%s1 + $0x40] sm:$0xf]
  %v40 = vld [vmem:[%s1 + $0x44] sm:$0xf]
  %v41 = vld [vmem:[%s1 + $0x48] sm:$0xf]
  %v42 = vld [vmem:[%s1 + $0x4c] sm:$0xf]
  %v43 = vld [vmem:[%s1 + $0x50] sm:$0xf]
  %v44 = vld [vmem:[%s1 + $0x54] sm:$0xf]
  %v45 = vld [vmem:[%s1 + $0x58] sm:$0xf]
  %v46 = vld [vmem:[%s1 + $0x5c] sm:$0xf]
  %v47 = vld [vmem:[%s1 + $0x60] sm:$0xf]
  %v48 = vld [vmem:[%s1 + $0x64] sm:$0xf]
  %v49 = vld [vmem:[%s1 + $0x68] sm:$0xf]
  %v50 = vld [vmem:[%s1 + $0x6c] sm:$0xf]
  %v51 = vld [vmem:[%s1 + $0x70] sm:$0xf]
  %v52 = vld [vmem:[%s1 + $0x74] sm:$0xf]
  %v53 = vld [vmem:[%s1 + $0x78] sm:$0xf]
  %v54 = vld [vmem:[%s1 + $0x7c] sm:$0xf]
  %v55 = vld [vmem:[%s1 + $0x80] sm:$0xf]
  %v56 = vld [vmem:[%s1 + $0x84] sm:$0xf]
  %v57 = vld [vmem:[%s1 + $0x88] sm:$0xf]
  %v58 = vld [vmem:[%s1 + $0x8c] sm:$0xf]
  %v59 = vld [vmem:[%s2] sm:$0xff]
  %v60 = vld [vmem:[%s2 + $0x8] sm:$0xff]
  %v61 = vld [vmem:[%s2 + $0x10] sm:$0xff]
  %v62 = vld [vmem:[%s2 + $0x18] sm:$0xff]
  %64 = vset.pattern.permute.xlu0 0
  %65 = vperm.xlu0 %64, %v59
  %v66 = vpop.permute.xlu0 %65
  %69 = vset.pattern.permute.xlu0 0
  %70 = vperm.xlu0 %69, %v60
  %v71 = vpop.permute.xlu0 %70
  %74 = vset.pattern.permute.xlu0 0
  %75 = vperm.xlu0 %74, %v61
  %v76 = vpop.permute.xlu0 %75
  %79 = vset.pattern.permute.xlu0 0
  %80 = vperm.xlu0 %79, %v62
  %v81 = vpop.permute.xlu0 %80
  %v91 = vunpack.c.l.b16 %v15
  %v92 = vunpack.c.h.b16 %v15
  %v93 = vunpack.c.l.b16 %v16
  %v94 = vunpack.c.l.b16 %v17
  %v95 = vunpack.c.h.b16 %v17
  %v96 = vunpack.c.l.b16 %v18
  %v97 = vunpack.c.l.b16 %v19
  %v98 = vunpack.c.h.b16 %v19
  %v99 = vunpack.c.l.b16 %v20
  %v100 = vunpack.c.l.b16 %v21
  %v101 = vunpack.c.h.b16 %v21
  %v102 = vunpack.c.l.b16 %v22
  %v103 = vpack.c.b16 %v94, %v91
  %v104 = vpack.c.b16 %v95, %v92
  %v105 = vpack.c.b16 %v96, %v93
  %v106 = vpack.c.b16 %v100, %v97
  %v107 = vpack.c.b16 %v101, %v98
  %v108 = vpack.c.b16 %v102, %v99
  %v149 = vunpack.c.l.b16 %v23
  %v150 = vunpack.c.l.b16 %v24
  %v151 = vunpack.c.l.b16 %v25
  %v152 = vunpack.c.l.b16 %v26
  %v153 = vunpack.c.l.b16 %v27
  %v154 = vunpack.c.l.b16 %v28
  %v155 = vunpack.c.l.b16 %v29
  %v156 = vunpack.c.l.b16 %v30
  %v157 = vunpack.c.l.b16 %v31
  %v158 = vunpack.c.l.b16 %v32
  %v159 = vunpack.c.l.b16 %v33
  %v160 = vunpack.c.l.b16 %v34
  %v161 = vunpack.c.l.b16 %v35
  %v162 = vunpack.c.l.b16 %v36
  %v163 = vunpack.c.l.b16 %v37
  %v164 = vunpack.c.l.b16 %v38
  %v165 = vunpack.c.l.b16 %v39
  %v166 = vunpack.c.l.b16 %v40
  %v167 = vunpack.c.l.b16 %v41
  %v168 = vunpack.c.l.b16 %v42
  %v169 = vunpack.c.l.b16 %v43
  %v170 = vunpack.c.l.b16 %v44
  %v171 = vunpack.c.l.b16 %v45
  %v172 = vunpack.c.l.b16 %v46
  %v173 = vunpack.c.l.b16 %v47
  %v174 = vunpack.c.l.b16 %v48
  %v175 = vunpack.c.l.b16 %v49
  %v176 = vunpack.c.l.b16 %v50
  %v177 = vunpack.c.l.b16 %v51
  %v178 = vunpack.c.l.b16 %v52
  %v179 = vunpack.c.l.b16 %v53
  %v180 = vunpack.c.l.b16 %v54
  %v181 = vunpack.c.l.b16 %v55
  %v182 = vunpack.c.l.b16 %v56
  %v183 = vunpack.c.l.b16 %v57
  %v184 = vunpack.c.l.b16 %v58
  %v185 = vpack.c.b16 %v150, %v149
  %v186 = vpack.c.b16 %v152, %v151
  %v187 = vpack.c.b16 %v154, %v153
  %v188 = vpack.c.b16 %v156, %v155
  %v189 = vpack.c.b16 %v158, %v157
  %v190 = vpack.c.b16 %v160, %v159
  %v191 = vpack.c.b16 %v162, %v161
  %v192 = vpack.c.b16 %v164, %v163
  %v193 = vpack.c.b16 %v166, %v165
  %v194 = vpack.c.b16 %v168, %v167
  %v195 = vpack.c.b16 %v170, %v169
  %v196 = vpack.c.b16 %v172, %v171
  %v197 = vpack.c.b16 %v174, %v173
  %v198 = vpack.c.b16 %v176, %v175
  %v199 = vpack.c.b16 %v178, %v177
  %v200 = vpack.c.b16 %v180, %v179
  %v201 = vpack.c.b16 %v182, %v181
  %v202 = vpack.c.b16 %v184, %v183
  %vm221 = vcmask 261120
  %v223 = vsel %vm221, %v105, 0
  %v226 = vsel %vm221, %v108, 0
  %228 = vmatprep.subr.bf16.mxu0 0
  %229 = vmatpush1.bf16.msra.mxu0 %v192
  %230 = vmatprep.subr.bf16.mxu0 0
  %231 = vmatpush1.bf16.msra.mxu0 %v191
  %232 = vmatprep.subr.bf16.mxu0 0
  %233 = vmatpush1.bf16.msra.mxu0 %v190
  %234 = vmatprep.subr.bf16.mxu0 0
  %235 = vmatpush1.bf16.msra.mxu0 %v189
  %236 = vmatprep.subr.bf16.mxu0 0
  %237 = vmatpush1.bf16.msra.mxu0 %v188
  %238 = vmatprep.subr.bf16.mxu0 0
  %239 = vmatpush1.bf16.msra.mxu0 %v187
  %240 = vmatprep.subr.bf16.mxu0 0
  %241 = vmatpush1.bf16.msra.mxu0 %v186
  %242 = vmatprep.subr.bf16.mxu0 0
  %243 = vmatpush1.bf16.msra.mxu0 %v185
  %244 = vmatprep.subr.bf16.mxu0 0
  %245 = vmatpush2.bf16.msra.mxu0 %v200
  %246 = vmatprep.subr.bf16.mxu0 0
  %247 = vmatpush2.bf16.msra.mxu0 %v199
  %248 = vmatprep.subr.bf16.mxu0 0
  %249 = vmatpush2.bf16.msra.mxu0 %v198
  %250 = vmatprep.subr.bf16.mxu0 0
  %251 = vmatpush2.bf16.msra.mxu0 %v197
  %252 = vmatprep.subr.bf16.mxu0 0
  %253 = vmatpush2.bf16.msra.mxu0 %v196
  %254 = vmatprep.subr.bf16.mxu0 0
  %255 = vmatpush2.bf16.msra.mxu0 %v195
  %256 = vmatprep.subr.bf16.mxu0 0
  %257 = vmatpush2.bf16.msra.mxu0 %v194
  %258 = vmatprep.subr.bf16.mxu0 0
  %259 = vmatpush2.bf16.msra.mxu0 %v193
  %260 = vmatprep.mubr.bf16.mxu0 %v104
  %261 = vmatmul.mubr.bf16.gmra.mxu0 %v103
  %v262 = vpop.f32.mrf.mxu0
  %v263 = vadd.f32 %v66, %v262
  %v264 = vpop.f32.mrf.mxu0
  %v265 = vpop.f32.mrf.mxu0
  %v266 = vadd.f32 %v71, %v265
  %v267 = vpop.f32.mrf.mxu0
  %268 = vmatprep.mubr.bf16.mxu0 %v107
  %269 = vmatmul.mubr.bf16.gmra.mxu0 %v106
  %v270 = vpop.f32.mrf.mxu0
  %v271 = vadd.f32 %v76, %v270
  %v272 = vpop.f32.mrf.mxu0
  %v273 = vpop.f32.mrf.mxu0
  %v274 = vadd.f32 %v81, %v273
  %v275 = vpop.f32.mrf.mxu0
  %276 = vdwg.mxu0
  %277 = vmatprep.subr.bf16.mxu0 0
  %278 = vmatpush1.bf16.msra.mxu0 0
  %279 = vmatprep.subr.bf16.mxu0 0
  %280 = vmatpush1.bf16.msra.mxu0 0
  %281 = vmatprep.subr.bf16.mxu0 0
  %282 = vmatpush1.bf16.msra.mxu0 0
  %283 = vmatprep.subr.bf16.mxu0 0
  %284 = vmatpush1.bf16.msra.mxu0 0
  %285 = vmatprep.subr.bf16.mxu0 0
  %286 = vmatpush1.bf16.msra.mxu0 0
  %287 = vmatprep.subr.bf16.mxu0 0
  %288 = vmatpush1.bf16.msra.mxu0 0
  %289 = vmatprep.subr.bf16.mxu0 0
  %290 = vmatpush1.bf16.msra.mxu0 %v202
  %291 = vmatprep.subr.bf16.mxu0 0
  %292 = vmatpush1.bf16.msra.mxu0 %v201
  %293 = vmatprep.subr.bf16.mxu0 0
  %294 = vmatpush2.bf16.msra.mxu0 0
  %295 = vmatprep.subr.bf16.mxu0 0
  %296 = vmatpush2.bf16.msra.mxu0 0
  %297 = vmatprep.subr.bf16.mxu0 0
  %298 = vmatpush2.bf16.msra.mxu0 0
  %299 = vmatprep.subr.bf16.mxu0 0
  %300 = vmatpush2.bf16.msra.mxu0 0
  %301 = vmatprep.subr.bf16.mxu0 0
  %302 = vmatpush2.bf16.msra.mxu0 0
  %303 = vmatprep.subr.bf16.mxu0 0
  %304 = vmatpush2.bf16.msra.mxu0 0
  %305 = vmatprep.subr.bf16.mxu0 0
  %306 = vmatpush2.bf16.msra.mxu0 0
  %307 = vmatprep.subr.bf16.mxu0 0
  %308 = vmatpush2.bf16.msra.mxu0 0
  %309 = vmatprep.mubr.bf16.mxu0 0
  %310 = vmatmul.mubr.bf16.gmra.mxu0 %v223
  %v311 = vpop.f32.mrf.mxu0
  %v312 = vadd.f32 %v263, %v311
  %v313 = vpop.f32.mrf.mxu0
  %v314 = vpop.f32.mrf.mxu0
  %v315 = vadd.f32 %v266, %v314
  %v316 = vpop.f32.mrf.mxu0
  %317 = vmatprep.mubr.bf16.mxu0 0
  %318 = vmatmul.mubr.bf16.gmra.mxu0 %v226
  %v319 = vpop.f32.mrf.mxu0
  %v320 = vadd.f32 %v271, %v319
  %v321 = vpop.f32.mrf.mxu0
  %v322 = vpop.f32.mrf.mxu0
  %v323 = vadd.f32 %v274, %v322
  %v324 = vpop.f32.mrf.mxu0
  %325 = vdwg.mxu0
  %v326 = vmax.f32 %v312, 0.0
  %v327 = vmax.f32 %v315, 0.0
  %v328 = vmax.f32 %v320, 0.0
  %v329 = vmax.f32 %v323, 0.0
  %v330 = vpack.c.bf16 %v327, %v326
  %v331 = vpack.c.bf16 %v329, %v328
  %v334 = vunpack.c.l.b16 %v330
  %v335 = vunpack.c.h.b16 %v330
  %v336 = vunpack.c.l.b16 %v331
  %v337 = vunpack.c.h.b16 %v331
  %v338 = vpack.c.b16 %v334, %v334
  %v339 = vpack.c.b16 %v335, %v335
  %v340 = vpack.c.b16 %v336, %v336
  %v341 = vpack.c.b16 %v337, %v337
  %vm346 = vcmask 584704
  %347 = vst.msk [vmem:[%s3] sm:$0xf] %vm346, %v338
  %348 = vst.msk [vmem:[%s3 + $0x4] sm:$0xf] %vm346, %v339
  %349 = vst.msk [vmem:[%s3 + $0x8] sm:$0xf] %vm346, %v340
  %350 = vst.msk [vmem:[%s3 + $0xc] sm:$0xf] %vm346, %v341
  // Predicated region
  $region14: #{encoder_forward.8} parent=0 // pred_check
    _
  $region15: #{encoder_forward.8} parent=0 // pred_check_branch
    %352 = sbr.rel (0) target = $region17
  $region16: #{encoder_forward.8} parent=0 // pred_region
    _
  $region17: #{encoder_forward.8} parent=0 // pred_fallthru
    _
  // Predicated region
  $region18: #{encoder_forward.8} parent=0 // pred_check
    _
  $region19: #{encoder_forward.8} parent=0 // pred_check_branch
    %354 = sbr.rel (0) target = $region21
  $region20: #{encoder_forward.8} parent=0 // pred_region
    _
  $region21: #{encoder_forward.8} parent=0 // pred_fallthru
    _

// kernel: encoder_forward.9
$region0: #{encoder_forward.9}
  #allocation0 [shape = 'u32[]', space=smem, size = 0x4, offset = 0x4, fixed_abs, tag = 'smem constant byte address 0x4 - core index']
  #allocation1 [shape = 'u32[144,128]{1,0:T(1,128)}', space=vmem, size = 0x12000, scoped, tag = 'internal scratch']
  %s0 = inlined_call_operand.vmem [shape: bf16[2,1152], index: 0, kind: input, shape index: {}]
  %s1 = inlined_call_operand.vmem [shape: bf16[1152,512], index: 1, kind: input, shape index: {}]
  %s2 = inlined_call_operand.vmem [shape: f32[1,512], index: 2, kind: input, shape index: {}]
  %s3 = inlined_call_operand.hbm [shape: f32[2,512], index: 3, kind: output, shape index: {}]
  %s4 = sld [smem:[#allocation0]]
  $region22: #{encoder_forward.9} parent=0
    _
  %s6 = ssub.s32 1, %s4
  %s7 = scalar_select 0, %s6, %s4
  $region1: #{encoder_forward.9} parent=0
    #allocation2 [shape = 'u8[4096]{0}', space=vmem, size = 0x1000, scoped, tag = 'output window, operand 0, single buffered']
    #allocation3 [shape = 's32[1]{0}', space=sflag, size = 0x4, scoped, tag = 'scoped memory for encoder_forward.9']
    %8 = vsyncpa [#allocation3], 0
    // Predicated region
    $region2: #{encoder_forward.9} parent=1 // pred_check
      _
    $region3: #{encoder_forward.9} parent=1 // pred_check_branch
      %10 = sbr.rel (0) target = $region5
    $region4: #{encoder_forward.9} parent=1 // pred_region
      _
    $region5: #{encoder_forward.9} parent=1 // pred_fallthru
      _
    // Predicated region
    $region6: #{encoder_forward.9} parent=1 // pred_check
      _
    $region7: #{encoder_forward.9} parent=1 // pred_check_branch
      %12 = sbr.rel (0) target = $region9
    $region8: #{encoder_forward.9} parent=1 // pred_region
      _
    $region9: #{encoder_forward.9} parent=1 // pred_fallthru
      _
    // Predicated region
    $region10: #{encoder_forward.9} parent=1 // pred_check
      _
    $region11: #{encoder_forward.9} parent=1 // pred_check_branch
      %14 = sbr.rel (0) target = $region13
    $region12: #{encoder_forward.9} parent=1 // pred_region
      _
    $region13: #{encoder_forward.9} parent=1 // pred_fallthru
      _
    %v16 = vld [vmem:[%s0] sm:$0xff]
    %v17 = vld [vmem:[%s0 + $0x8] sm:$0x1]
    %v18 = vld [vmem:[%s1] sm:$0xff]
    %v19 = vld [vmem:[%s1 + $0x8] sm:$0xff]
    %v20 = vld [vmem:[%s1 + $0x10] sm:$0xff]
    %v21 = vld [vmem:[%s1 + $0x18] sm:$0xff]
    %v22 = vld [vmem:[%s1 + $0x20] sm:$0xff]
    %v23 = vld [vmem:[%s1 + $0x28] sm:$0xff]
    %v24 = vld [vmem:[%s1 + $0x30] sm:$0xff]
    %v25 = vld [vmem:[%s1 + $0x38] sm:$0xff]
    %v26 = vld [vmem:[%s1 + $0x40] sm:$0xff]
    %v27 = vld [vmem:[%s1 + $0x48] sm:$0xff]
    %v28 = vld [vmem:[%s1 + $0x50] sm:$0xff]
    %v29 = vld [vmem:[%s1 + $0x58] sm:$0xff]
    %v30 = vld [vmem:[%s1 + $0x60] sm:$0xff]
    %v31 = vld [vmem:[%s1 + $0x68] sm:$0xff]
    %v32 = vld [vmem:[%s1 + $0x70] sm:$0xff]
    %v33 = vld [vmem:[%s1 + $0x78] sm:$0xff]
    %v34 = vld [vmem:[%s1 + $0x80] sm:$0xff]
    %v35 = vld [vmem:[%s1 + $0x88] sm:$0xff]
    %v36 = vld [vmem:[%s1 + $0x90] sm:$0xff]
    %v37 = vld [vmem:[%s1 + $0x98] sm:$0xff]
    %v38 = vld [vmem:[%s1 + $0xa0] sm:$0xff]
    %v39 = vld [vmem:[%s1 + $0xa8] sm:$0xff]
    %v40 = vld [vmem:[%s1 + $0xb0] sm:$0xff]
    %v41 = vld [vmem:[%s1 + $0xb8] sm:$0xff]
    %v42 = vld [vmem:[%s1 + $0xc0] sm:$0xff]
    %v43 = vld [vmem:[%s1 + $0xc8] sm:$0xff]
    %v44 = vld [vmem:[%s1 + $0xd0] sm:$0xff]
    %v45 = vld [vmem:[%s1 + $0xd8] sm:$0xff]
    %v46 = vld [vmem:[%s1 + $0xe0] sm:$0xff]
    %v47 = vld [vmem:[%s1 + $0xe8] sm:$0xff]
    %v48 = vld [vmem:[%s1 + $0xf0] sm:$0xff]
    %v49 = vld [vmem:[%s1 + $0xf8] sm:$0xff]
    %v50 = vld [vmem:[%s1 + $0x100] sm:$0xff]
    %v51 = vld [vmem:[%s1 + $0x108] sm:$0xff]
    %v52 = vld [vmem:[%s1 + $0x110] sm:$0xff]
    %v53 = vld [vmem:[%s1 + $0x118] sm:$0xff]
    %v54 = vld [vmem:[%s1 + $0x120] sm:$0xff]
    %v55 = vld [vmem:[%s1 + $0x128] sm:$0xff]
    %v56 = vld [vmem:[%s1 + $0x130] sm:$0xff]
    %v57 = vld [vmem:[%s1 + $0x138] sm:$0xff]
    %v58 = vld [vmem:[%s1 + $0x140] sm:$0xff]
    %v59 = vld [vmem:[%s1 + $0x148] sm:$0xff]
    %v60 = vld [vmem:[%s1 + $0x150] sm:$0xff]
    %v61 = vld [vmem:[%s1 + $0x158] sm:$0xff]
    %v62 = vld [vmem:[%s1 + $0x160] sm:$0xff]
    %v63 = vld [vmem:[%s1 + $0x168] sm:$0xff]
    %v64 = vld [vmem:[%s1 + $0x170] sm:$0xff]
    %v65 = vld [vmem:[%s1 + $0x178] sm:$0xff]
    %v66 = vld [vmem:[%s1 + $0x180] sm:$0xff]
    %v67 = vld [vmem:[%s1 + $0x188] sm:$0xff]
    %v68 = vld [vmem:[%s1 + $0x190] sm:$0xff]
    %v69 = vld [vmem:[%s1 + $0x198] sm:$0xff]
    %v70 = vld [vmem:[%s1 + $0x1a0] sm:$0xff]
    %v71 = vld [vmem:[%s1 + $0x1a8] sm:$0xff]
    %v72 = vld [vmem:[%s1 + $0x1b0] sm:$0xff]
    %v73 = vld [vmem:[%s1 + $0x1b8] sm:$0xff]
    %v74 = vld [vmem:[%s1 + $0x1c0] sm:$0xff]
    %v75 = vld [vmem:[%s1 + $0x1c8] sm:$0xff]
    %v76 = vld [vmem:[%s1 + $0x1d0] sm:$0xff]
    %v77 = vld [vmem:[%s1 + $0x1d8] sm:$0xff]
    %v78 = vld [vmem:[%s1 + $0x1e0] sm:$0xff]
    %v79 = vld [vmem:[%s1 + $0x1e8] sm:$0xff]
    %v80 = vld [vmem:[%s1 + $0x1f0] sm:$0xff]
    %v81 = vld [vmem:[%s1 + $0x1f8] sm:$0xff]
    %v82 = vld [vmem:[%s1 + $0x200] sm:$0xff]
    %v83 = vld [vmem:[%s1 + $0x208] sm:$0xff]
    %v84 = vld [vmem:[%s1 + $0x210] sm:$0xff]
    %v85 = vld [vmem:[%s1 + $0x218] sm:$0xff]
    %v86 = vld [vmem:[%s1 + $0x220] sm:$0xff]
    %v87 = vld [vmem:[%s1 + $0x228] sm:$0xff]
    %v88 = vld [vmem:[%s1 + $0x230] sm:$0xff]
    %v89 = vld [vmem:[%s1 + $0x238] sm:$0xff]
    %v90 = vld [vmem:[%s1 + $0x240] sm:$0xff]
    %v91 = vld [vmem:[%s1 + $0x248] sm:$0xff]
    %v92 = vld [vmem:[%s1 + $0x250] sm:$0xff]
    %v93 = vld [vmem:[%s1 + $0x258] sm:$0xff]
    %v94 = vld [vmem:[%s1 + $0x260] sm:$0xff]
    %v95 = vld [vmem:[%s1 + $0x268] sm:$0xff]
    %v96 = vld [vmem:[%s1 + $0x270] sm:$0xff]
    %v97 = vld [vmem:[%s1 + $0x278] sm:$0xff]
    %v98 = vld [vmem:[%s1 + $0x280] sm:$0xff]
    %v99 = vld [vmem:[%s1 + $0x288] sm:$0xff]
    %v100 = vld [vmem:[%s1 + $0x290] sm:$0xff]
    %v101 = vld [vmem:[%s1 + $0x298] sm:$0xff]
    %v102 = vld [vmem:[%s1 + $0x2a0] sm:$0xff]
    %v103 = vld [vmem:[%s1 + $0x2a8] sm:$0xff]
    %v104 = vld [vmem:[%s1 + $0x2b0] sm:$0xff]
    %v105 = vld [vmem:[%s1 + $0x2b8] sm:$0xff]
    %v106 = vld [vmem:[%s1 + $0x2c0] sm:$0xff]
    %v107 = vld [vmem:[%s1 + $0x2c8] sm:$0xff]
    %v108 = vld [vmem:[%s1 + $0x2d0] sm:$0xff]
    %v109 = vld [vmem:[%s1 + $0x2d8] sm:$0xff]
    %v110 = vld [vmem:[%s1 + $0x2e0] sm:$0xff]
    %v111 = vld [vmem:[%s1 + $0x2e8] sm:$0xff]
    %v112 = vld [vmem:[%s1 + $0x2f0] sm:$0xff]
    %v113 = vld [vmem:[%s1 + $0x2f8] sm:$0xff]
    %v114 = vld [vmem:[%s1 + $0x300] sm:$0xff]
    %v115 = vld [vmem:[%s1 + $0x308] sm:$0xff]
    %v116 = vld [vmem:[%s1 + $0x310] sm:$0xff]
    %v117 = vld [vmem:[%s1 + $0x318] sm:$0xff]
    %v118 = vld [vmem:[%s1 + $0x320] sm:$0xff]
    %v119 = vld [vmem:[%s1 + $0x328] sm:$0xff]
    %v120 = vld [vmem:[%s1 + $0x330] sm:$0xff]
    %v121 = vld [vmem:[%s1 + $0x338] sm:$0xff]
    %v122 = vld [vmem:[%s1 + $0x340] sm:$0xff]
    %v123 = vld [vmem:[%s1 + $0x348] sm:$0xff]
    %v124 = vld [vmem:[%s1 + $0x350] sm:$0xff]
    %v125 = vld [vmem:[%s1 + $0x358] sm:$0xff]
    %v126 = vld [vmem:[%s1 + $0x360] sm:$0xff]
    %v127 = vld [vmem:[%s1 + $0x368] sm:$0xff]
    %v128 = vld [vmem:[%s1 + $0x370] sm:$0xff]
    %v129 = vld [vmem:[%s1 + $0x378] sm:$0xff]
    %v130 = vld [vmem:[%s1 + $0x380] sm:$0xff]
    %v131 = vld [vmem:[%s1 + $0x388] sm:$0xff]
    %v132 = vld [vmem:[%s1 + $0x390] sm:$0xff]
    %v133 = vld [vmem:[%s1 + $0x398] sm:$0xff]
    %v134 = vld [vmem:[%s1 + $0x3a0] sm:$0xff]
    %v135 = vld [vmem:[%s1 + $0x3a8] sm:$0xff]
    %v136 = vld [vmem:[%s1 + $0x3b0] sm:$0xff]
    %v137 = vld [vmem:[%s1 + $0x3b8] sm:$0xff]
    %v138 = vld [vmem:[%s1 + $0x3c0] sm:$0xff]
    %v139 = vld [vmem:[%s1 + $0x3c8] sm:$0xff]
    %v140 = vld [vmem:[%s1 + $0x3d0] sm:$0xff]
    %v141 = vld [vmem:[%s1 + $0x3d8] sm:$0xff]
    %v142 = vld [vmem:[%s1 + $0x3e0] sm:$0xff]
    %v143 = vld [vmem:[%s1 + $0x3e8] sm:$0xff]
    %v144 = vld [vmem:[%s1 + $0x3f0] sm:$0xff]
    %v145 = vld [vmem:[%s1 + $0x3f8] sm:$0xff]
    %v146 = vld [vmem:[%s1 + $0x400] sm:$0xff]
    %v147 = vld [vmem:[%s1 + $0x408] sm:$0xff]
    %v148 = vld [vmem:[%s1 + $0x410] sm:$0xff]
    %v149 = vld [vmem:[%s1 + $0x418] sm:$0xff]
    %v150 = vld [vmem:[%s1 + $0x420] sm:$0xff]
    %v151 = vld [vmem:[%s1 + $0x428] sm:$0xff]
    %v152 = vld [vmem:[%s1 + $0x430] sm:$0xff]
    %v153 = vld [vmem:[%s1 + $0x438] sm:$0xff]
    %v154 = vld [vmem:[%s1 + $0x440] sm:$0xff]
    %v155 = vld [vmem:[%s1 + $0x448] sm:$0xff]
    %v156 = vld [vmem:[%s1 + $0x450] sm:$0xff]
    %v157 = vld [vmem:[%s1 + $0x458] sm:$0xff]
    %v158 = vld [vmem:[%s1 + $0x460] sm:$0xff]
    %v159 = vld [vmem:[%s1 + $0x468] sm:$0xff]
    %v160 = vld [vmem:[%s1 + $0x470] sm:$0xff]
    %v161 = vld [vmem:[%s1 + $0x478] sm:$0xff]
    %v162 = vld [vmem:[%s1 + $0x480] sm:$0xff]
    %v163 = vld [vmem:[%s1 + $0x488] sm:$0xff]
    %v164 = vld [vmem:[%s1 + $0x490] sm:$0xff]
    %v165 = vld [vmem:[%s1 + $0x498] sm:$0xff]
    %v166 = vld [vmem:[%s1 + $0x4a0] sm:$0xff]
    %v167 = vld [vmem:[%s1 + $0x4a8] sm:$0xff]
    %v168 = vld [vmem:[%s1 + $0x4b0] sm:$0xff]
    %v169 = vld [vmem:[%s1 + $0x4b8] sm:$0xff]
    %v170 = vld [vmem:[%s1 + $0x4c0] sm:$0xff]
    %v171 = vld [vmem:[%s1 + $0x4c8] sm:$0xff]
    %v172 = vld [vmem:[%s1 + $0x4d0] sm:$0xff]
    %v173 = vld [vmem:[%s1 + $0x4d8] sm:$0xff]
    %v174 = vld [vmem:[%s1 + $0x4e0] sm:$0xff]
    %v175 = vld [vmem:[%s1 + $0x4e8] sm:$0xff]
    %v176 = vld [vmem:[%s1 + $0x4f0] sm:$0xff]
    %v177 = vld [vmem:[%s1 + $0x4f8] sm:$0xff]
    %v178 = vld [vmem:[%s1 + $0x500] sm:$0xff]
    %v179 = vld [vmem:[%s1 + $0x508] sm:$0xff]
    %v180 = vld [vmem:[%s1 + $0x510] sm:$0xff]
    %v181 = vld [vmem:[%s1 + $0x518] sm:$0xff]
    %v182 = vld [vmem:[%s1 + $0x520] sm:$0xff]
    %v183 = vld [vmem:[%s1 + $0x528] sm:$0xff]
    %v184 = vld [vmem:[%s1 + $0x530] sm:$0xff]
    %v185 = vld [vmem:[%s1 + $0x538] sm:$0xff]
    %v186 = vld [vmem:[%s1 + $0x540] sm:$0xff]
    %v187 = vld [vmem:[%s1 + $0x548] sm:$0xff]
    %v188 = vld [vmem:[%s1 + $0x550] sm:$0xff]
    %v189 = vld [vmem:[%s1 + $0x558] sm:$0xff]
    %v190 = vld [vmem:[%s1 + $0x560] sm:$0xff]
    %v191 = vld [vmem:[%s1 + $0x568] sm:$0xff]
    %v192 = vld [vmem:[%s1 + $0x570] sm:$0xff]
    %v193 = vld [vmem:[%s1 + $0x578] sm:$0xff]
    %v194 = vld [vmem:[%s1 + $0x580] sm:$0xff]
    %v195 = vld [vmem:[%s1 + $0x588] sm:$0xff]
    %v196 = vld [vmem:[%s1 + $0x590] sm:$0xff]
    %v197 = vld [vmem:[%s1 + $0x598] sm:$0xff]
    %v198 = vld [vmem:[%s1 + $0x5a0] sm:$0xff]
    %v199 = vld [vmem:[%s1 + $0x5a8] sm:$0xff]
    %v200 = vld [vmem:[%s1 + $0x5b0] sm:$0xff]
    %v201 = vld [vmem:[%s1 + $0x5b8] sm:$0xff]
    %v202 = vld [vmem:[%s1 + $0x5c0] sm:$0xff]
    %v203 = vld [vmem:[%s1 + $0x5c8] sm:$0xff]
    %v204 = vld [vmem:[%s1 + $0x5d0] sm:$0xff]
    %v205 = vld [vmem:[%s1 + $0x5d8] sm:$0xff]
    %v206 = vld [vmem:[%s1 + $0x5e0] sm:$0xff]
    %v207 = vld [vmem:[%s1 + $0x5e8] sm:$0xff]
    %v208 = vld [vmem:[%s1 + $0x5f0] sm:$0xff]
    %v209 = vld [vmem:[%s1 + $0x5f8] sm:$0xff]
    %v210 = vld [vmem:[%s1 + $0x600] sm:$0xff]
    %v211 = vld [vmem:[%s1 + $0x608] sm:$0xff]
    %v212 = vld [vmem:[%s1 + $0x610] sm:$0xff]
    %v213 = vld [vmem:[%s1 + $0x618] sm:$0xff]
    %v214 = vld [vmem:[%s1 + $0x620] sm:$0xff]
    %v215 = vld [vmem:[%s1 + $0x628] sm:$0xff]
    %v216 = vld [vmem:[%s1 + $0x630] sm:$0xff]
    %v217 = vld [vmem:[%s1 + $0x638] sm:$0xff]
    %v218 = vld [vmem:[%s1 + $0x640] sm:$0xff]
    %v219 = vld [vmem:[%s1 + $0x648] sm:$0xff]
    %v220 = vld [vmem:[%s1 + $0x650] sm:$0xff]
    %v221 = vld [vmem:[%s1 + $0x658] sm:$0xff]
    %v222 = vld [vmem:[%s1 + $0x660] sm:$0xff]
    %v223 = vld [vmem:[%s1 + $0x668] sm:$0xff]
    %v224 = vld [vmem:[%s1 + $0x670] sm:$0xff]
    %v225 = vld [vmem:[%s1 + $0x678] sm:$0xff]
    %v226 = vld [vmem:[%s1 + $0x680] sm:$0xff]
    %v227 = vld [vmem:[%s1 + $0x688] sm:$0xff]
    %v228 = vld [vmem:[%s1 + $0x690] sm:$0xff]
    %v229 = vld [vmem:[%s1 + $0x698] sm:$0xff]
    %v230 = vld [vmem:[%s1 + $0x6a0] sm:$0xff]
    %v231 = vld [vmem:[%s1 + $0x6a8] sm:$0xff]
    %v232 = vld [vmem:[%s1 + $0x6b0] sm:$0xff]
    %v233 = vld [vmem:[%s1 + $0x6b8] sm:$0xff]
    %v234 = vld [vmem:[%s1 + $0x6c0] sm:$0xff]
    %v235 = vld [vmem:[%s1 + $0x6c8] sm:$0xff]
    %v236 = vld [vmem:[%s1 + $0x6d0] sm:$0xff]
    %v237 = vld [vmem:[%s1 + $0x6d8] sm:$0xff]
    %v238 = vld [vmem:[%s1 + $0x6e0] sm:$0xff]
    %v239 = vld [vmem:[%s1 + $0x6e8] sm:$0xff]
    %v240 = vld [vmem:[%s1 + $0x6f0] sm:$0xff]
    %v241 = vld [vmem:[%s1 + $0x6f8] sm:$0xff]
    %v242 = vld [vmem:[%s1 + $0x700] sm:$0xff]
    %v243 = vld [vmem:[%s1 + $0x708] sm:$0xff]
    %v244 = vld [vmem:[%s1 + $0x710] sm:$0xff]
    %v245 = vld [vmem:[%s1 + $0x718] sm:$0xff]
    %v246 = vld [vmem:[%s1 + $0x720] sm:$0xff]
    %v247 = vld [vmem:[%s1 + $0x728] sm:$0xff]
    %v248 = vld [vmem:[%s1 + $0x730] sm:$0xff]
    %v249 = vld [vmem:[%s1 + $0x738] sm:$0xff]
    %v250 = vld [vmem:[%s1 + $0x740] sm:$0xff]
    %v251 = vld [vmem:[%s1 + $0x748] sm:$0xff]
    %v252 = vld [vmem:[%s1 + $0x750] sm:$0xff]
    %v253 = vld [vmem:[%s1 + $0x758] sm:$0xff]
    %v254 = vld [vmem:[%s1 + $0x760] sm:$0xff]
    %v255 = vld [vmem:[%s1 + $0x768] sm:$0xff]
    %v256 = vld [vmem:[%s1 + $0x770] sm:$0xff]
    %v257 = vld [vmem:[%s1 + $0x778] sm:$0xff]
    %v258 = vld [vmem:[%s1 + $0x780] sm:$0xff]
    %v259 = vld [vmem:[%s1 + $0x788] sm:$0xff]
    %v260 = vld [vmem:[%s1 + $0x790] sm:$0xff]
    %v261 = vld [vmem:[%s1 + $0x798] sm:$0xff]
    %v262 = vld [vmem:[%s1 + $0x7a0] sm:$0xff]
    %v263 = vld [vmem:[%s1 + $0x7a8] sm:$0xff]
    %v264 = vld [vmem:[%s1 + $0x7b0] sm:$0xff]
    %v265 = vld [vmem:[%s1 + $0x7b8] sm:$0xff]
    %v266 = vld [vmem:[%s1 + $0x7c0] sm:$0xff]
    %v267 = vld [vmem:[%s1 + $0x7c8] sm:$0xff]
    %v268 = vld [vmem:[%s1 + $0x7d0] sm:$0xff]
    %v269 = vld [vmem:[%s1 + $0x7d8] sm:$0xff]
    %v270 = vld [vmem:[%s1 + $0x7e0] sm:$0xff]
    %v271 = vld [vmem:[%s1 + $0x7e8] sm:$0xff]
    %v272 = vld [vmem:[%s1 + $0x7f0] sm:$0xff]
    %v273 = vld [vmem:[%s1 + $0x7f8] sm:$0xff]
    %v274 = vld [vmem:[%s1 + $0x800] sm:$0xff]
    %v275 = vld [vmem:[%s1 + $0x808] sm:$0xff]
    %v276 = vld [vmem:[%s1 + $0x810] sm:$0xff]
    %v277 = vld [vmem:[%s1 + $0x818] sm:$0xff]
    %v278 = vld [vmem:[%s1 + $0x820] sm:$0xff]
    %v279 = vld [vmem:[%s1 + $0x828] sm:$0xff]
    %v280 = vld [vmem:[%s1 + $0x830] sm:$0xff]
    %v281 = vld [vmem:[%s1 + $0x838] sm:$0xff]
    %v282 = vld [vmem:[%s1 + $0x840] sm:$0xff]
    %v283 = vld [vmem:[%s1 + $0x848] sm:$0xff]
    %v284 = vld [vmem:[%s1 + $0x850] sm:$0xff]
    %v285 = vld [vmem:[%s1 + $0x858] sm:$0xff]
    %v286 = vld [vmem:[%s1 + $0x860] sm:$0xff]
    %v287 = vld [vmem:[%s1 + $0x868] sm:$0xff]
    %v288 = vld [vmem:[%s1 + $0x870] sm:$0xff]
    %v289 = vld [vmem:[%s1 + $0x878] sm:$0xff]
    %v290 = vld [vmem:[%s1 + $0x880] sm:$0xff]
    %v291 = vld [vmem:[%s1 + $0x888] sm:$0xff]
    %v292 = vld [vmem:[%s1 + $0x890] sm:$0xff]
    %v293 = vld [vmem:[%s1 + $0x898] sm:$0xff]
    %v294 = vld [vmem:[%s1 + $0x8a0] sm:$0xff]
    %v295 = vld [vmem:[%s1 + $0x8a8] sm:$0xff]
    %v296 = vld [vmem:[%s1 + $0x8b0] sm:$0xff]
    %v297 = vld [vmem:[%s1 + $0x8b8] sm:$0xff]
    %v298 = vld [vmem:[%s1 + $0x8c0] sm:$0xff]
    %v299 = vld [vmem:[%s1 + $0x8c8] sm:$0xff]
    %v300 = vld [vmem:[%s1 + $0x8d0] sm:$0xff]
    %v301 = vld [vmem:[%s1 + $0x8d8] sm:$0xff]
    %v302 = vld [vmem:[%s1 + $0x8e0] sm:$0xff]
    %v303 = vld [vmem:[%s1 + $0x8e8] sm:$0xff]
    %v304 = vld [vmem:[%s1 + $0x8f0] sm:$0xff]
    %v305 = vld [vmem:[%s1 + $0x8f8] sm:$0xff]
    %v306 = vld [vmem:[%s2] sm:$0xf]
    %v308 = vlaneseq
    %v309 = vshrl.u32 %v308, 7
    %v310 = vsub.s32 0, %v309
    %v311 = vrot.slane %v306, %v310
    %v312 = vlaneseq
    %v313 = vshrl.u32 %v312, 7
    %v314 = vsub.s32 1, %v313
    %v315 = vrot.slane %v306, %v314
    %v316 = vlaneseq
    %v317 = vshrl.u32 %v316, 7
    %v318 = vsub.s32 2, %v317
    %v319 = vrot.slane %v306, %v318
    %v320 = vlaneseq
    %v321 = vshrl.u32 %v320, 7
    %v322 = vsub.s32 3, %v321
    %v323 = vrot.slane %v306, %v322
    %v330 = vcombine.high %v16, %v16
    %v332 = vunpack.c.l.s4 1966171168
    %v333 = vunpack.c.0.s8 %v332
    %v334 = vlaneseq
    %v335 = vshrl.u32 %v334, 7
    %v336 = vsub.s32 %v333, %v335
    %v337 = vrot.slane %v16, %v336
    %v339 = vunpack.c.l.s4 1966171168
    %v340 = vunpack.c.0.s8 %v339
    %v341 = vlaneseq
    %v342 = vshrl.u32 %v341, 7
    %v343 = vsub.s32 %v340, %v342
    %v344 = vrot.slane %v330, %v343
    %v345 = vcombine.high %v337, %v337
    %v346 = vcombine.high %v344, %v344
    %v348 = vunpack.c.l.s4 1966171168
    %v349 = vunpack.c.0.s8 %v348
    %v350 = vlaneseq
    %v351 = vshrl.u32 %v350, 7
    %v352 = vsub.s32 %v349, %v351
    %v353 = vrot.slane %v337, %v352
    %v355 = vunpack.c.l.s4 1966171168
    %v356 = vunpack.c.0.s8 %v355
    %v357 = vlaneseq
    %v358 = vshrl.u32 %v357, 7
    %v359 = vsub.s32 %v356, %v358
    %v360 = vrot.slane %v344, %v359
    %v362 = vunpack.c.l.s4 1966171168
    %v363 = vunpack.c.0.s8 %v362
    %v364 = vlaneseq
    %v365 = vshrl.u32 %v364, 7
    %v366 = vsub.s32 %v363, %v365
    %v367 = vrot.slane %v345, %v366
    %v369 = vunpack.c.l.s4 1966171168
    %v370 = vunpack.c.0.s8 %v369
    %v371 = vlaneseq
    %v372 = vshrl.u32 %v371, 7
    %v373 = vsub.s32 %v370, %v372
    %v374 = vrot.slane %v346, %v373
    %v375 = vcombine.high %v353, %v353
    %v376 = vcombine.high %v360, %v360
    %v377 = vcombine.high %v367, %v367
    %v378 = vcombine.high %v374, %v374
    %v380 = vunpack.c.l.s4 1966171168
    %v381 = vunpack.c.0.s8 %v380
    %v382 = vlaneseq
    %v383 = vshrl.u32 %v382, 7
    %v384 = vsub.s32 %v381, %v383
    %v385 = vrot.slane %v17, %v384
    %v387 = vunpack.c.l.s4 1966171168
    %v388 = vunpack.c.0.s8 %v387
    %v389 = vlaneseq
    %v390 = vshrl.u32 %v389, 7
    %v391 = vsub.s32 %v388, %v390
    %v392 = vrot.slane %v385, %v391
    %v690 = vunpack.c.l.b16 %v18
    %v691 = vunpack.c.h.b16 %v18
    %v692 = vunpack.c.l.b16 %v19
    %v693 = vunpack.c.h.b16 %v19
    %v694 = vunpack.c.l.b16 %v20
    %v695 = vunpack.c.h.b16 %v20
    %v696 = vunpack.c.l.b16 %v21
    %v697 = vunpack.c.h.b16 %v21
    %v698 = vunpack.c.l.b16 %v22
    %v699 = vunpack.c.h.b16 %v22
    %v700 = vunpack.c.l.b16 %v23
    %v701 = vunpack.c.h.b16 %v23
    %v702 = vunpack.c.l.b16 %v24
    %v703 = vunpack.c.h.b16 %v24
    %v704 = vunpack.c.l.b16 %v25
    %v705 = vunpack.c.h.b16 %v25
    %v706 = vunpack.c.l.b16 %v26
    %v707 = vunpack.c.h.b16 %v26
    %v708 = vunpack.c.l.b16 %v27
    %v709 = vunpack.c.h.b16 %v27
    %v710 = vunpack.c.l.b16 %v28
    %v711 = vunpack.c.h.b16 %v28
    %v712 = vunpack.c.l.b16 %v29
    %v713 = vunpack.c.h.b16 %v29
    %v714 = vunpack.c.l.b16 %v30
    %v715 = vunpack.c.h.b16 %v30
    %v716 = vunpack.c.l.b16 %v31
    %v717 = vunpack.c.h.b16 %v31
    %v718 = vunpack.c.l.b16 %v32
    %v719 = vunpack.c.h.b16 %v32
    %v720 = vunpack.c.l.b16 %v33
    %v721 = vunpack.c.h.b16 %v33
    %v722 = vunpack.c.l.b16 %v34
    %v723 = vunpack.c.h.b16 %v34
    %v724 = vunpack.c.l.b16 %v35
    %v725 = vunpack.c.h.b16 %v35
    %v726 = vunpack.c.l.b16 %v36
    %v727 = vunpack.c.h.b16 %v36
    %v728 = vunpack.c.l.b16 %v37
    %v729 = vunpack.c.h.b16 %v37
    %v730 = vunpack.c.l.b16 %v38
    %v731 = vunpack.c.h.b16 %v38
    %v732 = vunpack.c.l.b16 %v39
    %v733 = vunpack.c.h.b16 %v39
    %v734 = vunpack.c.l.b16 %v40
    %v735 = vunpack.c.h.b16 %v40
    %v736 = vunpack.c.l.b16 %v41
    %v737 = vunpack.c.h.b16 %v41
    %v738 = vunpack.c.l.b16 %v42
    %v739 = vunpack.c.h.b16 %v42
    %v740 = vunpack.c.l.b16 %v43
    %v741 = vunpack.c.h.b16 %v43
    %v742 = vunpack.c.l.b16 %v44
    %v743 = vunpack.c.h.b16 %v44
    %v744 = vunpack.c.l.b16 %v45
    %v745 = vunpack.c.h.b16 %v45
    %v746 = vunpack.c.l.b16 %v46
    %v747 = vunpack.c.h.b16 %v46
    %v748 = vunpack.c.l.b16 %v47
    %v749 = vunpack.c.h.b16 %v47
    %v750 = vunpack.c.l.b16 %v48
    %v751 = vunpack.c.h.b16 %v48
    %v752 = vunpack.c.l.b16 %v49
    %v753 = vunpack.c.h.b16 %v49
    %v754 = vunpack.c.l.b16 %v50
    %v755 = vunpack.c.h.b16 %v50
    %v756 = vunpack.c.l.b16 %v51
    %v757 = vunpack.c.h.b16 %v51
    %v758 = vunpack.c.l.b16 %v52
    %v759 = vunpack.c.h.b16 %v52
    %v760 = vunpack.c.l.b16 %v53
    %v761 = vunpack.c.h.b16 %v53
    %v762 = vunpack.c.l.b16 %v54
    %v763 = vunpack.c.h.b16 %v54
    %v764 = vunpack.c.l.b16 %v55
    %v765 = vunpack.c.h.b16 %v55
    %v766 = vunpack.c.l.b16 %v56
    %v767 = vunpack.c.h.b16 %v56
    %v768 = vunpack.c.l.b16 %v57
    %v769 = vunpack.c.h.b16 %v57
    %v770 = vunpack.c.l.b16 %v58
    %v771 = vunpack.c.h.b16 %v58
    %v772 = vunpack.c.l.b16 %v59
    %v773 = vunpack.c.h.b16 %v59
    %v774 = vunpack.c.l.b16 %v60
    %v775 = vunpack.c.h.b16 %v60
    %v776 = vunpack.c.l.b16 %v61
    %v777 = vunpack.c.h.b16 %v61
    %v778 = vunpack.c.l.b16 %v62
    %v779 = vunpack.c.h.b16 %v62
    %v780 = vunpack.c.l.b16 %v63
    %v781 = vunpack.c.h.b16 %v63
    %v782 = vunpack.c.l.b16 %v64
    %v783 = vunpack.c.h.b16 %v64
    %v784 = vunpack.c.l.b16 %v65
    %v785 = vunpack.c.h.b16 %v65
    %v786 = vunpack.c.l.b16 %v66
    %v787 = vunpack.c.h.b16 %v66
    %v788 = vunpack.c.l.b16 %v67
    %v789 = vunpack.c.h.b16 %v67
    %v790 = vunpack.c.l.b16 %v68
    %v791 = vunpack.c.h.b16 %v68
    %v792 = vunpack.c.l.b16 %v69
    %v793 = vunpack.c.h.b16 %v69
    %v794 = vunpack.c.l.b16 %v70
    %v795 = vunpack.c.h.b16 %v70
    %v796 = vunpack.c.l.b16 %v71
    %v797 = vunpack.c.h.b16 %v71
    %v798 = vunpack.c.l.b16 %v72
    %v799 = vunpack.c.h.b16 %v72
    %v800 = vunpack.c.l.b16 %v73
    %v801 = vunpack.c.h.b16 %v73
    %v802 = vunpack.c.l.b16 %v74
    %v803 = vunpack.c.h.b16 %v74
    %v804 = vunpack.c.l.b16 %v75
    %v805 = vunpack.c.h.b16 %v75
    %v806 = vunpack.c.l.b16 %v76
    %v807 = vunpack.c.h.b16 %v76
    %v808 = vunpack.c.l.b16 %v77
    %v809 = vunpack.c.h.b16 %v77
    %v810 = vunpack.c.l.b16 %v78
    %v811 = vunpack.c.h.b16 %v78
    %v812 = vunpack.c.l.b16 %v79
    %v813 = vunpack.c.h.b16 %v79
    %v814 = vunpack.c.l.b16 %v80
    %v815 = vunpack.c.h.b16 %v80
    %v816 = vunpack.c.l.b16 %v81
    %v817 = vunpack.c.h.b16 %v81
    %v818 = vunpack.c.l.b16 %v82
    %v819 = vunpack.c.h.b16 %v82
    %v820 = vunpack.c.l.b16 %v83
    %v821 = vunpack.c.h.b16 %v83
    %v822 = vunpack.c.l.b16 %v84
    %v823 = vunpack.c.h.b16 %v84
    %v824 = vunpack.c.l.b16 %v85
    %v825 = vunpack.c.h.b16 %v85
    %v826 = vunpack.c.l.b16 %v86
    %v827 = vunpack.c.h.b16 %v86
    %v828 = vunpack.c.l.b16 %v87
    %v829 = vunpack.c.h.b16 %v87
    %v830 = vunpack.c.l.b16 %v88
    %v831 = vunpack.c.h.b16 %v88
    %v832 = vunpack.c.l.b16 %v89
    %v833 = vunpack.c.h.b16 %v89
    %v834 = vunpack.c.l.b16 %v90
    %v835 = vunpack.c.h.b16 %v90
    %v836 = vunpack.c.l.b16 %v91
    %v837 = vunpack.c.h.b16 %v91
    %v838 = vunpack.c.l.b16 %v92
    %v839 = vunpack.c.h.b16 %v92
    %v840 = vunpack.c.l.b16 %v93
    %v841 = vunpack.c.h.b16 %v93
    %v842 = vunpack.c.l.b16 %v94
    %v843 = vunpack.c.h.b16 %v94
    %v844 = vunpack.c.l.b16 %v95
    %v845 = vunpack.c.h.b16 %v95
    %v846 = vunpack.c.l.b16 %v96
    %v847 = vunpack.c.h.b16 %v96
    %v848 = vunpack.c.l.b16 %v97
    %v849 = vunpack.c.h.b16 %v97
    %v850 = vunpack.c.l.b16 %v98
    %v851 = vunpack.c.h.b16 %v98
    %v852 = vunpack.c.l.b16 %v99
    %v853 = vunpack.c.h.b16 %v99
    %v854 = vunpack.c.l.b16 %v100
    %v855 = vunpack.c.h.b16 %v100
    %v856 = vunpack.c.l.b16 %v101
    %v857 = vunpack.c.h.b16 %v101
    %v858 = vunpack.c.l.b16 %v102
    %v859 = vunpack.c.h.b16 %v102
    %v860 = vunpack.c.l.b16 %v103
    %v861 = vunpack.c.h.b16 %v103
    %v862 = vunpack.c.l.b16 %v104
    %v863 = vunpack.c.h.b16 %v104
    %v864 = vunpack.c.l.b16 %v105
    %v865 = vunpack.c.h.b16 %v105
    %v866 = vunpack.c.l.b16 %v106
    %v867 = vunpack.c.h.b16 %v106
    %v868 = vunpack.c.l.b16 %v107
    %v869 = vunpack.c.h.b16 %v107
    %v870 = vunpack.c.l.b16 %v108
    %v871 = vunpack.c.h.b16 %v108
    %v872 = vunpack.c.l.b16 %v109
    %v873 = vunpack.c.h.b16 %v109
    %v874 = vunpack.c.l.b16 %v110
    %v875 = vunpack.c.h.b16 %v110
    %v876 = vunpack.c.l.b16 %v111
    %v877 = vunpack.c.h.b16 %v111
    %v878 = vunpack.c.l.b16 %v112
    %v879 = vunpack.c.h.b16 %v112
    %v880 = vunpack.c.l.b16 %v113
    %v881 = vunpack.c.h.b16 %v113
    %v882 = vunpack.c.l.b16 %v114
    %v883 = vunpack.c.h.b16 %v114
    %v884 = vunpack.c.l.b16 %v115
    %v885 = vunpack.c.h.b16 %v115
    %v886 = vunpack.c.l.b16 %v116
    %v887 = vunpack.c.h.b16 %v116
    %v888 = vunpack.c.l.b16 %v117
    %v889 = vunpack.c.h.b16 %v117
    %v890 = vunpack.c.l.b16 %v118
    %v891 = vunpack.c.h.b16 %v118
    %v892 = vunpack.c.l.b16 %v119
    %v893 = vunpack.c.h.b16 %v119
    %v894 = vunpack.c.l.b16 %v120
    %v895 = vunpack.c.h.b16 %v120
    %v896 = vunpack.c.l.b16 %v121
    %v897 = vunpack.c.h.b16 %v121
    %v898 = vunpack.c.l.b16 %v122
    %v899 = vunpack.c.h.b16 %v122
    %v900 = vunpack.c.l.b16 %v123
    %v901 = vunpack.c.h.b16 %v123
    %v902 = vunpack.c.l.b16 %v124
    %v903 = vunpack.c.h.b16 %v124
    %v904 = vunpack.c.l.b16 %v125
    %v905 = vunpack.c.h.b16 %v125
    %v906 = vunpack.c.l.b16 %v126
    %v907 = vunpack.c.h.b16 %v126
    %v908 = vunpack.c.l.b16 %v127
    %v909 = vunpack.c.h.b16 %v127
    %v910 = vunpack.c.l.b16 %v128
    %v911 = vunpack.c.h.b16 %v128
    %v912 = vunpack.c.l.b16 %v129
    %v913 = vunpack.c.h.b16 %v129
    %v914 = vunpack.c.l.b16 %v130
    %v915 = vunpack.c.h.b16 %v130
    %v916 = vunpack.c.l.b16 %v131
    %v917 = vunpack.c.h.b16 %v131
    %v918 = vunpack.c.l.b16 %v132
    %v919 = vunpack.c.h.b16 %v132
    %v920 = vunpack.c.l.b16 %v133
    %v921 = vunpack.c.h.b16 %v133
    %v922 = vunpack.c.l.b16 %v134
    %v923 = vunpack.c.h.b16 %v134
    %v924 = vunpack.c.l.b16 %v135
    %v925 = vunpack.c.h.b16 %v135
    %v926 = vunpack.c.l.b16 %v136
    %v927 = vunpack.c.h.b16 %v136
    %v928 = vunpack.c.l.b16 %v137
    %v929 = vunpack.c.h.b16 %v137
    %v930 = vunpack.c.l.b16 %v138
    %v931 = vunpack.c.h.b16 %v138
    %v932 = vunpack.c.l.b16 %v139
    %v933 = vunpack.c.h.b16 %v139
    %v934 = vunpack.c.l.b16 %v140
    %v935 = vunpack.c.h.b16 %v140
    %v936 = vunpack.c.l.b16 %v141
    %v937 = vunpack.c.h.b16 %v141
    %v938 = vunpack.c.l.b16 %v142
    %v939 = vunpack.c.h.b16 %v142
    %v940 = vunpack.c.l.b16 %v143
    %v941 = vunpack.c.h.b16 %v143
    %v942 = vunpack.c.l.b16 %v144
    %v943 = vunpack.c.h.b16 %v144
    %v944 = vunpack.c.l.b16 %v145
    %v945 = vunpack.c.h.b16 %v145
    %v946 = vunpack.c.l.b16 %v146
    %v947 = vunpack.c.h.b16 %v146
    %v948 = vunpack.c.l.b16 %v147
    %v949 = vunpack.c.h.b16 %v147
    %v950 = vunpack.c.l.b16 %v148
    %v951 = vunpack.c.h.b16 %v148
    %v952 = vunpack.c.l.b16 %v149
    %v953 = vunpack.c.h.b16 %v149
    %v954 = vunpack.c.l.b16 %v150
    %v955 = vunpack.c.h.b16 %v150
    %v956 = vunpack.c.l.b16 %v151
    %v957 = vunpack.c.h.b16 %v151
    %v958 = vunpack.c.l.b16 %v152
    %v959 = vunpack.c.h.b16 %v152
    %v960 = vunpack.c.l.b16 %v153
    %v961 = vunpack.c.h.b16 %v153
    %v962 = vunpack.c.l.b16 %v154
    %v963 = vunpack.c.h.b16 %v154
    %v964 = vunpack.c.l.b16 %v155
    %v965 = vunpack.c.h.b16 %v155
    %v966 = vunpack.c.l.b16 %v156
    %v967 = vunpack.c.h.b16 %v156
    %v968 = vunpack.c.l.b16 %v157
    %v969 = vunpack.c.h.b16 %v157
    %v970 = vunpack.c.l.b16 %v158
    %v971 = vunpack.c.h.b16 %v158
    %v972 = vunpack.c.l.b16 %v159
    %v973 = vunpack.c.h.b16 %v159
    %v974 = vunpack.c.l.b16 %v160
    %v975 = vunpack.c.h.b16 %v160
    %v976 = vunpack.c.l.b16 %v161
    %v977 = vunpack.c.h.b16 %v161
    %v978 = vunpack.c.l.b16 %v162
    %v979 = vunpack.c.h.b16 %v162
    %v980 = vunpack.c.l.b16 %v163
    %v981 = vunpack.c.h.b16 %v163
    %v982 = vunpack.c.l.b16 %v164
    %v983 = vunpack.c.h.b16 %v164
    %v984 = vunpack.c.l.b16 %v165
    %v985 = vunpack.c.h.b16 %v165
    %v986 = vunpack.c.l.b16 %v166
    %v987 = vunpack.c.h.b16 %v166
    %v988 = vunpack.c.l.b16 %v167
    %v989 = vunpack.c.h.b16 %v167
    %v990 = vunpack.c.l.b16 %v168
    %v991 = vunpack.c.h.b16 %v168
    %v992 = vunpack.c.l.b16 %v169
    %v993 = vunpack.c.h.b16 %v169
    %v994 = vunpack.c.l.b16 %v170
    %v995 = vunpack.c.h.b16 %v170
    %v996 = vunpack.c.l.b16 %v171
    %v997 = vunpack.c.h.b16 %v171
    %v998 = vunpack.c.l.b16 %v172
    %v999 = vunpack.c.h.b16 %v172
    %v1000 = vunpack.c.l.b16 %v173
    %v1001 = vunpack.c.h.b16 %v173
    %v1002 = vunpack.c.l.b16 %v174
    %v1003 = vunpack.c.h.b16 %v174
    %v1004 = vunpack.c.l.b16 %v175
    %v1005 = vunpack.c.h.b16 %v175
    %v1006 = vunpack.c.l.b16 %v176
    %v1007 = vunpack.c.h.b16 %v176
    %v1008 = vunpack.c.l.b16 %v177
    %v1009 = vunpack.c.h.b16 %v177
    %v1010 = vunpack.c.l.b16 %v178
    %v1011 = vunpack.c.h.b16 %v178
    %v1012 = vunpack.c.l.b16 %v179
    %v1013 = vunpack.c.h.b16 %v179
    %v1014 = vunpack.c.l.b16 %v180
    %v1015 = vunpack.c.h.b16 %v180
    %v1016 = vunpack.c.l.b16 %v181
    %v1017 = vunpack.c.h.b16 %v181
    %v1018 = vunpack.c.l.b16 %v182
    %v1019 = vunpack.c.h.b16 %v182
    %v1020 = vunpack.c.l.b16 %v183
    %v1021 = vunpack.c.h.b16 %v183
    %v1022 = vunpack.c.l.b16 %v184
    %v1023 = vunpack.c.h.b16 %v184
    %v1024 = vunpack.c.l.b16 %v185
    %v1025 = vunpack.c.h.b16 %v185
    %v1026 = vunpack.c.l.b16 %v186
    %v1027 = vunpack.c.h.b16 %v186
    %v1028 = vunpack.c.l.b16 %v187
    %v1029 = vunpack.c.h.b16 %v187
    %v1030 = vunpack.c.l.b16 %v188
    %v1031 = vunpack.c.h.b16 %v188
    %v1032 = vunpack.c.l.b16 %v189
    %v1033 = vunpack.c.h.b16 %v189
    %v1034 = vunpack.c.l.b16 %v190
    %v1035 = vunpack.c.h.b16 %v190
    %v1036 = vunpack.c.l.b16 %v191
    %v1037 = vunpack.c.h.b16 %v191
    %v1038 = vunpack.c.l.b16 %v192
    %v1039 = vunpack.c.h.b16 %v192
    %v1040 = vunpack.c.l.b16 %v193
    %v1041 = vunpack.c.h.b16 %v193
    %v1042 = vunpack.c.l.b16 %v194
    %v1043 = vunpack.c.h.b16 %v194
    %v1044 = vunpack.c.l.b16 %v195
    %v1045 = vunpack.c.h.b16 %v195
    %v1046 = vunpack.c.l.b16 %v196
    %v1047 = vunpack.c.h.b16 %v196
    %v1048 = vunpack.c.l.b16 %v197
    %v1049 = vunpack.c.h.b16 %v197
    %v1050 = vunpack.c.l.b16 %v198
    %v1051 = vunpack.c.h.b16 %v198
    %v1052 = vunpack.c.l.b16 %v199
    %v1053 = vunpack.c.h.b16 %v199
    %v1054 = vunpack.c.l.b16 %v200
    %v1055 = vunpack.c.h.b16 %v200
    %v1056 = vunpack.c.l.b16 %v201
    %v1057 = vunpack.c.h.b16 %v201
    %v1058 = vunpack.c.l.b16 %v202
    %v1059 = vunpack.c.h.b16 %v202
    %v1060 = vunpack.c.l.b16 %v203
    %v1061 = vunpack.c.h.b16 %v203
    %v1062 = vunpack.c.l.b16 %v204
    %v1063 = vunpack.c.h.b16 %v204
    %v1064 = vunpack.c.l.b16 %v205
    %v1065 = vunpack.c.h.b16 %v205
    %v1066 = vunpack.c.l.b16 %v206
    %v1067 = vunpack.c.h.b16 %v206
    %v1068 = vunpack.c.l.b16 %v207
    %v1069 = vunpack.c.h.b16 %v207
    %v1070 = vunpack.c.l.b16 %v208
    %v1071 = vunpack.c.h.b16 %v208
    %v1072 = vunpack.c.l.b16 %v209
    %v1073 = vunpack.c.h.b16 %v209
    %v1074 = vunpack.c.l.b16 %v210
    %v1075 = vunpack.c.h.b16 %v210
    %v1076 = vunpack.c.l.b16 %v211
    %v1077 = vunpack.c.h.b16 %v211
    %v1078 = vunpack.c.l.b16 %v212
    %v1079 = vunpack.c.h.b16 %v212
    %v1080 = vunpack.c.l.b16 %v213
    %v1081 = vunpack.c.h.b16 %v213
    %v1082 = vunpack.c.l.b16 %v214
    %v1083 = vunpack.c.h.b16 %v214
    %v1084 = vunpack.c.l.b16 %v215
    %v1085 = vunpack.c.h.b16 %v215
    %v1086 = vunpack.c.l.b16 %v216
    %v1087 = vunpack.c.h.b16 %v216
    %v1088 = vunpack.c.l.b16 %v217
    %v1089 = vunpack.c.h.b16 %v217
    %v1090 = vunpack.c.l.b16 %v218
    %v1091 = vunpack.c.h.b16 %v218
    %v1092 = vunpack.c.l.b16 %v219
    %v1093 = vunpack.c.h.b16 %v219
    %v1094 = vunpack.c.l.b16 %v220
    %v1095 = vunpack.c.h.b16 %v220
    %v1096 = vunpack.c.l.b16 %v221
    %v1097 = vunpack.c.h.b16 %v221
    %v1098 = vunpack.c.l.b16 %v222
    %v1099 = vunpack.c.h.b16 %v222
    %v1100 = vunpack.c.l.b16 %v223
    %v1101 = vunpack.c.h.b16 %v223
    %v1102 = vunpack.c.l.b16 %v224
    %v1103 = vunpack.c.h.b16 %v224
    %v1104 = vunpack.c.l.b16 %v225
    %v1105 = vunpack.c.h.b16 %v225
    %v1106 = vunpack.c.l.b16 %v226
    %v1107 = vunpack.c.h.b16 %v226
    %v1108 = vunpack.c.l.b16 %v227
    %v1109 = vunpack.c.h.b16 %v227
    %v1110 = vunpack.c.l.b16 %v228
    %v1111 = vunpack.c.h.b16 %v228
    %v1112 = vunpack.c.l.b16 %v229
    %v1113 = vunpack.c.h.b16 %v229
    %v1114 = vunpack.c.l.b16 %v230
    %v1115 = vunpack.c.h.b16 %v230
    %v1116 = vunpack.c.l.b16 %v231
    %v1117 = vunpack.c.h.b16 %v231
    %v1118 = vunpack.c.l.b16 %v232
    %v1119 = vunpack.c.h.b16 %v232
    %v1120 = vunpack.c.l.b16 %v233
    %v1121 = vunpack.c.h.b16 %v233
    %v1122 = vunpack.c.l.b16 %v234
    %v1123 = vunpack.c.h.b16 %v234
    %v1124 = vunpack.c.l.b16 %v235
    %v1125 = vunpack.c.h.b16 %v235
    %v1126 = vunpack.c.l.b16 %v236
    %v1127 = vunpack.c.h.b16 %v236
    %v1128 = vunpack.c.l.b16 %v237
    %v1129 = vunpack.c.h.b16 %v237
    %v1130 = vunpack.c.l.b16 %v238
    %v1131 = vunpack.c.h.b16 %v238
    %v1132 = vunpack.c.l.b16 %v239
    %v1133 = vunpack.c.h.b16 %v239
    %v1134 = vunpack.c.l.b16 %v240
    %v1135 = vunpack.c.h.b16 %v240
    %v1136 = vunpack.c.l.b16 %v241
    %v1137 = vunpack.c.h.b16 %v241
    %v1138 = vunpack.c.l.b16 %v242
    %v1139 = vunpack.c.h.b16 %v242
    %v1140 = vunpack.c.l.b16 %v243
    %v1141 = vunpack.c.h.b16 %v243
    %v1142 = vunpack.c.l.b16 %v244
    %v1143 = vunpack.c.h.b16 %v244
    %v1144 = vunpack.c.l.b16 %v245
    %v1145 = vunpack.c.h.b16 %v245
    %v1146 = vunpack.c.l.b16 %v246
    %v1147 = vunpack.c.h.b16 %v246
    %v1148 = vunpack.c.l.b16 %v247
    %v1149 = vunpack.c.h.b16 %v247
    %v1150 = vunpack.c.l.b16 %v248
    %v1151 = vunpack.c.h.b16 %v248
    %v1152 = vunpack.c.l.b16 %v249
    %v1153 = vunpack.c.h.b16 %v249
    %v1154 = vunpack.c.l.b16 %v250
    %v1155 = vunpack.c.h.b16 %v250
    %v1156 = vunpack.c.l.b16 %v251
    %v1157 = vunpack.c.h.b16 %v251
    %v1158 = vunpack.c.l.b16 %v252
    %v1159 = vunpack.c.h.b16 %v252
    %v1160 = vunpack.c.l.b16 %v253
    %v1161 = vunpack.c.h.b16 %v253
    %v1162 = vunpack.c.l.b16 %v254
    %v1163 = vunpack.c.h.b16 %v254
    %v1164 = vunpack.c.l.b16 %v255
    %v1165 = vunpack.c.h.b16 %v255
    %v1166 = vunpack.c.l.b16 %v256
    %v1167 = vunpack.c.h.b16 %v256
    %v1168 = vunpack.c.l.b16 %v257
    %v1169 = vunpack.c.h.b16 %v257
    %v1170 = vunpack.c.l.b16 %v258
    %v1171 = vunpack.c.h.b16 %v258
    %v1172 = vunpack.c.l.b16 %v259
    %v1173 = vunpack.c.h.b16 %v259
    %v1174 = vunpack.c.l.b16 %v260
    %v1175 = vunpack.c.h.b16 %v260
    %v1176 = vunpack.c.l.b16 %v261
    %v1177 = vunpack.c.h.b16 %v261
    %v1178 = vunpack.c.l.b16 %v262
    %v1179 = vunpack.c.h.b16 %v262
    %v1180 = vunpack.c.l.b16 %v263
    %v1181 = vunpack.c.h.b16 %v263
    %v1182 = vunpack.c.l.b16 %v264
    %v1183 = vunpack.c.h.b16 %v264
    %v1184 = vunpack.c.l.b16 %v265
    %v1185 = vunpack.c.h.b16 %v265
    %v1186 = vunpack.c.l.b16 %v266
    %v1187 = vunpack.c.h.b16 %v266
    %v1188 = vunpack.c.l.b16 %v267
    %v1189 = vunpack.c.h.b16 %v267
    %v1190 = vunpack.c.l.b16 %v268
    %v1191 = vunpack.c.h.b16 %v268
    %v1192 = vunpack.c.l.b16 %v269
    %v1193 = vunpack.c.h.b16 %v269
    %v1194 = vunpack.c.l.b16 %v270
    %v1195 = vunpack.c.h.b16 %v270
    %v1196 = vunpack.c.l.b16 %v271
    %v1197 = vunpack.c.h.b16 %v271
    %v1198 = vunpack.c.l.b16 %v272
    %v1199 = vunpack.c.h.b16 %v272
    %v1200 = vunpack.c.l.b16 %v273
    %v1201 = vunpack.c.h.b16 %v273
    %v1202 = vunpack.c.l.b16 %v274
    %v1203 = vunpack.c.h.b16 %v274
    %v1204 = vunpack.c.l.b16 %v275
    %v1205 = vunpack.c.h.b16 %v275
    %v1206 = vunpack.c.l.b16 %v276
    %v1207 = vunpack.c.h.b16 %v276
    %v1208 = vunpack.c.l.b16 %v277
    %v1209 = vunpack.c.h.b16 %v277
    %v1210 = vunpack.c.l.b16 %v278
    %v1211 = vunpack.c.h.b16 %v278
    %v1212 = vunpack.c.l.b16 %v279
    %v1213 = vunpack.c.h.b16 %v279
    %v1214 = vunpack.c.l.b16 %v280
    %v1215 = vunpack.c.h.b16 %v280
    %v1216 = vunpack.c.l.b16 %v281
    %v1217 = vunpack.c.h.b16 %v281
    %v1218 = vunpack.c.l.b16 %v282
    %v1219 = vunpack.c.h.b16 %v282
    %v1220 = vunpack.c.l.b16 %v283
    %v1221 = vunpack.c.h.b16 %v283
    %v1222 = vunpack.c.l.b16 %v284
    %v1223 = vunpack.c.h.b16 %v284
    %v1224 = vunpack.c.l.b16 %v285
    %v1225 = vunpack.c.h.b16 %v285
    %v1226 = vunpack.c.l.b16 %v286
    %v1227 = vunpack.c.h.b16 %v286
    %v1228 = vunpack.c.l.b16 %v287
    %v1229 = vunpack.c.h.b16 %v287
    %v1230 = vunpack.c.l.b16 %v288
    %v1231 = vunpack.c.h.b16 %v288
    %v1232 = vunpack.c.l.b16 %v289
    %v1233 = vunpack.c.h.b16 %v289
    %v1234 = vunpack.c.l.b16 %v290
    %v1235 = vunpack.c.h.b16 %v290
    %v1236 = vunpack.c.l.b16 %v291
    %v1237 = vunpack.c.h.b16 %v291
    %v1238 = vunpack.c.l.b16 %v292
    %v1239 = vunpack.c.h.b16 %v292
    %v1240 = vunpack.c.l.b16 %v293
    %v1241 = vunpack.c.h.b16 %v293
    %v1242 = vunpack.c.l.b16 %v294
    %v1243 = vunpack.c.h.b16 %v294
    %v1244 = vunpack.c.l.b16 %v295
    %v1245 = vunpack.c.h.b16 %v295
    %v1246 = vunpack.c.l.b16 %v296
    %v1247 = vunpack.c.h.b16 %v296
    %v1248 = vunpack.c.l.b16 %v297
    %v1249 = vunpack.c.h.b16 %v297
    %v1250 = vunpack.c.l.b16 %v298
    %v1251 = vunpack.c.h.b16 %v298
    %v1252 = vunpack.c.l.b16 %v299
    %v1253 = vunpack.c.h.b16 %v299
    %v1254 = vunpack.c.l.b16 %v300
    %v1255 = vunpack.c.h.b16 %v300
    %v1256 = vunpack.c.l.b16 %v301
    %v1257 = vunpack.c.h.b16 %v301
    %v1258 = vunpack.c.l.b16 %v302
    %v1259 = vunpack.c.h.b16 %v302
    %v1260 = vunpack.c.l.b16 %v303
    %v1261 = vunpack.c.h.b16 %v303
    %v1262 = vunpack.c.l.b16 %v304
    %v1263 = vunpack.c.h.b16 %v304
    %v1264 = vunpack.c.l.b16 %v305
    %v1265 = vunpack.c.h.b16 %v305
    %v1266 = vpack.c.b16 %v694, %v690
    %v1267 = vpack.c.b16 %v695, %v691
    %v1268 = vpack.c.b16 %v696, %v692
    %v1269 = vpack.c.b16 %v697, %v693
    %v1270 = vpack.c.b16 %v702, %v698
    %v1271 = vpack.c.b16 %v703, %v699
    %v1272 = vpack.c.b16 %v704, %v700
    %v1273 = vpack.c.b16 %v705, %v701
    %v1274 = vpack.c.b16 %v710, %v706
    %v1275 = vpack.c.b16 %v711, %v707
    %v1276 = vpack.c.b16 %v712, %v708
    %v1277 = vpack.c.b16 %v713, %v709
    %v1278 = vpack.c.b16 %v718, %v714
    %v1279 = vpack.c.b16 %v719, %v715
    %v1280 = vpack.c.b16 %v720, %v716
    %v1281 = vpack.c.b16 %v721, %v717
    %v1282 = vpack.c.b16 %v726, %v722
    %v1283 = vpack.c.b16 %v727, %v723
    %v1284 = vpack.c.b16 %v728, %v724
    %v1285 = vpack.c.b16 %v729, %v725
    %v1286 = vpack.c.b16 %v734, %v730
    %v1287 = vpack.c.b16 %v735, %v731
    %v1288 = vpack.c.b16 %v736, %v732
    %v1289 = vpack.c.b16 %v737, %v733
    %v1290 = vpack.c.b16 %v742, %v738
    %v1291 = vpack.c.b16 %v743, %v739
    %v1292 = vpack.c.b16 %v744, %v740
    %v1293 = vpack.c.b16 %v745, %v741
    %v1294 = vpack.c.b16 %v750, %v746
    %v1295 = vpack.c.b16 %v751, %v747
    %v1296 = vpack.c.b16 %v752, %v748
    %v1297 = vpack.c.b16 %v753, %v749
    %v1298 = vpack.c.b16 %v758, %v754
    %v1299 = vpack.c.b16 %v759, %v755
    %v1300 = vpack.c.b16 %v760, %v756
    %v1301 = vpack.c.b16 %v761, %v757
    %v1302 = vpack.c.b16 %v766, %v762
    %v1303 = vpack.c.b16 %v767, %v763
    %v1304 = vpack.c.b16 %v768, %v764
    %v1305 = vpack.c.b16 %v769, %v765
    %v1306 = vpack.c.b16 %v774, %v770
    %v1307 = vpack.c.b16 %v775, %v771
    %v1308 = vpack.c.b16 %v776, %v772
    %v1309 = vpack.c.b16 %v777, %v773
    %v1310 = vpack.c.b16 %v782, %v778
    %v1311 = vpack.c.b16 %v783, %v779
    %v1312 = vpack.c.b16 %v784, %v780
    %v1313 = vpack.c.b16 %v785, %v781
    %v1314 = vpack.c.b16 %v790, %v786
    %v1315 = vpack.c.b16 %v791, %v787
    %v1316 = vpack.c.b16 %v792, %v788
    %v1317 = vpack.c.b16 %v793, %v789
    %v1318 = vpack.c.b16 %v798, %v794
    %v1319 = vpack.c.b16 %v799, %v795
    %v1320 = vpack.c.b16 %v800, %v796
    %v1321 = vpack.c.b16 %v801, %v797
    %v1322 = vpack.c.b16 %v806, %v802
    %v1323 = vpack.c.b16 %v807, %v803
    %v1324 = vpack.c.b16 %v808, %v804
    %v1325 = vpack.c.b16 %v809, %v805
    %v1326 = vpack.c.b16 %v814, %v810
    %v1327 = vpack.c.b16 %v815, %v811
    %v1328 = vpack.c.b16 %v816, %v812
    %v1329 = vpack.c.b16 %v817, %v813
    %v1330 = vpack.c.b16 %v822, %v818
    %v1331 = vpack.c.b16 %v823, %v819
    %v1332 = vpack.c.b16 %v824, %v820
    %v1333 = vpack.c.b16 %v825, %v821
    %v1334 = vpack.c.b16 %v830, %v826
    %v1335 = vpack.c.b16 %v831, %v827
    %v1336 = vpack.c.b16 %v832, %v828
    %v1337 = vpack.c.b16 %v833, %v829
    %v1338 = vpack.c.b16 %v838, %v834
    %v1339 = vpack.c.b16 %v839, %v835
    %v1340 = vpack.c.b16 %v840, %v836
    %v1341 = vpack.c.b16 %v841, %v837
    %v1342 = vpack.c.b16 %v846, %v842
    %v1343 = vpack.c.b16 %v847, %v843
    %v1344 = vpack.c.b16 %v848, %v844
    %v1345 = vpack.c.b16 %v849, %v845
    %v1346 = vpack.c.b16 %v854, %v850
    %v1347 = vpack.c.b16 %v855, %v851
    %v1348 = vpack.c.b16 %v856, %v852
    %v1349 = vpack.c.b16 %v857, %v853
    %v1350 = vpack.c.b16 %v862, %v858
    %v1351 = vpack.c.b16 %v863, %v859
    %v1352 = vpack.c.b16 %v864, %v860
    %v1353 = vpack.c.b16 %v865, %v861
    %v1354 = vpack.c.b16 %v870, %v866
    %v1355 = vpack.c.b16 %v871, %v867
    %v1356 = vpack.c.b16 %v872, %v868
    %v1357 = vpack.c.b16 %v873, %v869
    %v1358 = vpack.c.b16 %v878, %v874
    %v1359 = vpack.c.b16 %v879, %v875
    %v1360 = vpack.c.b16 %v880, %v876
    %v1361 = vpack.c.b16 %v881, %v877
    %v1362 = vpack.c.b16 %v886, %v882
    %v1363 = vpack.c.b16 %v887, %v883
    %v1364 = vpack.c.b16 %v888, %v884
    %v1365 = vpack.c.b16 %v889, %v885
    %v1366 = vpack.c.b16 %v894, %v890
    %v1367 = vpack.c.b16 %v895, %v891
    %v1368 = vpack.c.b16 %v896, %v892
    %v1369 = vpack.c.b16 %v897, %v893
    %v1370 = vpack.c.b16 %v902, %v898
    %v1371 = vpack.c.b16 %v903, %v899
    %v1372 = vpack.c.b16 %v904, %v900
    %v1373 = vpack.c.b16 %v905, %v901
    %v1374 = vpack.c.b16 %v910, %v906
    %v1375 = vpack.c.b16 %v911, %v907
    %v1376 = vpack.c.b16 %v912, %v908
    %v1377 = vpack.c.b16 %v913, %v909
    %v1378 = vpack.c.b16 %v918, %v914
    %v1379 = vpack.c.b16 %v919, %v915
    %v1380 = vpack.c.b16 %v920, %v916
    %v1381 = vpack.c.b16 %v921, %v917
    %v1382 = vpack.c.b16 %v926, %v922
    %v1383 = vpack.c.b16 %v927, %v923
    %v1384 = vpack.c.b16 %v928, %v924
    %v1385 = vpack.c.b16 %v929, %v925
    %v1386 = vpack.c.b16 %v934, %v930
    %v1387 = vpack.c.b16 %v935, %v931
    %v1388 = vpack.c.b16 %v936, %v932
    %v1389 = vpack.c.b16 %v937, %v933
    %v1390 = vpack.c.b16 %v942, %v938
    %v1391 = vpack.c.b16 %v943, %v939
    %v1392 = vpack.c.b16 %v944, %v940
    %v1393 = vpack.c.b16 %v945, %v941
    %v1394 = vpack.c.b16 %v950, %v946
    %v1395 = vpack.c.b16 %v951, %v947
    %v1396 = vpack.c.b16 %v952, %v948
    %v1397 = vpack.c.b16 %v953, %v949
    %v1398 = vpack.c.b16 %v958, %v954
    %v1399 = vpack.c.b16 %v959, %v955
    %v1400 = vpack.c.b16 %v960, %v956
    %v1401 = vpack.c.b16 %v961, %v957
    %v1402 = vpack.c.b16 %v966, %v962
    %v1403 = vpack.c.b16 %v967, %v963
    %v1404 = vpack.c.b16 %v968, %v964
    %v1405 = vpack.c.b16 %v969, %v965
    %v1406 = vpack.c.b16 %v974, %v970
    %v1407 = vpack.c.b16 %v975, %v971
    %v1408 = vpack.c.b16 %v976, %v972
    %v1409 = vpack.c.b16 %v977, %v973
    %v1410 = vpack.c.b16 %v982, %v978
    %v1411 = vpack.c.b16 %v983, %v979
    %v1412 = vpack.c.b16 %v984, %v980
    %v1413 = vpack.c.b16 %v985, %v981
    %v1414 = vpack.c.b16 %v990, %v986
    %v1415 = vpack.c.b16 %v991, %v987
    %v1416 = vpack.c.b16 %v992, %v988
    %v1417 = vpack.c.b16 %v993, %v989
    %v1418 = vpack.c.b16 %v998, %v994
    %v1419 = vpack.c.b16 %v999, %v995
    %v1420 = vpack.c.b16 %v1000, %v996
    %v1421 = vpack.c.b16 %v1001, %v997
    %v1422 = vpack.c.b16 %v1006, %v1002
    %v1423 = vpack.c.b16 %v1007, %v1003
    %v1424 = vpack.c.b16 %v1008, %v1004
    %v1425 = vpack.c.b16 %v1009, %v1005
    %v1426 = vpack.c.b16 %v1014, %v1010
    %v1427 = vpack.c.b16 %v1015, %v1011
    %v1428 = vpack.c.b16 %v1016, %v1012
    %v1429 = vpack.c.b16 %v1017, %v1013
    %v1430 = vpack.c.b16 %v1022, %v1018
    %v1431 = vpack.c.b16 %v1023, %v1019
    %v1432 = vpack.c.b16 %v1024, %v1020
    %v1433 = vpack.c.b16 %v1025, %v1021
    %v1434 = vpack.c.b16 %v1030, %v1026
    %v1435 = vpack.c.b16 %v1031, %v1027
    %v1436 = vpack.c.b16 %v1032, %v1028
    %v1437 = vpack.c.b16 %v1033, %v1029
    %v1438 = vpack.c.b16 %v1038, %v1034
    %v1439 = vpack.c.b16 %v1039, %v1035
    %v1440 = vpack.c.b16 %v1040, %v1036
    %v1441 = vpack.c.b16 %v1041, %v1037
    %v1442 = vpack.c.b16 %v1046, %v1042
    %v1443 = vpack.c.b16 %v1047, %v1043
    %v1444 = vpack.c.b16 %v1048, %v1044
    %v1445 = vpack.c.b16 %v1049, %v1045
    %v1446 = vpack.c.b16 %v1054, %v1050
    %v1447 = vpack.c.b16 %v1055, %v1051
    %v1448 = vpack.c.b16 %v1056, %v1052
    %v1449 = vpack.c.b16 %v1057, %v1053
    %v1450 = vpack.c.b16 %v1062, %v1058
    %v1451 = vpack.c.b16 %v1063, %v1059
    %v1452 = vpack.c.b16 %v1064, %v1060
    %v1453 = vpack.c.b16 %v1065, %v1061
    %v1454 = vpack.c.b16 %v1070, %v1066
    %v1455 = vpack.c.b16 %v1071, %v1067
    %v1456 = vpack.c.b16 %v1072, %v1068
    %v1457 = vpack.c.b16 %v1073, %v1069
    %v1458 = vpack.c.b16 %v1078, %v1074
    %v1459 = vpack.c.b16 %v1079, %v1075
    %v1460 = vpack.c.b16 %v1080, %v1076
    %v1461 = vpack.c.b16 %v1081, %v1077
    %v1462 = vpack.c.b16 %v1086, %v1082
    %v1463 = vpack.c.b16 %v1087, %v1083
    %v1464 = vpack.c.b16 %v1088, %v1084
    %v1465 = vpack.c.b16 %v1089, %v1085
    %v1466 = vpack.c.b16 %v1094, %v1090
    %v1467 = vpack.c.b16 %v1095, %v1091
    %v1468 = vpack.c.b16 %v1096, %v1092
    %v1469 = vpack.c.b16 %v1097, %v1093
    %v1470 = vpack.c.b16 %v1102, %v1098
    %v1471 = vpack.c.b16 %v1103, %v1099
    %v1472 = vpack.c.b16 %v1104, %v1100
    %v1473 = vpack.c.b16 %v1105, %v1101
    %v1474 = vpack.c.b16 %v1110, %v1106
    %v1475 = vpack.c.b16 %v1111, %v1107
    %v1476 = vpack.c.b16 %v1112, %v1108
    %v1477 = vpack.c.b16 %v1113, %v1109
    %v1478 = vpack.c.b16 %v1118, %v1114
    %v1479 = vpack.c.b16 %v1119, %v1115
    %v1480 = vpack.c.b16 %v1120, %v1116
    %v1481 = vpack.c.b16 %v1121, %v1117
    %v1482 = vpack.c.b16 %v1126, %v1122
    %v1483 = vpack.c.b16 %v1127, %v1123
    %v1484 = vpack.c.b16 %v1128, %v1124
    %v1485 = vpack.c.b16 %v1129, %v1125
    %v1486 = vpack.c.b16 %v1134, %v1130
    %v1487 = vpack.c.b16 %v1135, %v1131
    %v1488 = vpack.c.b16 %v1136, %v1132
    %v1489 = vpack.c.b16 %v1137, %v1133
    %v1490 = vpack.c.b16 %v1142, %v1138
    %v1491 = vpack.c.b16 %v1143, %v1139
    %v1492 = vpack.c.b16 %v1144, %v1140
    %v1493 = vpack.c.b16 %v1145, %v1141
    %v1494 = vpack.c.b16 %v1150, %v1146
    %v1495 = vpack.c.b16 %v1151, %v1147
    %v1496 = vpack.c.b16 %v1152, %v1148
    %v1497 = vpack.c.b16 %v1153, %v1149
    %v1498 = vpack.c.b16 %v1158, %v1154
    %v1499 = vpack.c.b16 %v1159, %v1155
    %v1500 = vpack.c.b16 %v1160, %v1156
    %v1501 = vpack.c.b16 %v1161, %v1157
    %v1502 = vpack.c.b16 %v1166, %v1162
    %v1503 = vpack.c.b16 %v1167, %v1163
    %v1504 = vpack.c.b16 %v1168, %v1164
    %v1505 = vpack.c.b16 %v1169, %v1165
    %v1506 = vpack.c.b16 %v1174, %v1170
    %v1507 = vpack.c.b16 %v1175, %v1171
    %v1508 = vpack.c.b16 %v1176, %v1172
    %v1509 = vpack.c.b16 %v1177, %v1173
    %v1510 = vpack.c.b16 %v1182, %v1178
    %v1511 = vpack.c.b16 %v1183, %v1179
    %v1512 = vpack.c.b16 %v1184, %v1180
    %v1513 = vpack.c.b16 %v1185, %v1181
    %v1514 = vpack.c.b16 %v1190, %v1186
    %v1515 = vpack.c.b16 %v1191, %v1187
    %v1516 = vpack.c.b16 %v1192, %v1188
    %v1517 = vpack.c.b16 %v1193, %v1189
    %v1518 = vpack.c.b16 %v1198, %v1194
    %v1519 = vpack.c.b16 %v1199, %v1195
    %v1520 = vpack.c.b16 %v1200, %v1196
    %v1521 = vpack.c.b16 %v1201, %v1197
    %v1522 = vpack.c.b16 %v1206, %v1202
    %v1523 = vpack.c.b16 %v1207, %v1203
    %v1524 = vpack.c.b16 %v1208, %v1204
    %v1525 = vpack.c.b16 %v1209, %v1205
    %v1526 = vpack.c.b16 %v1214, %v1210
    %v1527 = vpack.c.b16 %v1215, %v1211
    %v1528 = vpack.c.b16 %v1216, %v1212
    %v1529 = vpack.c.b16 %v1217, %v1213
    %v1530 = vpack.c.b16 %v1222, %v1218
    %v1531 = vpack.c.b16 %v1223, %v1219
    %v1532 = vpack.c.b16 %v1224, %v1220
    %v1533 = vpack.c.b16 %v1225, %v1221
    %v1534 = vpack.c.b16 %v1230, %v1226
    %v1535 = vpack.c.b16 %v1231, %v1227
    %v1536 = vpack.c.b16 %v1232, %v1228
    %v1537 = vpack.c.b16 %v1233, %v1229
    %v1538 = vpack.c.b16 %v1238, %v1234
    %v1539 = vpack.c.b16 %v1239, %v1235
    %v1540 = vpack.c.b16 %v1240, %v1236
    %v1541 = vpack.c.b16 %v1241, %v1237
    %v1542 = vpack.c.b16 %v1246, %v1242
    %v1543 = vpack.c.b16 %v1247, %v1243
    %v1544 = vpack.c.b16 %v1248, %v1244
    %v1545 = vpack.c.b16 %v1249, %v1245
    %v1546 = vpack.c.b16 %v1254, %v1250
    %v1547 = vpack.c.b16 %v1255, %v1251
    %v1548 = vpack.c.b16 %v1256, %v1252
    %v1549 = vpack.c.b16 %v1257, %v1253
    %v1550 = vpack.c.b16 %v1262, %v1258
    %v1551 = vpack.c.b16 %v1263, %v1259
    %v1552 = vpack.c.b16 %v1264, %v1260
    %v1553 = vpack.c.b16 %v1265, %v1261
    %1842 = vmatprep.subr.bf16.mxu0 %v1295
    %1843 = vmatpush1.bf16.msra.mxu0 %v1294
    %1844 = vmatprep.subr.bf16.mxu0 %v1291
    %1845 = vmatpush1.bf16.msra.mxu0 %v1290
    %1846 = vmatprep.subr.bf16.mxu0 %v1287
    %1847 = vmatpush1.bf16.msra.mxu0 %v1286
    %1848 = vmatprep.subr.bf16.mxu0 %v1283
    %1849 = vmatpush1.bf16.msra.mxu0 %v1282
    %1850 = vmatprep.subr.bf16.mxu0 %v1279
    %1851 = vmatpush1.bf16.msra.mxu0 %v1278
    %1852 = vmatprep.subr.bf16.mxu0 %v1275
    %1853 = vmatpush1.bf16.msra.mxu0 %v1274
    %1854 = vmatprep.subr.bf16.mxu0 %v1271
    %1855 = vmatpush1.bf16.msra.mxu0 %v1270
    %1856 = vmatprep.subr.bf16.mxu0 %v1267
    %1857 = vmatpush1.bf16.msra.mxu0 %v1266
    %1858 = vmatprep.subr.bf16.mxu0 %v1327
    %1859 = vmatpush2.bf16.msra.mxu0 %v1326
    %1860 = vmatprep.subr.bf16.mxu0 %v1323
    %1861 = vmatpush2.bf16.msra.mxu0 %v1322
    %1862 = vmatprep.subr.bf16.mxu0 %v1319
    %1863 = vmatpush2.bf16.msra.mxu0 %v1318
    %1864 = vmatprep.subr.bf16.mxu0 %v1315
    %1865 = vmatpush2.bf16.msra.mxu0 %v1314
    %1866 = vmatprep.subr.bf16.mxu0 %v1311
    %1867 = vmatpush2.bf16.msra.mxu0 %v1310
    %1868 = vmatprep.subr.bf16.mxu0 %v1307
    %1869 = vmatpush2.bf16.msra.mxu0 %v1306
    %1870 = vmatprep.subr.bf16.mxu0 %v1303
    %1871 = vmatpush2.bf16.msra.mxu0 %v1302
    %1872 = vmatprep.subr.bf16.mxu0 %v1299
    %1873 = vmatpush2.bf16.msra.mxu0 %v1298
    %1874 = vmatprep.mubr.bf16.mxu0 %v367
    %1875 = vmatmul.mubr.bf16.gmra.mxu0 %v353
    %v1876 = vpop.f32.mrf.mxu0
    %v1877 = vadd.f32 %v311, %v1876
    %v1878 = vpop.f32.mrf.mxu0
    %v1879 = vadd.f32 %v315, %v1878
    %v1880 = vpop.f32.mrf.mxu0
    %v1881 = vpop.f32.mrf.mxu0
    %1882 = vdwg.mxu0
    %1883 = vmatprep.subr.bf16.mxu0 %v1359
    %1884 = vmatpush1.bf16.msra.mxu0 %v1358
    %1885 = vmatprep.subr.bf16.mxu0 %v1355
    %1886 = vmatpush1.bf16.msra.mxu0 %v1354
    %1887 = vmatprep.subr.bf16.mxu0 %v1351
    %1888 = vmatpush1.bf16.msra.mxu0 %v1350
    %1889 = vmatprep.subr.bf16.mxu0 %v1347
    %1890 = vmatpush1.bf16.msra.mxu0 %v1346
    %1891 = vmatprep.subr.bf16.mxu0 %v1343
    %1892 = vmatpush1.bf16.msra.mxu0 %v1342
    %1893 = vmatprep.subr.bf16.mxu0 %v1339
    %1894 = vmatpush1.bf16.msra.mxu0 %v1338
    %1895 = vmatprep.subr.bf16.mxu0 %v1335
    %1896 = vmatpush1.bf16.msra.mxu0 %v1334
    %1897 = vmatprep.subr.bf16.mxu0 %v1331
    %1898 = vmatpush1.bf16.msra.mxu0 %v1330
    %1899 = vmatprep.subr.bf16.mxu0 %v1391
    %1900 = vmatpush2.bf16.msra.mxu0 %v1390
    %1901 = vmatprep.subr.bf16.mxu0 %v1387
    %1902 = vmatpush2.bf16.msra.mxu0 %v1386
    %1903 = vmatprep.subr.bf16.mxu0 %v1383
    %1904 = vmatpush2.bf16.msra.mxu0 %v1382
    %1905 = vmatprep.subr.bf16.mxu0 %v1379
    %1906 = vmatpush2.bf16.msra.mxu0 %v1378
    %1907 = vmatprep.subr.bf16.mxu0 %v1375
    %1908 = vmatpush2.bf16.msra.mxu0 %v1374
    %1909 = vmatprep.subr.bf16.mxu0 %v1371
    %1910 = vmatpush2.bf16.msra.mxu0 %v1370
    %1911 = vmatprep.subr.bf16.mxu0 %v1367
    %1912 = vmatpush2.bf16.msra.mxu0 %v1366
    %1913 = vmatprep.subr.bf16.mxu0 %v1363
    %1914 = vmatpush2.bf16.msra.mxu0 %v1362
    %1915 = vmatprep.mubr.bf16.mxu0 %v377
    %1916 = vmatmul.mubr.bf16.gmra.mxu0 %v375
    %v1917 = vpop.f32.mrf.mxu0
    %v1918 = vadd.f32 %v1877, %v1917
    %v1919 = vpop.f32.mrf.mxu0
    %v1920 = vadd.f32 %v1879, %v1919
    %v1921 = vpop.f32.mrf.mxu0
    %v1922 = vpop.f32.mrf.mxu0
    %1923 = vdwg.mxu0
    %1924 = vmatprep.subr.bf16.mxu0 %v1423
    %1925 = vmatpush1.bf16.msra.mxu0 %v1422
    %1926 = vmatprep.subr.bf16.mxu0 %v1419
    %1927 = vmatpush1.bf16.msra.mxu0 %v1418
    %1928 = vmatprep.subr.bf16.mxu0 %v1415
    %1929 = vmatpush1.bf16.msra.mxu0 %v1414
    %1930 = vmatprep.subr.bf16.mxu0 %v1411
    %1931 = vmatpush1.bf16.msra.mxu0 %v1410
    %1932 = vmatprep.subr.bf16.mxu0 %v1407
    %1933 = vmatpush1.bf16.msra.mxu0 %v1406
    %1934 = vmatprep.subr.bf16.mxu0 %v1403
    %1935 = vmatpush1.bf16.msra.mxu0 %v1402
    %1936 = vmatprep.subr.bf16.mxu0 %v1399
    %1937 = vmatpush1.bf16.msra.mxu0 %v1398
    %1938 = vmatprep.subr.bf16.mxu0 %v1395
    %1939 = vmatpush1.bf16.msra.mxu0 %v1394
    %1940 = vmatprep.subr.bf16.mxu0 %v1455
    %1941 = vmatpush2.bf16.msra.mxu0 %v1454
    %1942 = vmatprep.subr.bf16.mxu0 %v1451
    %1943 = vmatpush2.bf16.msra.mxu0 %v1450
    %1944 = vmatprep.subr.bf16.mxu0 %v1447
    %1945 = vmatpush2.bf16.msra.mxu0 %v1446
    %1946 = vmatprep.subr.bf16.mxu0 %v1443
    %1947 = vmatpush2.bf16.msra.mxu0 %v1442
    %1948 = vmatprep.subr.bf16.mxu0 %v1439
    %1949 = vmatpush2.bf16.msra.mxu0 %v1438
    %1950 = vmatprep.subr.bf16.mxu0 %v1435
    %1951 = vmatpush2.bf16.msra.mxu0 %v1434
    %1952 = vmatprep.subr.bf16.mxu0 %v1431
    %1953 = vmatpush2.bf16.msra.mxu0 %v1430
    %1954 = vmatprep.subr.bf16.mxu0 %v1427
    %1955 = vmatpush2.bf16.msra.mxu0 %v1426
    %1956 = vmatprep.mubr.bf16.mxu0 %v374
    %1957 = vmatmul.mubr.bf16.gmra.mxu0 %v360
    %v1958 = vpop.f32.mrf.mxu0
    %v1959 = vadd.f32 %v1918, %v1958
    %v1960 = vpop.f32.mrf.mxu0
    %v1961 = vadd.f32 %v1920, %v1960
    %v1962 = vpop.f32.mrf.mxu0
    %v1963 = vpop.f32.mrf.mxu0
    %1964 = vdwg.mxu0
    %1965 = vmatprep.subr.bf16.mxu0 %v1487
    %1966 = vmatpush1.bf16.msra.mxu0 %v1486
    %1967 = vmatprep.subr.bf16.mxu0 %v1483
    %1968 = vmatpush1.bf16.msra.mxu0 %v1482
    %1969 = vmatprep.subr.bf16.mxu0 %v1479
    %1970 = vmatpush1.bf16.msra.mxu0 %v1478
    %1971 = vmatprep.subr.bf16.mxu0 %v1475
    %1972 = vmatpush1.bf16.msra.mxu0 %v1474
    %1973 = vmatprep.subr.bf16.mxu0 %v1471
    %1974 = vmatpush1.bf16.msra.mxu0 %v1470
    %1975 = vmatprep.subr.bf16.mxu0 %v1467
    %1976 = vmatpush1.bf16.msra.mxu0 %v1466
    %1977 = vmatprep.subr.bf16.mxu0 %v1463
    %1978 = vmatpush1.bf16.msra.mxu0 %v1462
    %1979 = vmatprep.subr.bf16.mxu0 %v1459
    %1980 = vmatpush1.bf16.msra.mxu0 %v1458
    %1981 = vmatprep.subr.bf16.mxu0 %v1519
    %1982 = vmatpush2.bf16.msra.mxu0 %v1518
    %1983 = vmatprep.subr.bf16.mxu0 %v1515
    %1984 = vmatpush2.bf16.msra.mxu0 %v1514
    %1985 = vmatprep.subr.bf16.mxu0 %v1511
    %1986 = vmatpush2.bf16.msra.mxu0 %v1510
    %1987 = vmatprep.subr.bf16.mxu0 %v1507
    %1988 = vmatpush2.bf16.msra.mxu0 %v1506
    %1989 = vmatprep.subr.bf16.mxu0 %v1503
    %1990 = vmatpush2.bf16.msra.mxu0 %v1502
    %1991 = vmatprep.subr.bf16.mxu0 %v1499
    %1992 = vmatpush2.bf16.msra.mxu0 %v1498
    %1993 = vmatprep.subr.bf16.mxu0 %v1495
    %1994 = vmatpush2.bf16.msra.mxu0 %v1494
    %1995 = vmatprep.subr.bf16.mxu0 %v1491
    %1996 = vmatpush2.bf16.msra.mxu0 %v1490
    %1997 = vmatprep.mubr.bf16.mxu0 %v378
    %1998 = vmatmul.mubr.bf16.gmra.mxu0 %v376
    %v1999 = vpop.f32.mrf.mxu0
    %v2000 = vadd.f32 %v1959, %v1999
    %v2001 = vpop.f32.mrf.mxu0
    %v2002 = vadd.f32 %v1961, %v2001
    %v2003 = vpop.f32.mrf.mxu0
    %v2004 = vpop.f32.mrf.mxu0
    %2005 = vdwg.mxu0
    %2006 = vmatprep.subr.bf16.mxu0 %v1551
    %2007 = vmatpush1.bf16.msra.mxu0 %v1550
    %2008 = vmatprep.subr.bf16.mxu0 %v1547
    %2009 = vmatpush1.bf16.msra.mxu0 %v1546
    %2010 = vmatprep.subr.bf16.mxu0 %v1543
    %2011 = vmatpush1.bf16.msra.mxu0 %v1542
    %2012 = vmatprep.subr.bf16.mxu0 %v1539
    %2013 = vmatpush1.bf16.msra.mxu0 %v1538
    %2014 = vmatprep.subr.bf16.mxu0 %v1535
    %2015 = vmatpush1.bf16.msra.mxu0 %v1534
    %2016 = vmatprep.subr.bf16.mxu0 %v1531
    %2017 = vmatpush1.bf16.msra.mxu0 %v1530
    %2018 = vmatprep.subr.bf16.mxu0 %v1527
    %2019 = vmatpush1.bf16.msra.mxu0 %v1526
    %2020 = vmatprep.subr.bf16.mxu0 %v1523
    %2021 = vmatpush1.bf16.msra.mxu0 %v1522
    %2022 = vmatprep.subr.bf16.mxu0 0
    %2023 = vmatpush2.bf16.msra.mxu0 0
    %2024 = vmatprep.subr.bf16.mxu0 0
    %2025 = vmatpush2.bf16.msra.mxu0 0
    %2026 = vmatprep.subr.bf16.mxu0 0
    %2027 = vmatpush2.bf16.msra.mxu0 0
    %2028 = vmatprep.subr.bf16.mxu0 0
    %2029 = vmatpush2.bf16.msra.mxu0 0
    %2030 = vmatprep.subr.bf16.mxu0 0
    %2031 = vmatpush2.bf16.msra.mxu0 0
    %2032 = vmatprep.subr.bf16.mxu0 0
    %2033 = vmatpush2.bf16.msra.mxu0 0
    %2034 = vmatprep.subr.bf16.mxu0 0
    %2035 = vmatpush2.bf16.msra.mxu0 0
    %2036 = vmatprep.subr.bf16.mxu0 0
    %2037 = vmatpush2.bf16.msra.mxu0 0
    %2038 = vmatprep.mubr.bf16.mxu0 0
    %2039 = vmatmul.mubr.bf16.gmra.mxu0 %v392
    %v2040 = vpop.f32.mrf.mxu0
    %v2041 = vadd.f32 %v2000, %v2040
    %v2042 = vpop.f32.mrf.mxu0
    %v2043 = vadd.f32 %v2002, %v2042
    %v2044 = vpop.f32.mrf.mxu0
    %v2045 = vpop.f32.mrf.mxu0
    %2046 = vdwg.mxu0
    %2047 = vmatprep.subr.bf16.mxu0 %v1297
    %2048 = vmatpush1.bf16.msra.mxu0 %v1296
    %2049 = vmatprep.subr.bf16.mxu0 %v1293
    %2050 = vmatpush1.bf16.msra.mxu0 %v1292
    %2051 = vmatprep.subr.bf16.mxu0 %v1289
    %2052 = vmatpush1.bf16.msra.mxu0 %v1288
    %2053 = vmatprep.subr.bf16.mxu0 %v1285
    %2054 = vmatpush1.bf16.msra.mxu0 %v1284
    %2055 = vmatprep.subr.bf16.mxu0 %v1281
    %2056 = vmatpush1.bf16.msra.mxu0 %v1280
    %2057 = vmatprep.subr.bf16.mxu0 %v1277
    %2058 = vmatpush1.bf16.msra.mxu0 %v1276
    %2059 = vmatprep.subr.bf16.mxu0 %v1273
    %2060 = vmatpush1.bf16.msra.mxu0 %v1272
    %2061 = vmatprep.subr.bf16.mxu0 %v1269
    %2062 = vmatpush1.bf16.msra.mxu0 %v1268
    %2063 = vmatprep.subr.bf16.mxu0 %v1329
    %2064 = vmatpush2.bf16.msra.mxu0 %v1328
    %2065 = vmatprep.subr.bf16.mxu0 %v1325
    %2066 = vmatpush2.bf16.msra.mxu0 %v1324
    %2067 = vmatprep.subr.bf16.mxu0 %v1321
    %2068 = vmatpush2.bf16.msra.mxu0 %v1320
    %2069 = vmatprep.subr.bf16.mxu0 %v1317
    %2070 = vmatpush2.bf16.msra.mxu0 %v1316
    %2071 = vmatprep.subr.bf16.mxu0 %v1313
    %2072 = vmatpush2.bf16.msra.mxu0 %v1312
    %2073 = vmatprep.subr.bf16.mxu0 %v1309
    %2074 = vmatpush2.bf16.msra.mxu0 %v1308
    %2075 = vmatprep.subr.bf16.mxu0 %v1305
    %2076 = vmatpush2.bf16.msra.mxu0 %v1304
    %2077 = vmatprep.subr.bf16.mxu0 %v1301
    %2078 = vmatpush2.bf16.msra.mxu0 %v1300
    %2079 = vmatprep.mubr.bf16.mxu0 %v367
    %2080 = vmatmul.mubr.bf16.gmra.mxu0 %v353
    %v2081 = vpop.f32.mrf.mxu0
    %v2082 = vadd.f32 %v319, %v2081
    %v2083 = vpop.f32.mrf.mxu0
    %v2084 = vadd.f32 %v323, %v2083
    %v2085 = vpop.f32.mrf.mxu0
    %v2086 = vpop.f32.mrf.mxu0
    %2087 = vdwg.mxu0
    %2088 = vmatprep.subr.bf16.mxu0 %v1361
    %2089 = vmatpush1.bf16.msra.mxu0 %v1360
    %2090 = vmatprep.subr.bf16.mxu0 %v1357
    %2091 = vmatpush1.bf16.msra.mxu0 %v1356
    %2092 = vmatprep.subr.bf16.mxu0 %v1353
    %2093 = vmatpush1.bf16.msra.mxu0 %v1352
    %2094 = vmatprep.subr.bf16.mxu0 %v1349
    %2095 = vmatpush1.bf16.msra.mxu0 %v1348
    %2096 = vmatprep.subr.bf16.mxu0 %v1345
    %2097 = vmatpush1.bf16.msra.mxu0 %v1344
    %2098 = vmatprep.subr.bf16.mxu0 %v1341
    %2099 = vmatpush1.bf16.msra.mxu0 %v1340
    %2100 = vmatprep.subr.bf16.mxu0 %v1337
    %2101 = vmatpush1.bf16.msra.mxu0 %v1336
    %2102 = vmatprep.subr.bf16.mxu0 %v1333
    %2103 = vmatpush1.bf16.msra.mxu0 %v1332
    %2104 = vmatprep.subr.bf16.mxu0 %v1393
    %2105 = vmatpush2.bf16.msra.mxu0 %v1392
    %2106 = vmatprep.subr.bf16.mxu0 %v1389
    %2107 = vmatpush2.bf16.msra.mxu0 %v1388
    %2108 = vmatprep.subr.bf16.mxu0 %v1385
    %2109 = vmatpush2.bf16.msra.mxu0 %v1384
    %2110 = vmatprep.subr.bf16.mxu0 %v1381
    %2111 = vmatpush2.bf16.msra.mxu0 %v1380
    %2112 = vmatprep.subr.bf16.mxu0 %v1377
    %2113 = vmatpush2.bf16.msra.mxu0 %v1376
    %2114 = vmatprep.subr.bf16.mxu0 %v1373
    %2115 = vmatpush2.bf16.msra.mxu0 %v1372
    %2116 = vmatprep.subr.bf16.mxu0 %v1369
    %2117 = vmatpush2.bf16.msra.mxu0 %v1368
    %2118 = vmatprep.subr.bf16.mxu0 %v1365
    %2119 = vmatpush2.bf16.msra.mxu0 %v1364
    %2120 = vmatprep.mubr.bf16.mxu0 %v377
    %2121 = vmatmul.mubr.bf16.gmra.mxu0 %v375
    %v2122 = vpop.f32.mrf.mxu0
    %v2123 = vadd.f32 %v2082, %v2122
    %v2124 = vpop.f32.mrf.mxu0
    %v2125 = vadd.f32 %v2084, %v2124
    %v2126 = vpop.f32.mrf.mxu0
    %v2127 = vpop.f32.mrf.mxu0
    %2128 = vdwg.mxu0
    %2129 = vmatprep.subr.bf16.mxu0 %v1425
    %2130 = vmatpush1.bf16.msra.mxu0 %v1424
    %2131 = vmatprep.subr.bf16.mxu0 %v1421
    %2132 = vmatpush1.bf16.msra.mxu0 %v1420
    %2133 = vmatprep.subr.bf16.mxu0 %v1417
    %2134 = vmatpush1.bf16.msra.mxu0 %v1416
    %2135 = vmatprep.subr.bf16.mxu0 %v1413
    %2136 = vmatpush1.bf16.msra.mxu0 %v1412
    %2137 = vmatprep.subr.bf16.mxu0 %v1409
    %2138 = vmatpush1.bf16.msra.mxu0 %v1408
    %2139 = vmatprep.subr.bf16.mxu0 %v1405
    %2140 = vmatpush1.bf16.msra.mxu0 %v1404
    %2141 = vmatprep.subr.bf16.mxu0 %v1401
    %2142 = vmatpush1.bf16.msra.mxu0 %v1400
    %2143 = vmatprep.subr.bf16.mxu0 %v1397
    %2144 = vmatpush1.bf16.msra.mxu0 %v1396
    %2145 = vmatprep.subr.bf16.mxu0 %v1457
    %2146 = vmatpush2.bf16.msra.mxu0 %v1456
    %2147 = vmatprep.subr.bf16.mxu0 %v1453
    %2148 = vmatpush2.bf16.msra.mxu0 %v1452
    %2149 = vmatprep.subr.bf16.mxu0 %v1449
    %2150 = vmatpush2.bf16.msra.mxu0 %v1448
    %2151 = vmatprep.subr.bf16.mxu0 %v1445
    %2152 = vmatpush2.bf16.msra.mxu0 %v1444
    %2153 = vmatprep.subr.bf16.mxu0 %v1441
    %2154 = vmatpush2.bf16.msra.mxu0 %v1440
    %2155 = vmatprep.subr.bf16.mxu0 %v1437
    %2156 = vmatpush2.bf16.msra.mxu0 %v1436
    %2157 = vmatprep.subr.bf16.mxu0 %v1433
    %2158 = vmatpush2.bf16.msra.mxu0 %v1432
    %2159 = vmatprep.subr.bf16.mxu0 %v1429
    %2160 = vmatpush2.bf16.msra.mxu0 %v1428
    %2161 = vmatprep.mubr.bf16.mxu0 %v374
    %2162 = vmatmul.mubr.bf16.gmra.mxu0 %v360
    %v2163 = vpop.f32.mrf.mxu0
    %v2164 = vadd.f32 %v2123, %v2163
    %v2165 = vpop.f32.mrf.mxu0
    %v2166 = vadd.f32 %v2125, %v2165
    %v2167 = vpop.f32.mrf.mxu0
    %v2168 = vpop.f32.mrf.mxu0
    %2169 = vdwg.mxu0
    %2170 = vmatprep.subr.bf16.mxu0 %v1489
    %2171 = vmatpush1.bf16.msra.mxu0 %v1488
    %2172 = vmatprep.subr.bf16.mxu0 %v1485
    %2173 = vmatpush1.bf16.msra.mxu0 %v1484
    %2174 = vmatprep.subr.bf16.mxu0 %v1481
    %2175 = vmatpush1.bf16.msra.mxu0 %v1480
    %2176 = vmatprep.subr.bf16.mxu0 %v1477
    %2177 = vmatpush1.bf16.msra.mxu0 %v1476
    %2178 = vmatprep.subr.bf16.mxu0 %v1473
    %2179 = vmatpush1.bf16.msra.mxu0 %v1472
    %2180 = vmatprep.subr.bf16.mxu0 %v1469
    %2181 = vmatpush1.bf16.msra.mxu0 %v1468
    %2182 = vmatprep.subr.bf16.mxu0 %v1465
    %2183 = vmatpush1.bf16.msra.mxu0 %v1464
    %2184 = vmatprep.subr.bf16.mxu0 %v1461
    %2185 = vmatpush1.bf16.msra.mxu0 %v1460
    %2186 = vmatprep.subr.bf16.mxu0 %v1521
    %2187 = vmatpush2.bf16.msra.mxu0 %v1520
    %2188 = vmatprep.subr.bf16.mxu0 %v1517
    %2189 = vmatpush2.bf16.msra.mxu0 %v1516
    %2190 = vmatprep.subr.bf16.mxu0 %v1513
    %2191 = vmatpush2.bf16.msra.mxu0 %v1512
    %2192 = vmatprep.subr.bf16.mxu0 %v1509
    %2193 = vmatpush2.bf16.msra.mxu0 %v1508
    %2194 = vmatprep.subr.bf16.mxu0 %v1505
    %2195 = vmatpush2.bf16.msra.mxu0 %v1504
    %2196 = vmatprep.subr.bf16.mxu0 %v1501
    %2197 = vmatpush2.bf16.msra.mxu0 %v1500
    %2198 = vmatprep.subr.bf16.mxu0 %v1497
    %2199 = vmatpush2.bf16.msra.mxu0 %v1496
    %2200 = vmatprep.subr.bf16.mxu0 %v1493
    %2201 = vmatpush2.bf16.msra.mxu0 %v1492
    %2202 = vmatprep.mubr.bf16.mxu0 %v378
    %2203 = vmatmul.mubr.bf16.gmra.mxu0 %v376
    %v2204 = vpop.f32.mrf.mxu0
    %v2205 = vadd.f32 %v2164, %v2204
    %v2206 = vpop.f32.mrf.mxu0
    %v2207 = vadd.f32 %v2166, %v2206
    %v2208 = vpop.f32.mrf.mxu0
    %v2209 = vpop.f32.mrf.mxu0
    %2210 = vdwg.mxu0
    %2211 = vmatprep.subr.bf16.mxu0 %v1553
    %2212 = vmatpush1.bf16.msra.mxu0 %v1552
    %2213 = vmatprep.subr.bf16.mxu0 %v1549
    %2214 = vmatpush1.bf16.msra.mxu0 %v1548
    %2215 = vmatprep.subr.bf16.mxu0 %v1545
    %2216 = vmatpush1.bf16.msra.mxu0 %v1544
    %2217 = vmatprep.subr.bf16.mxu0 %v1541
    %2218 = vmatpush1.bf16.msra.mxu0 %v1540
    %2219 = vmatprep.subr.bf16.mxu0 %v1537
    %2220 = vmatpush1.bf16.msra.mxu0 %v1536
    %2221 = vmatprep.subr.bf16.mxu0 %v1533
    %2222 = vmatpush1.bf16.msra.mxu0 %v1532
    %2223 = vmatprep.subr.bf16.mxu0 %v1529
    %2224 = vmatpush1.bf16.msra.mxu0 %v1528
    %2225 = vmatprep.subr.bf16.mxu0 %v1525
    %2226 = vmatpush1.bf16.msra.mxu0 %v1524
    %2227 = vmatprep.subr.bf16.mxu0 0
    %2228 = vmatpush2.bf16.msra.mxu0 0
    %2229 = vmatprep.subr.bf16.mxu0 0
    %2230 = vmatpush2.bf16.msra.mxu0 0
    %2231 = vmatprep.subr.bf16.mxu0 0
    %2232 = vmatpush2.bf16.msra.mxu0 0
    %2233 = vmatprep.subr.bf16.mxu0 0
    %2234 = vmatpush2.bf16.msra.mxu0 0
    %2235 = vmatprep.subr.bf16.mxu0 0
    %2236 = vmatpush2.bf16.msra.mxu0 0
    %2237 = vmatprep.subr.bf16.mxu0 0
    %2238 = vmatpush2.bf16.msra.mxu0 0
    %2239 = vmatprep.subr.bf16.mxu0 0
    %2240 = vmatpush2.bf16.msra.mxu0 0
    %2241 = vmatprep.subr.bf16.mxu0 0
    %2242 = vmatpush2.bf16.msra.mxu0 0
    %2243 = vmatprep.mubr.bf16.mxu0 0
    %2244 = vmatmul.mubr.bf16.gmra.mxu0 %v392
    %v2245 = vpop.f32.mrf.mxu0
    %v2246 = vadd.f32 %v2205, %v2245
    %v2247 = vpop.f32.mrf.mxu0
    %v2248 = vadd.f32 %v2207, %v2247
    %v2249 = vpop.f32.mrf.mxu0
    %v2250 = vpop.f32.mrf.mxu0
    %2251 = vdwg.mxu0
    %v2252 = vmax.f32 %v2041, 0.0
    %v2253 = vmax.f32 %v2043, 0.0
    %v2254 = vmax.f32 %v2246, 0.0
    %v2255 = vmax.f32 %v2248, 0.0
    %v2260 = vcombine.low %v2252, %v2253
    %v2261 = vcombine.low %v2254, %v2255
    %v2263 = vunpack.c.l.s4 1983009808
    %v2264 = vunpack.c.0.s8 %v2263
    %v2265 = vlaneseq
    %v2266 = vshrl.u32 %v2265, 7
    %v2267 = vsub.s32 %v2264, %v2266
    %v2268 = vrot.slane %v2260, %v2267
    %v2270 = vunpack.c.l.s4 1983009808
    %v2271 = vunpack.c.0.s8 %v2270
    %v2272 = vlaneseq
    %v2273 = vshrl.u32 %v2272, 7
    %v2274 = vsub.s32 %v2271, %v2273
    %v2275 = vrot.slane %v2261, %v2274
    %v2276 = vcombine.low %v2268, %v2275
    %2278 = vst [vmem:[#allocation2] sm:$0xff] %v2276
    // Predicated region
    $region14: #{encoder_forward.9} parent=1 // pred_check
      _
    $region15: #{encoder_forward.9} parent=1 // pred_check_branch
      %2280 = sbr.rel (0) target = $region17
    $region16: #{encoder_forward.9} parent=1 // pred_region
      %s2282 = ssub.s32 128, 128
      %2283 = vsyncadd [#allocation3], %s2282
      %s2285 = sshll.u32 [#allocation2], 4
      %s2286 = int_to_ptr.vmem [resolvable:$true] %s2285
      %2288 = dma.vmem_to_hbm [thread:$0]  %s2286, 128, %s3, [#allocation3]
    $region17: #{encoder_forward.9} parent=1 // pred_fallthru
      _
    // Predicated region
    $region18: #{encoder_forward.9} parent=1 // pred_check
      _
    $region19: #{encoder_forward.9} parent=1 // pred_check_branch
      %2290 = sbr.rel (0) target = $region21
    $region20: #{encoder_forward.9} parent=1 // pred_region
      %2291 = dma.done [#allocation3], 128
    $region21: #{encoder_forward.9} parent=1 // pred_fallthru
      _
    %2292 = vsyncpa [#allocation3], 1

</llo_original>
